<compile_context>
chip_gen: v7x
topology: tpu7x:2x2x1
jax: 0.10.0
libtpu: 0.0.40
codegen_flags: <defaults>
</compile_context>

<pallas_src>
import functools

import jax
import jax.numpy as jnp
from jax.experimental import pallas as pl
from jax.experimental.pallas import tpu as pltpu

NEG_INF = -1e30  # stands in for float('-inf') in masked_fill (exp -> 0)


# ----------------------------------------------------------------------------
# Fused Pallas kernel: one grid step == one graph (batch element)
# ----------------------------------------------------------------------------
def _fused_forward_kernel(x_ref, pe_ref, mrow_ref, vcol_ref, dscale_ref,
                          emb_ref, wqv_ref, wo_ref, w1_ref, b1_ref, w2_ref,
                          vec_ref, wc1_ref, bc1_ref, wc2_ref, bc2_ref,
                          o_ref, oh_ref, *, num_heads, head_dim, num_layers):
    N = x_ref.shape[1]
    D = num_heads * head_dim
    bf16 = jnp.bfloat16

    x_in = x_ref[0]                       # (N, F)  f32
    pe = pe_ref[0]                        # (N, N)  f32
    pad_key = mrow_ref[0] > 0.5           # (1, N)  True = padded key column
    valid = vcol_ref[0]                   # (N, 1)  1.0 = valid node
    dscale = dscale_ref[0]                # (N, 1)  scaled pe diagonal

    # Embedding (no bias) -- bf16 MXU operands, f32 accumulation
    out = jnp.dot(x_in.astype(bf16), emb_ref[...],
                  preferred_element_type=jnp.float32)                      # (N, D)

    # TODO(synk): for large L / d_model, restructure to grid=(B, L) with a
    # persistent (N, D) activation scratch so only ~2 layers of weights are
    # VMEM-resident at once; L is small here so a static unroll is fine.
    for l in range(num_layers):
        # ----- DiffMultiheadAttention (k = q; scaling folded into Wq) -----
        # merged q/v projection: one lane-dense (N, D) @ (D, 2D) matmul
        qv = jnp.dot(out.astype(bf16), wqv_ref[l],
                     preferred_element_type=jnp.float32)                   # (N, 2D)

        for h in range(num_heads):
            lo = h * head_dim
            q_h = qv[:, lo:lo + head_dim].astype(bf16)                     # (N, hd)
            v_h = qv[:, D + lo:D + lo + head_dim].astype(bf16)             # (N, hd)
            # scores = q_h @ q_h^T   (Wq already carries hd**-0.25 twice)
            s = jax.lax.dot_general(q_h, q_h, (((1,), (1,)), ((), ())),
                                    preferred_element_type=jnp.float32)    # (N, N)
            s = jnp.where(pad_key, NEG_INF, s)
            m = jnp.max(s, axis=-1, keepdims=True)
            p = jnp.exp(s - m) * pe                                        # unnormalized
            denom = jnp.maximum(jnp.sum(p, axis=-1, keepdims=True), 1e-6)
            oh = jnp.dot(p.astype(bf16), v_h,
                         preferred_element_type=jnp.float32)               # (N, hd)
            # deferred softmax normalization (EUP reciprocal, off the VALU slot)
            oh_ref[:, lo:lo + head_dim] = oh * pl.reciprocal(denom, approx=True)

        # single out-projection with full K=D contraction (== concat @ Wo)
        attn = jnp.dot(oh_ref[...].astype(bf16), wo_ref[l],
                       preferred_element_type=jnp.float32)                 # (N, D)

        # residual branch scaled by pe diagonal (degree=None path)
        src = out + dscale * attn

        vec = vec_ref[l]                  # (5, D): [b2, g1, be1, g2, be2]
        b2, g1, be1, g2, be2 = (vec[0:1], vec[1:2], vec[2:3], vec[3:4], vec[4:5])

        # LayerNorm 1 (eps=1e-5, biased variance) -- f32
        mu = jnp.mean(src, axis=-1, keepdims=True)
        var = jnp.mean((src - mu) ** 2, axis=-1, keepdims=True)
        src = (src - mu) * jax.lax.rsqrt(var + 1e-5) * g1 + be1

        # Feed-forward (ReLU), bf16 MXU operands
        h1 = jnp.maximum(
            jnp.dot(src.astype(bf16), w1_ref[l],
                    preferred_element_type=jnp.float32) + b1_ref[l], 0.0)
        ff = jnp.dot(h1.astype(bf16), w2_ref[l],
                     preferred_element_type=jnp.float32) + b2
        src = src + ff

        # LayerNorm 2
        mu = jnp.mean(src, axis=-1, keepdims=True)
        var = jnp.mean((src - mu) ** 2, axis=-1, keepdims=True)
        out = (src - mu) * jax.lax.rsqrt(var + 1e-5) * g2 + be2

    # ----- masked mean pooling + classifier MLP -----
    pooled = jnp.sum(out * valid, axis=0, keepdims=True)                   # (1, D)
    cnt = jnp.sum(valid, axis=0, keepdims=True)                            # (1, 1)
    pooled = pooled / cnt
    hcls = jnp.maximum(
        jnp.dot(pooled.astype(bf16), wc1_ref[...],
                preferred_element_type=jnp.float32) + bc1_ref[...], 0.0)
    o_ref[0] = (jnp.dot(hcls.astype(bf16), wc2_ref[...],
                        preferred_element_type=jnp.float32) + bc2_ref[...])


# ----------------------------------------------------------------------------
# Wrapper: weight stacking / bf16 casting / scaling folding done ONCE outside
# ----------------------------------------------------------------------------
@functools.partial(jax.jit, static_argnums=(4,))
def diff_graph_transformer_forward(x, masks, pe, params, num_heads):
    """x: (B,N,in_size), masks: (B,N) bool (True = pad), pe: (B,N,N)."""
    B, N, F = x.shape
    D = params['emb_w_t'].shape[1]
    hd = D // num_heads
    L = len(params['layers'])
    DFF = params['layers'][0]['w1_t'].shape[1]
    C = params['wc2_t'].shape[1]
    bf16 = jnp.bfloat16

    maskf = masks.astype(jnp.float32)
    mask_row = maskf[:, None, :]                               # (B, 1, N)
    valid_col = (1.0 - maskf)[:, :, None]                      # (B, N, 1)
    diag = jnp.diagonal(pe, axis1=1, axis2=2)                  # (B, N)
    # NOTE: matches the PyTorch module -- 1 / max over the WHOLE batch diagonal
    # (the torch layer caches pe.diagonal().max().item() on first forward).
    # Assumes every graph has >= 1 unmasked node (true for this module's usage).
    dscale = ((1.0 / jnp.max(diag)) * diag)[..., None]         # (B, N, 1)

    layers = params['layers']
    qscale = float(hd) ** (-0.25)          # k == q -> score picks up hd**-0.5
    wqv = jnp.stack([jnp.concatenate([lp['wq_t'] * qscale, lp['wv_t']], axis=1)
                     for lp in layers]).astype(bf16)                       # (L, D, 2D)
    wo = jnp.stack([lp['wo_t'] for lp in layers]).astype(bf16)             # (L, D, D)
    w1 = jnp.stack([lp['w1_t'] for lp in layers]).astype(bf16)             # (L, D, DFF)
    b1 = jnp.stack([lp['b1'] for lp in layers])                            # (L, 1, DFF)
    w2 = jnp.stack([lp['w2_t'] for lp in layers]).astype(bf16)             # (L, DFF, D)
    vecs = jnp.stack([jnp.concatenate([lp['b2'], lp['g1'], lp['be1'],
                                       lp['g2'], lp['be2']], axis=0)
                      for lp in layers])                                   # (L, 5, D)
    emb_w = params['emb_w_t'].astype(bf16)
    wc1 = params['wc1_t'].astype(bf16)
    wc2 = params['wc2_t'].astype(bf16)
    bc1 = params['bc1']
    bc2 = params['bc2']

    # Explicit scoped-VMEM budget: weights (double-buffered by the pipeline) +
    # per-graph blocks + attention/FFN temporaries, capped for v7x (64 MiB).
    const_args = (emb_w, wqv, wo, w1, b1, w2, vecs, wc1, bc1, wc2, bc2)
    const_bytes = sum(a.size * a.dtype.itemsize for a in const_args)
    per_graph_bytes = (N * F + N * N + 3 * N) * 4
    slab_bytes = 4 * N * N * 4 + (2 * D + DFF + 4 * D) * N * 4
    est = 2 * (const_bytes + per_graph_bytes) + slab_bytes
    vmem_limit = int(min(max(4 * est, 32 << 20), 48 << 20))

    kern = functools.partial(_fused_forward_kernel, num_heads=num_heads,
                             head_dim=hd, num_layers=L)

    in_specs = [
        pl.BlockSpec((1, N, F), lambda b: (b, 0, 0)),            # x
        pl.BlockSpec((1, N, N), lambda b: (b, 0, 0)),            # pe
        pl.BlockSpec((1, 1, N), lambda b: (b, 0, 0)),            # key-padding mask (row)
        pl.BlockSpec((1, N, 1), lambda b: (b, 0, 0)),            # valid mask (col)
        pl.BlockSpec((1, N, 1), lambda b: (b, 0, 0)),            # scaled pe diagonal
        pl.BlockSpec((F, D), lambda b: (0, 0)),                  # embedding weight
        pl.BlockSpec((L, D, 2 * D), lambda b: (0, 0, 0)),        # [Wq*s | Wv] stacked
        pl.BlockSpec((L, D, D), lambda b: (0, 0, 0)),            # Wo (un-split)
        pl.BlockSpec((L, D, DFF), lambda b: (0, 0, 0)),          # ffn w1
        pl.BlockSpec((L, 1, DFF), lambda b: (0, 0, 0)),          # ffn b1
        pl.BlockSpec((L, DFF, D), lambda b: (0, 0, 0)),          # ffn w2
        pl.BlockSpec((L, 5, D), lambda b: (0, 0, 0)),            # [b2,g1,be1,g2,be2]
        pl.BlockSpec((D, D), lambda b: (0, 0)),                  # classifier w1
        pl.BlockSpec((1, D), lambda b: (0, 0)),                  # classifier b1
        pl.BlockSpec((D, C), lambda b: (0, 0)),                  # classifier w2
        pl.BlockSpec((1, C), lambda b: (0, 0)),                  # classifier b2
    ]

    out = pl.pallas_call(
        kern,
        out_shape=jax.ShapeDtypeStruct((B, 1, C), jnp.float32),
        grid=(B,),
        in_specs=in_specs,
        out_specs=pl.BlockSpec((1, 1, C), lambda b: (b, 0, 0)),
        scratch_shapes=[pltpu.VMEM((N, D), jnp.float32)],        # per-head output slab
        compiler_params=pltpu.CompilerParams(
            dimension_semantics=("parallel",),                   # 2 TCs on v7x
            vmem_limit_bytes=vmem_limit),
    )(x, pe, mask_row, valid_col, dscale,
      emb_w, wqv, wo, w1, b1, w2, vecs, wc1, bc1, wc2, bc2)
    return out.reshape(B, C)


# ----------------------------------------------------------------------------
# Pure-JAX f32 reference (mirrors the PyTorch forward, eval mode)
# ----------------------------------------------------------------------------
def reference_forward(x, masks, pe, params, num_heads):
    B, N, _ = x.shape
    D = params['emb_w_t'].shape[1]
    hd = D // num_heads
    scaling = float(hd) ** (-0.5)
    maskf = masks.astype(jnp.float32)
    out = x @ params['emb_w_t']
    diag = jnp.diagonal(pe, axis1=1, axis2=2)
    dscale = (1.0 / jnp.max(diag)) * diag
    for lp in params['layers']:
        q = out @ lp['wq_t']
        v = out @ lp['wv_t']
        k = q
        qs = q * scaling

        def split(t):
            return t.reshape(B, N, num_heads, hd).transpose(0, 2, 1, 3)

        qh, kh, vh = split(qs), split(k), split(v)
        s = jnp.einsum('bhnd,bhmd->bhnm', qh, kh)
        s = jnp.where(maskf[:, None, None, :] > 0.5, NEG_INF, s)
        m = jnp.max(s, axis=-1, keepdims=True)
        p = jnp.exp(s - m) * pe[:, None, :, :]
        p = p / jnp.maximum(jnp.sum(p, axis=-1, keepdims=True), 1e-6)
        o = jnp.einsum('bhnm,bhmd->bhnd', p, vh)
        o = o.transpose(0, 2, 1, 3).reshape(B, N, D)
        attn = o @ lp['wo_t']
        src = out + dscale[:, :, None] * attn
        mu = src.mean(-1, keepdims=True)
        var = ((src - mu) ** 2).mean(-1, keepdims=True)
        src = (src - mu) * jax.lax.rsqrt(var + 1e-5) * lp['g1'] + lp['be1']
        h1 = jnp.maximum(src @ lp['w1_t'] + lp['b1'], 0.0)
        src = src + (h1 @ lp['w2_t'] + lp['b2'])
        mu = src.mean(-1, keepdims=True)
        var = ((src - mu) ** 2).mean(-1, keepdims=True)
        out = (src - mu) * jax.lax.rsqrt(var + 1e-5) * lp['g2'] + lp['be2']
    valid = 1.0 - maskf[:, :, None]
    pooled = (out * valid).sum(1) / valid.sum(1)
    h = jnp.maximum(pooled @ params['wc1_t'] + params['bc1'], 0.0)
    return h @ params['wc2_t'] + params['bc2']


# ----------------------------------------------------------------------------
# Deterministic parameter init (weights stored pre-transposed for x @ W^T)
# ----------------------------------------------------------------------------
def init_params(key, in_size, d_model, nb_class, dim_feedforward, nb_layers):
    keys = jax.random.split(key, 3 + nb_layers)

    def nrm(k, shape, scale=0.1):
        return (scale * jax.random.normal(k, shape)).astype(jnp.float32)

    params = {
        'emb_w_t': nrm(keys[0], (in_size, d_model)),            # embedding (no bias)
        'wc1_t': nrm(keys[1], (d_model, d_model)),
        'bc1': jnp.zeros((1, d_model), jnp.float32),
        'wc2_t': nrm(keys[2], (d_model, nb_class)),
        'bc2': jnp.zeros((1, nb_class), jnp.float32),
        'layers': [],
    }
    for i in range(nb_layers):
        lk = jax.random.split(keys[3 + i], 6)
        params['layers'].append({
            'wq_t': nrm(lk[0], (d_model, d_model)),              # in_proj rows [:D]
            'wv_t': nrm(lk[1], (d_model, d_model)),              # in_proj rows [2D:]
            'wo_t': nrm(lk[2], (d_model, d_model)),              # out_proj (bias=False)
            'w1_t': nrm(lk[3], (d_model, dim_feedforward)),
            'b1': nrm(lk[4], (1, dim_feedforward), 0.01),
            'w2_t': nrm(lk[5], (dim_feedforward, d_model)),
            'b2': jnp.zeros((1, d_model), jnp.float32),
            'g1': jnp.ones((1, d_model), jnp.float32),
            'be1': jnp.zeros((1, d_model), jnp.float32),
            'g2': jnp.ones((1, d_model), jnp.float32),
            'be2': jnp.zeros((1, d_model), jnp.float32),
        })
    return params


if __name__ == "__main__":
    # small shapes consistent with the module
    B, N, in_size = 2, 8, 16
    d_model, nb_heads, dim_feedforward = 32, 4, 64
    nb_layers, nb_class = 2, 5

    key = jax.random.PRNGKey(0)
    kx, kpe, kp = jax.random.split(key, 3)
    x = jax.random.normal(kx, (B, N, in_size), jnp.float32)
    a = jax.random.normal(kpe, (B, N, N), jnp.float32)
    pe = jnp.exp(-0.5 * jnp.abs(a + jnp.swapaxes(a, 1, 2)))      # positive symmetric kernel
    masks = jnp.zeros((B, N), dtype=bool).at[1, N - 2:].set(True)  # pad last 2 nodes of graph 1

    params = init_params(kp, in_size, d_model, nb_class, dim_feedforward, nb_layers)

    out = diff_graph_transformer_forward(x, masks, pe, params, nb_heads)
    out = jax.block_until_ready(out)
    assert out.shape == (B, nb_class)

    ref = reference_forward(x, masks, pe, params, nb_heads)
    # bf16 MXU operands + approx reciprocal in the kernel vs. an f32 reference:
    # compare with a normalized max-error bound.
    err = float(jnp.max(jnp.abs(out - ref)) / (jnp.max(jnp.abs(ref)) + 1e-6))
    assert err < 6e-2, f"mismatch: normalized max error {err:.4f}"

    # TODO(synk): dropout layers are eval-mode no-ops; the attention-weight
    # output (need_weights=True) is not returned since the module discards it.
    print("KERNEL_OK")
</pallas_src>

<mosaic_0001>
module attributes {stable_mosaic.version = 11 : i64} {
  func.func @_fused_forward_kernel(%arg0: i32, %arg1: memref<1x8x16xf32, #tpu.memory_space<vmem>>, %arg2: memref<1x8x8xf32, #tpu.memory_space<vmem>>, %arg3: memref<1x1x8xf32, #tpu.memory_space<vmem>>, %arg4: memref<1x8x1xf32, #tpu.memory_space<vmem>>, %arg5: memref<1x8x1xf32, #tpu.memory_space<vmem>>, %arg6: memref<16x32xbf16, #tpu.memory_space<vmem>>, %arg7: memref<2x32x64xbf16, #tpu.memory_space<vmem>>, %arg8: memref<2x32x32xbf16, #tpu.memory_space<vmem>>, %arg9: memref<2x32x64xbf16, #tpu.memory_space<vmem>>, %arg10: memref<2x1x64xf32, #tpu.memory_space<vmem>>, %arg11: memref<2x64x32xbf16, #tpu.memory_space<vmem>>, %arg12: memref<2x5x32xf32, #tpu.memory_space<vmem>>, %arg13: memref<32x32xbf16, #tpu.memory_space<vmem>>, %arg14: memref<1x32xf32, #tpu.memory_space<vmem>>, %arg15: memref<32x5xbf16, #tpu.memory_space<vmem>>, %arg16: memref<1x5xf32, #tpu.memory_space<vmem>>, %arg17: memref<1x1x5xf32, #tpu.memory_space<vmem>>, %arg18: memref<8x32xf32, #tpu.memory_space<vmem>>) attributes {dimension_semantics = [#tpu.dimension_semantics<parallel>], iteration_bounds = array<i64: 2>, scalar_prefetch = 0 : i64, scratch_operands = 1 : i64, tpu.core_type = #tpu.core_type<tc>, window_params = [{transform_indices = @transform_0, window_bounds = array<i64: 1, 8, 16>}, {transform_indices = @transform_1, window_bounds = array<i64: 1, 8, 8>}, {transform_indices = @transform_2, window_bounds = array<i64: 1, 1, 8>}, {transform_indices = @transform_3, window_bounds = array<i64: 1, 8, 1>}, {transform_indices = @transform_4, window_bounds = array<i64: 1, 8, 1>}, {pipeline_mode = #tpu.pipeline_mode<synchronous>, transform_indices = @transform_5, window_bounds = array<i64: 16, 32>}, {pipeline_mode = #tpu.pipeline_mode<synchronous>, transform_indices = @transform_6, window_bounds = array<i64: 2, 32, 64>}, {pipeline_mode = #tpu.pipeline_mode<synchronous>, transform_indices = @transform_7, window_bounds = array<i64: 2, 32, 32>}, {pipeline_mode = #tpu.pipeline_mode<synchronous>, transform_indices = @transform_8, window_bounds = array<i64: 2, 32, 64>}, {pipeline_mode = #tpu.pipeline_mode<synchronous>, transform_indices = @transform_9, window_bounds = array<i64: 2, 1, 64>}, {pipeline_mode = #tpu.pipeline_mode<synchronous>, transform_indices = @transform_10, window_bounds = array<i64: 2, 64, 32>}, {pipeline_mode = #tpu.pipeline_mode<synchronous>, transform_indices = @transform_11, window_bounds = array<i64: 2, 5, 32>}, {pipeline_mode = #tpu.pipeline_mode<synchronous>, transform_indices = @transform_12, window_bounds = array<i64: 32, 32>}, {pipeline_mode = #tpu.pipeline_mode<synchronous>, transform_indices = @transform_13, window_bounds = array<i64: 1, 32>}, {pipeline_mode = #tpu.pipeline_mode<synchronous>, transform_indices = @transform_14, window_bounds = array<i64: 32, 5>}, {pipeline_mode = #tpu.pipeline_mode<synchronous>, transform_indices = @transform_15, window_bounds = array<i64: 1, 5>}, {transform_indices = @transform_16, window_bounds = array<i64: 1, 1, 5>}]} {
    %c0 = arith.constant 0 : index
    %c0_0 = arith.constant 0 : index
    %c0_1 = arith.constant 0 : index
    %0 = vector.load %arg1[%c0, %c0_0, %c0_1] : memref<1x8x16xf32, #tpu.memory_space<vmem>>, vector<1x8x16xf32>
    %1 = vector.shape_cast %0 : vector<1x8x16xf32> to vector<8x16xf32>
    %c0_2 = arith.constant 0 : index
    %c0_3 = arith.constant 0 : index
    %c0_4 = arith.constant 0 : index
    %2 = vector.load %arg2[%c0_2, %c0_3, %c0_4] : memref<1x8x8xf32, #tpu.memory_space<vmem>>, vector<1x8x8xf32>
    %3 = vector.shape_cast %2 : vector<1x8x8xf32> to vector<8x8xf32>
    %c0_5 = arith.constant 0 : index
    %c0_6 = arith.constant 0 : index
    %c0_7 = arith.constant 0 : index
    %4 = vector.load %arg3[%c0_5, %c0_6, %c0_7] : memref<1x1x8xf32, #tpu.memory_space<vmem>>, vector<1x1x8xf32>
    %5 = vector.shape_cast %4 : vector<1x1x8xf32> to vector<1x8xf32>
    %cst = arith.constant 5.000000e-01 : f32
    %6 = vector.broadcast %cst : f32 to vector<1x8xf32>
    %7 = arith.cmpf ogt, %5, %6 : vector<1x8xf32>
    %c0_8 = arith.constant 0 : index
    %c0_9 = arith.constant 0 : index
    %c0_10 = arith.constant 0 : index
    %8 = vector.load %arg4[%c0_8, %c0_9, %c0_10] : memref<1x8x1xf32, #tpu.memory_space<vmem>>, vector<1x8x1xf32>
    %9 = vector.shape_cast %8 : vector<1x8x1xf32> to vector<8x1xf32>
    %c0_11 = arith.constant 0 : index
    %c0_12 = arith.constant 0 : index
    %c0_13 = arith.constant 0 : index
    %10 = vector.load %arg5[%c0_11, %c0_12, %c0_13] : memref<1x8x1xf32, #tpu.memory_space<vmem>>, vector<1x8x1xf32>
    %11 = vector.shape_cast %10 : vector<1x8x1xf32> to vector<8x1xf32>
    %12 = arith.truncf %1 : vector<8x16xf32> to vector<8x16xbf16>
    %c0_14 = arith.constant 0 : index
    %c0_15 = arith.constant 0 : index
    %13 = vector.load %arg6[%c0_14, %c0_15] : memref<16x32xbf16, #tpu.memory_space<vmem>>, vector<16x32xbf16>
    %cst_16 = arith.constant dense<0.000000e+00> : vector<8x32xf32>
    %14 = tpu.matmul %12, %13, %cst_16 {dimension_numbers = #tpu.dot_dimension_numbers<[1], [0], [0], [1], [0, 0, 1, 1], [], []>} : vector<8x16xbf16>, vector<16x32xbf16>, vector<8x32xf32> -> vector<8x32xf32>
    %15 = arith.truncf %14 : vector<8x32xf32> to vector<8x32xbf16>
    %c0_17 = arith.constant 0 : index
    %c0_18 = arith.constant 0 : index
    %c0_19 = arith.constant 0 : index
    %16 = vector.load %arg7[%c0_17, %c0_18, %c0_19] : memref<2x32x64xbf16, #tpu.memory_space<vmem>>, vector<1x32x64xbf16>
    %17 = vector.shape_cast %16 : vector<1x32x64xbf16> to vector<32x64xbf16>
    %cst_20 = arith.constant dense<0.000000e+00> : vector<8x64xf32>
    %18 = tpu.matmul %15, %17, %cst_20 {dimension_numbers = #tpu.dot_dimension_numbers<[1], [0], [0], [1], [0, 0, 1, 1], [], []>} : vector<8x32xbf16>, vector<32x64xbf16>, vector<8x64xf32> -> vector<8x64xf32>
    %19 = vector.extract_strided_slice %18 {offsets = [0, 0], sizes = [8, 8], strides = [1, 1]} : vector<8x64xf32> to vector<8x8xf32>
    %20 = arith.truncf %19 : vector<8x8xf32> to vector<8x8xbf16>
    %21 = vector.extract_strided_slice %18 {offsets = [0, 32], sizes = [8, 8], strides = [1, 1]} : vector<8x64xf32> to vector<8x8xf32>
    %22 = arith.truncf %21 : vector<8x8xf32> to vector<8x8xbf16>
    %cst_21 = arith.constant dense<0.000000e+00> : vector<8x8xf32>
    %23 = tpu.matmul %20, %20, %cst_21 {dimension_numbers = #tpu.dot_dimension_numbers<[1], [1], [0], [0], [0, 0, 1, 0], [], []>} : vector<8x8xbf16>, vector<8x8xbf16>, vector<8x8xf32> -> vector<8x8xf32>
    %cst_22 = arith.constant -1.000000e+30 : f32
    %24 = vector.shape_cast %7 : vector<1x8xi1> to vector<1x8xi1>
    %25 = vector.broadcast %24 : vector<1x8xi1> to vector<8x8xi1>
    %26 = vector.broadcast %cst_22 : f32 to vector<8x8xf32>
    %27 = arith.select %25, %26, %23 : vector<8x8xi1>, vector<8x8xf32>
    %cst_23 = arith.constant dense<0xFF800000> : vector<8xf32>
    %28 = vector.multi_reduction <maximumf>, %27, %cst_23 [1] : vector<8x8xf32> to vector<8xf32>
    %29 = vector.shape_cast %28 : vector<8xf32> to vector<8x1xf32>
    %30 = vector.broadcast %29 : vector<8x1xf32> to vector<8x8xf32>
    %31 = arith.subf %27, %30 : vector<8x8xf32>
    %32 = math.exp %31 : vector<8x8xf32>
    %33 = arith.mulf %32, %3 : vector<8x8xf32>
    %cst_24 = arith.constant dense<0.000000e+00> : vector<8xf32>
    %34 = vector.multi_reduction <add>, %33, %cst_24 [1] : vector<8x8xf32> to vector<8xf32>
    %35 = vector.shape_cast %34 : vector<8xf32> to vector<8x1xf32>
    %cst_25 = arith.constant 9.99999997E-7 : f32
    %36 = vector.broadcast %cst_25 : f32 to vector<8x1xf32>
    %37 = arith.maximumf %35, %36 : vector<8x1xf32>
    %38 = arith.truncf %33 : vector<8x8xf32> to vector<8x8xbf16>
    %cst_26 = arith.constant dense<0.000000e+00> : vector<8x8xf32>
    %39 = tpu.matmul %38, %22, %cst_26 {dimension_numbers = #tpu.dot_dimension_numbers<[1], [0], [0], [1], [0, 0, 1, 1], [], []>} : vector<8x8xbf16>, vector<8x8xbf16>, vector<8x8xf32> -> vector<8x8xf32>
    %40 = tpu.reciprocal %37 {approx = true} : vector<8x1xf32> -> vector<8x1xf32>
    %41 = vector.broadcast %40 : vector<8x1xf32> to vector<8x8xf32>
    %42 = arith.mulf %39, %41 : vector<8x8xf32>
    %c0_27 = arith.constant 0 : index
    %c0_28 = arith.constant 0 : index
    %43 = vector.load %arg18[%c0_27, %c0_28] : memref<8x32xf32, #tpu.memory_space<vmem>>, vector<8x8xf32>
    tpu.vector_store %arg18[%c0_27, %c0_28], %42 {strides = array<i32>} : memref<8x32xf32, #tpu.memory_space<vmem>>, vector<8x8xf32>,
    %44 = vector.extract_strided_slice %18 {offsets = [0, 8], sizes = [8, 8], strides = [1, 1]} : vector<8x64xf32> to vector<8x8xf32>
    %45 = arith.truncf %44 : vector<8x8xf32> to vector<8x8xbf16>
    %46 = vector.extract_strided_slice %18 {offsets = [0, 40], sizes = [8, 8], strides = [1, 1]} : vector<8x64xf32> to vector<8x8xf32>
    %47 = arith.truncf %46 : vector<8x8xf32> to vector<8x8xbf16>
    %cst_29 = arith.constant dense<0.000000e+00> : vector<8x8xf32>
    %48 = tpu.matmul %45, %45, %cst_29 {dimension_numbers = #tpu.dot_dimension_numbers<[1], [1], [0], [0], [0, 0, 1, 0], [], []>} : vector<8x8xbf16>, vector<8x8xbf16>, vector<8x8xf32> -> vector<8x8xf32>
    %cst_30 = arith.constant -1.000000e+30 : f32
    %49 = vector.shape_cast %7 : vector<1x8xi1> to vector<1x8xi1>
    %50 = vector.broadcast %49 : vector<1x8xi1> to vector<8x8xi1>
    %51 = vector.broadcast %cst_30 : f32 to vector<8x8xf32>
    %52 = arith.select %50, %51, %48 : vector<8x8xi1>, vector<8x8xf32>
    %cst_31 = arith.constant dense<0xFF800000> : vector<8xf32>
    %53 = vector.multi_reduction <maximumf>, %52, %cst_31 [1] : vector<8x8xf32> to vector<8xf32>
    %54 = vector.shape_cast %53 : vector<8xf32> to vector<8x1xf32>
    %55 = vector.broadcast %54 : vector<8x1xf32> to vector<8x8xf32>
    %56 = arith.subf %52, %55 : vector<8x8xf32>
    %57 = math.exp %56 : vector<8x8xf32>
    %58 = arith.mulf %57, %3 : vector<8x8xf32>
    %cst_32 = arith.constant dense<0.000000e+00> : vector<8xf32>
    %59 = vector.multi_reduction <add>, %58, %cst_32 [1] : vector<8x8xf32> to vector<8xf32>
    %60 = vector.shape_cast %59 : vector<8xf32> to vector<8x1xf32>
    %cst_33 = arith.constant 9.99999997E-7 : f32
    %61 = vector.broadcast %cst_33 : f32 to vector<8x1xf32>
    %62 = arith.maximumf %60, %61 : vector<8x1xf32>
    %63 = arith.truncf %58 : vector<8x8xf32> to vector<8x8xbf16>
    %cst_34 = arith.constant dense<0.000000e+00> : vector<8x8xf32>
    %64 = tpu.matmul %63, %47, %cst_34 {dimension_numbers = #tpu.dot_dimension_numbers<[1], [0], [0], [1], [0, 0, 1, 1], [], []>} : vector<8x8xbf16>, vector<8x8xbf16>, vector<8x8xf32> -> vector<8x8xf32>
    %65 = tpu.reciprocal %62 {approx = true} : vector<8x1xf32> -> vector<8x1xf32>
    %66 = vector.broadcast %65 : vector<8x1xf32> to vector<8x8xf32>
    %67 = arith.mulf %64, %66 : vector<8x8xf32>
    %c0_35 = arith.constant 0 : index
    %c8 = arith.constant 8 : index
    %68 = vector.load %arg18[%c0_35, %c8] : memref<8x32xf32, #tpu.memory_space<vmem>>, vector<8x8xf32>
    tpu.vector_store %arg18[%c0_35, %c8], %67 {strides = array<i32>} : memref<8x32xf32, #tpu.memory_space<vmem>>, vector<8x8xf32>,
    %69 = vector.extract_strided_slice %18 {offsets = [0, 16], sizes = [8, 8], strides = [1, 1]} : vector<8x64xf32> to vector<8x8xf32>
    %70 = arith.truncf %69 : vector<8x8xf32> to vector<8x8xbf16>
    %71 = vector.extract_strided_slice %18 {offsets = [0, 48], sizes = [8, 8], strides = [1, 1]} : vector<8x64xf32> to vector<8x8xf32>
    %72 = arith.truncf %71 : vector<8x8xf32> to vector<8x8xbf16>
    %cst_36 = arith.constant dense<0.000000e+00> : vector<8x8xf32>
    %73 = tpu.matmul %70, %70, %cst_36 {dimension_numbers = #tpu.dot_dimension_numbers<[1], [1], [0], [0], [0, 0, 1, 0], [], []>} : vector<8x8xbf16>, vector<8x8xbf16>, vector<8x8xf32> -> vector<8x8xf32>
    %cst_37 = arith.constant -1.000000e+30 : f32
    %74 = vector.shape_cast %7 : vector<1x8xi1> to vector<1x8xi1>
    %75 = vector.broadcast %74 : vector<1x8xi1> to vector<8x8xi1>
    %76 = vector.broadcast %cst_37 : f32 to vector<8x8xf32>
    %77 = arith.select %75, %76, %73 : vector<8x8xi1>, vector<8x8xf32>
    %cst_38 = arith.constant dense<0xFF800000> : vector<8xf32>
    %78 = vector.multi_reduction <maximumf>, %77, %cst_38 [1] : vector<8x8xf32> to vector<8xf32>
    %79 = vector.shape_cast %78 : vector<8xf32> to vector<8x1xf32>
    %80 = vector.broadcast %79 : vector<8x1xf32> to vector<8x8xf32>
    %81 = arith.subf %77, %80 : vector<8x8xf32>
    %82 = math.exp %81 : vector<8x8xf32>
    %83 = arith.mulf %82, %3 : vector<8x8xf32>
    %cst_39 = arith.constant dense<0.000000e+00> : vector<8xf32>
    %84 = vector.multi_reduction <add>, %83, %cst_39 [1] : vector<8x8xf32> to vector<8xf32>
    %85 = vector.shape_cast %84 : vector<8xf32> to vector<8x1xf32>
    %cst_40 = arith.constant 9.99999997E-7 : f32
    %86 = vector.broadcast %cst_40 : f32 to vector<8x1xf32>
    %87 = arith.maximumf %85, %86 : vector<8x1xf32>
    %88 = arith.truncf %83 : vector<8x8xf32> to vector<8x8xbf16>
    %cst_41 = arith.constant dense<0.000000e+00> : vector<8x8xf32>
    %89 = tpu.matmul %88, %72, %cst_41 {dimension_numbers = #tpu.dot_dimension_numbers<[1], [0], [0], [1], [0, 0, 1, 1], [], []>} : vector<8x8xbf16>, vector<8x8xbf16>, vector<8x8xf32> -> vector<8x8xf32>
    %90 = tpu.reciprocal %87 {approx = true} : vector<8x1xf32> -> vector<8x1xf32>
    %91 = vector.broadcast %90 : vector<8x1xf32> to vector<8x8xf32>
    %92 = arith.mulf %89, %91 : vector<8x8xf32>
    %c0_42 = arith.constant 0 : index
    %c16 = arith.constant 16 : index
    %93 = vector.load %arg18[%c0_42, %c16] : memref<8x32xf32, #tpu.memory_space<vmem>>, vector<8x8xf32>
    tpu.vector_store %arg18[%c0_42, %c16], %92 {strides = array<i32>} : memref<8x32xf32, #tpu.memory_space<vmem>>, vector<8x8xf32>,
    %94 = vector.extract_strided_slice %18 {offsets = [0, 24], sizes = [8, 8], strides = [1, 1]} : vector<8x64xf32> to vector<8x8xf32>
    %95 = arith.truncf %94 : vector<8x8xf32> to vector<8x8xbf16>
    %96 = vector.extract_strided_slice %18 {offsets = [0, 56], sizes = [8, 8], strides = [1, 1]} : vector<8x64xf32> to vector<8x8xf32>
    %97 = arith.truncf %96 : vector<8x8xf32> to vector<8x8xbf16>
    %cst_43 = arith.constant dense<0.000000e+00> : vector<8x8xf32>
    %98 = tpu.matmul %95, %95, %cst_43 {dimension_numbers = #tpu.dot_dimension_numbers<[1], [1], [0], [0], [0, 0, 1, 0], [], []>} : vector<8x8xbf16>, vector<8x8xbf16>, vector<8x8xf32> -> vector<8x8xf32>
    %cst_44 = arith.constant -1.000000e+30 : f32
    %99 = vector.shape_cast %7 : vector<1x8xi1> to vector<1x8xi1>
    %100 = vector.broadcast %99 : vector<1x8xi1> to vector<8x8xi1>
    %101 = vector.broadcast %cst_44 : f32 to vector<8x8xf32>
    %102 = arith.select %100, %101, %98 : vector<8x8xi1>, vector<8x8xf32>
    %cst_45 = arith.constant dense<0xFF800000> : vector<8xf32>
    %103 = vector.multi_reduction <maximumf>, %102, %cst_45 [1] : vector<8x8xf32> to vector<8xf32>
    %104 = vector.shape_cast %103 : vector<8xf32> to vector<8x1xf32>
    %105 = vector.broadcast %104 : vector<8x1xf32> to vector<8x8xf32>
    %106 = arith.subf %102, %105 : vector<8x8xf32>
    %107 = math.exp %106 : vector<8x8xf32>
    %108 = arith.mulf %107, %3 : vector<8x8xf32>
    %cst_46 = arith.constant dense<0.000000e+00> : vector<8xf32>
    %109 = vector.multi_reduction <add>, %108, %cst_46 [1] : vector<8x8xf32> to vector<8xf32>
    %110 = vector.shape_cast %109 : vector<8xf32> to vector<8x1xf32>
    %cst_47 = arith.constant 9.99999997E-7 : f32
    %111 = vector.broadcast %cst_47 : f32 to vector<8x1xf32>
    %112 = arith.maximumf %110, %111 : vector<8x1xf32>
    %113 = arith.truncf %108 : vector<8x8xf32> to vector<8x8xbf16>
    %cst_48 = arith.constant dense<0.000000e+00> : vector<8x8xf32>
    %114 = tpu.matmul %113, %97, %cst_48 {dimension_numbers = #tpu.dot_dimension_numbers<[1], [0], [0], [1], [0, 0, 1, 1], [], []>} : vector<8x8xbf16>, vector<8x8xbf16>, vector<8x8xf32> -> vector<8x8xf32>
    %115 = tpu.reciprocal %112 {approx = true} : vector<8x1xf32> -> vector<8x1xf32>
    %116 = vector.broadcast %115 : vector<8x1xf32> to vector<8x8xf32>
    %117 = arith.mulf %114, %116 : vector<8x8xf32>
    %c0_49 = arith.constant 0 : index
    %c24 = arith.constant 24 : index
    %118 = vector.load %arg18[%c0_49, %c24] : memref<8x32xf32, #tpu.memory_space<vmem>>, vector<8x8xf32>
    tpu.vector_store %arg18[%c0_49, %c24], %117 {strides = array<i32>} : memref<8x32xf32, #tpu.memory_space<vmem>>, vector<8x8xf32>,
    %c0_50 = arith.constant 0 : index
    %c0_51 = arith.constant 0 : index
    %119 = vector.load %arg18[%c0_50, %c0_51] : memref<8x32xf32, #tpu.memory_space<vmem>>, vector<8x32xf32>
    %120 = arith.truncf %119 : vector<8x32xf32> to vector<8x32xbf16>
    %c0_52 = arith.constant 0 : index
    %c0_53 = arith.constant 0 : index
    %c0_54 = arith.constant 0 : index
    %121 = vector.load %arg8[%c0_52, %c0_53, %c0_54] : memref<2x32x32xbf16, #tpu.memory_space<vmem>>, vector<1x32x32xbf16>
    %122 = vector.shape_cast %121 : vector<1x32x32xbf16> to vector<32x32xbf16>
    %cst_55 = arith.constant dense<0.000000e+00> : vector<8x32xf32>
    %123 = tpu.matmul %120, %122, %cst_55 {dimension_numbers = #tpu.dot_dimension_numbers<[1], [0], [0], [1], [0, 0, 1, 1], [], []>} : vector<8x32xbf16>, vector<32x32xbf16>, vector<8x32xf32> -> vector<8x32xf32>
    %124 = vector.broadcast %11 : vector<8x1xf32> to vector<8x32xf32>
    %125 = arith.mulf %124, %123 : vector<8x32xf32>
    %126 = arith.addf %14, %125 : vector<8x32xf32>
    %c0_56 = arith.constant 0 : index
    %c0_57 = arith.constant 0 : index
    %c0_58 = arith.constant 0 : index
    %127 = vector.load %arg12[%c0_56, %c0_57, %c0_58] : memref<2x5x32xf32, #tpu.memory_space<vmem>>, vector<1x5x32xf32>
    %128 = vector.shape_cast %127 : vector<1x5x32xf32> to vector<5x32xf32>
    %129 = vector.extract_strided_slice %128 {offsets = [0, 0], sizes = [1, 32], strides = [1, 1]} : vector<5x32xf32> to vector<1x32xf32>
    %130 = vector.extract_strided_slice %128 {offsets = [1, 0], sizes = [1, 32], strides = [1, 1]} : vector<5x32xf32> to vector<1x32xf32>
    %131 = vector.extract_strided_slice %128 {offsets = [2, 0], sizes = [1, 32], strides = [1, 1]} : vector<5x32xf32> to vector<1x32xf32>
    %132 = vector.extract_strided_slice %128 {offsets = [3, 0], sizes = [1, 32], strides = [1, 1]} : vector<5x32xf32> to vector<1x32xf32>
    %133 = vector.extract_strided_slice %128 {offsets = [4, 0], sizes = [1, 32], strides = [1, 1]} : vector<5x32xf32> to vector<1x32xf32>
    %cst_59 = arith.constant dense<0.000000e+00> : vector<8xf32>
    %134 = vector.multi_reduction <add>, %126, %cst_59 [1] : vector<8x32xf32> to vector<8xf32>
    %135 = vector.shape_cast %134 : vector<8xf32> to vector<8x1xf32>
    %cst_60 = arith.constant 3.200000e+01 : f32
    %136 = vector.broadcast %cst_60 : f32 to vector<8x1xf32>
    %137 = arith.divf %135, %136 : vector<8x1xf32>
    %138 = vector.broadcast %137 : vector<8x1xf32> to vector<8x32xf32>
    %139 = arith.subf %126, %138 : vector<8x32xf32>
    %140 = arith.mulf %139, %139 : vector<8x32xf32>
    %cst_61 = arith.constant dense<0.000000e+00> : vector<8xf32>
    %141 = vector.multi_reduction <add>, %140, %cst_61 [1] : vector<8x32xf32> to vector<8xf32>
    %142 = vector.shape_cast %141 : vector<8xf32> to vector<8x1xf32>
    %cst_62 = arith.constant 3.200000e+01 : f32
    %143 = vector.broadcast %cst_62 : f32 to vector<8x1xf32>
    %144 = arith.divf %142, %143 : vector<8x1xf32>
    %145 = vector.broadcast %137 : vector<8x1xf32> to vector<8x32xf32>
    %146 = arith.subf %126, %145 : vector<8x32xf32>
    %cst_63 = arith.constant 9.99999974E-6 : f32
    %147 = vector.broadcast %cst_63 : f32 to vector<8x1xf32>
    %148 = arith.addf %144, %147 : vector<8x1xf32>
    %149 = math.rsqrt %148 : vector<8x1xf32>
    %150 = vector.broadcast %149 : vector<8x1xf32> to vector<8x32xf32>
    %151 = arith.mulf %146, %150 : vector<8x32xf32>
    %152 = vector.broadcast %130 : vector<1x32xf32> to vector<8x32xf32>
    %153 = arith.mulf %151, %152 : vector<8x32xf32>
    %154 = vector.broadcast %131 : vector<1x32xf32> to vector<8x32xf32>
    %155 = arith.addf %153, %154 : vector<8x32xf32>
    %156 = arith.truncf %155 : vector<8x32xf32> to vector<8x32xbf16>
    %c0_64 = arith.constant 0 : index
    %c0_65 = arith.constant 0 : index
    %c0_66 = arith.constant 0 : index
    %157 = vector.load %arg9[%c0_64, %c0_65, %c0_66] : memref<2x32x64xbf16, #tpu.memory_space<vmem>>, vector<1x32x64xbf16>
    %158 = vector.shape_cast %157 : vector<1x32x64xbf16> to vector<32x64xbf16>
    %cst_67 = arith.constant dense<0.000000e+00> : vector<8x64xf32>
    %159 = tpu.matmul %156, %158, %cst_67 {dimension_numbers = #tpu.dot_dimension_numbers<[1], [0], [0], [1], [0, 0, 1, 1], [], []>} : vector<8x32xbf16>, vector<32x64xbf16>, vector<8x64xf32> -> vector<8x64xf32>
    %c0_68 = arith.constant 0 : index
    %c0_69 = arith.constant 0 : index
    %c0_70 = arith.constant 0 : index
    %160 = vector.load %arg10[%c0_68, %c0_69, %c0_70] : memref<2x1x64xf32, #tpu.memory_space<vmem>>, vector<1x1x64xf32>
    %161 = vector.shape_cast %160 : vector<1x1x64xf32> to vector<1x64xf32>
    %162 = vector.broadcast %161 : vector<1x64xf32> to vector<8x64xf32>
    %163 = arith.addf %159, %162 : vector<8x64xf32>
    %cst_71 = arith.constant 0.000000e+00 : f32
    %164 = vector.broadcast %cst_71 : f32 to vector<8x64xf32>
    %165 = arith.maximumf %163, %164 : vector<8x64xf32>
    %166 = arith.truncf %165 : vector<8x64xf32> to vector<8x64xbf16>
    %c0_72 = arith.constant 0 : index
    %c0_73 = arith.constant 0 : index
    %c0_74 = arith.constant 0 : index
    %167 = vector.load %arg11[%c0_72, %c0_73, %c0_74] : memref<2x64x32xbf16, #tpu.memory_space<vmem>>, vector<1x64x32xbf16>
    %168 = vector.shape_cast %167 : vector<1x64x32xbf16> to vector<64x32xbf16>
    %cst_75 = arith.constant dense<0.000000e+00> : vector<8x32xf32>
    %169 = tpu.matmul %166, %168, %cst_75 {dimension_numbers = #tpu.dot_dimension_numbers<[1], [0], [0], [1], [0, 0, 1, 1], [], []>} : vector<8x64xbf16>, vector<64x32xbf16>, vector<8x32xf32> -> vector<8x32xf32>
    %170 = vector.broadcast %129 : vector<1x32xf32> to vector<8x32xf32>
    %171 = arith.addf %169, %170 : vector<8x32xf32>
    %172 = arith.addf %155, %171 : vector<8x32xf32>
    %cst_76 = arith.constant dense<0.000000e+00> : vector<8xf32>
    %173 = vector.multi_reduction <add>, %172, %cst_76 [1] : vector<8x32xf32> to vector<8xf32>
    %174 = vector.shape_cast %173 : vector<8xf32> to vector<8x1xf32>
    %cst_77 = arith.constant 3.200000e+01 : f32
    %175 = vector.broadcast %cst_77 : f32 to vector<8x1xf32>
    %176 = arith.divf %174, %175 : vector<8x1xf32>
    %177 = vector.broadcast %176 : vector<8x1xf32> to vector<8x32xf32>
    %178 = arith.subf %172, %177 : vector<8x32xf32>
    %179 = arith.mulf %178, %178 : vector<8x32xf32>
    %cst_78 = arith.constant dense<0.000000e+00> : vector<8xf32>
    %180 = vector.multi_reduction <add>, %179, %cst_78 [1] : vector<8x32xf32> to vector<8xf32>
    %181 = vector.shape_cast %180 : vector<8xf32> to vector<8x1xf32>
    %cst_79 = arith.constant 3.200000e+01 : f32
    %182 = vector.broadcast %cst_79 : f32 to vector<8x1xf32>
    %183 = arith.divf %181, %182 : vector<8x1xf32>
    %184 = vector.broadcast %176 : vector<8x1xf32> to vector<8x32xf32>
    %185 = arith.subf %172, %184 : vector<8x32xf32>
    %cst_80 = arith.constant 9.99999974E-6 : f32
    %186 = vector.broadcast %cst_80 : f32 to vector<8x1xf32>
    %187 = arith.addf %183, %186 : vector<8x1xf32>
    %188 = math.rsqrt %187 : vector<8x1xf32>
    %189 = vector.broadcast %188 : vector<8x1xf32> to vector<8x32xf32>
    %190 = arith.mulf %185, %189 : vector<8x32xf32>
    %191 = vector.broadcast %132 : vector<1x32xf32> to vector<8x32xf32>
    %192 = arith.mulf %190, %191 : vector<8x32xf32>
    %193 = vector.broadcast %133 : vector<1x32xf32> to vector<8x32xf32>
    %194 = arith.addf %192, %193 : vector<8x32xf32>
    %195 = arith.truncf %194 : vector<8x32xf32> to vector<8x32xbf16>
    %c1 = arith.constant 1 : index
    %c0_81 = arith.constant 0 : index
    %c0_82 = arith.constant 0 : index
    %196 = vector.load %arg7[%c1, %c0_81, %c0_82] : memref<2x32x64xbf16, #tpu.memory_space<vmem>>, vector<1x32x64xbf16>
    %197 = vector.shape_cast %196 : vector<1x32x64xbf16> to vector<32x64xbf16>
    %cst_83 = arith.constant dense<0.000000e+00> : vector<8x64xf32>
    %198 = tpu.matmul %195, %197, %cst_83 {dimension_numbers = #tpu.dot_dimension_numbers<[1], [0], [0], [1], [0, 0, 1, 1], [], []>} : vector<8x32xbf16>, vector<32x64xbf16>, vector<8x64xf32> -> vector<8x64xf32>
    %199 = vector.extract_strided_slice %198 {offsets = [0, 0], sizes = [8, 8], strides = [1, 1]} : vector<8x64xf32> to vector<8x8xf32>
    %200 = arith.truncf %199 : vector<8x8xf32> to vector<8x8xbf16>
    %201 = vector.extract_strided_slice %198 {offsets = [0, 32], sizes = [8, 8], strides = [1, 1]} : vector<8x64xf32> to vector<8x8xf32>
    %202 = arith.truncf %201 : vector<8x8xf32> to vector<8x8xbf16>
    %cst_84 = arith.constant dense<0.000000e+00> : vector<8x8xf32>
    %203 = tpu.matmul %200, %200, %cst_84 {dimension_numbers = #tpu.dot_dimension_numbers<[1], [1], [0], [0], [0, 0, 1, 0], [], []>} : vector<8x8xbf16>, vector<8x8xbf16>, vector<8x8xf32> -> vector<8x8xf32>
    %cst_85 = arith.constant -1.000000e+30 : f32
    %204 = vector.shape_cast %7 : vector<1x8xi1> to vector<1x8xi1>
    %205 = vector.broadcast %204 : vector<1x8xi1> to vector<8x8xi1>
    %206 = vector.broadcast %cst_85 : f32 to vector<8x8xf32>
    %207 = arith.select %205, %206, %203 : vector<8x8xi1>, vector<8x8xf32>
    %cst_86 = arith.constant dense<0xFF800000> : vector<8xf32>
    %208 = vector.multi_reduction <maximumf>, %207, %cst_86 [1] : vector<8x8xf32> to vector<8xf32>
    %209 = vector.shape_cast %208 : vector<8xf32> to vector<8x1xf32>
    %210 = vector.broadcast %209 : vector<8x1xf32> to vector<8x8xf32>
    %211 = arith.subf %207, %210 : vector<8x8xf32>
    %212 = math.exp %211 : vector<8x8xf32>
    %213 = arith.mulf %212, %3 : vector<8x8xf32>
    %cst_87 = arith.constant dense<0.000000e+00> : vector<8xf32>
    %214 = vector.multi_reduction <add>, %213, %cst_87 [1] : vector<8x8xf32> to vector<8xf32>
    %215 = vector.shape_cast %214 : vector<8xf32> to vector<8x1xf32>
    %cst_88 = arith.constant 9.99999997E-7 : f32
    %216 = vector.broadcast %cst_88 : f32 to vector<8x1xf32>
    %217 = arith.maximumf %215, %216 : vector<8x1xf32>
    %218 = arith.truncf %213 : vector<8x8xf32> to vector<8x8xbf16>
    %cst_89 = arith.constant dense<0.000000e+00> : vector<8x8xf32>
    %219 = tpu.matmul %218, %202, %cst_89 {dimension_numbers = #tpu.dot_dimension_numbers<[1], [0], [0], [1], [0, 0, 1, 1], [], []>} : vector<8x8xbf16>, vector<8x8xbf16>, vector<8x8xf32> -> vector<8x8xf32>
    %220 = tpu.reciprocal %217 {approx = true} : vector<8x1xf32> -> vector<8x1xf32>
    %221 = vector.broadcast %220 : vector<8x1xf32> to vector<8x8xf32>
    %222 = arith.mulf %219, %221 : vector<8x8xf32>
    %c0_90 = arith.constant 0 : index
    %c0_91 = arith.constant 0 : index
    %223 = vector.load %arg18[%c0_90, %c0_91] : memref<8x32xf32, #tpu.memory_space<vmem>>, vector<8x8xf32>
    tpu.vector_store %arg18[%c0_90, %c0_91], %222 {strides = array<i32>} : memref<8x32xf32, #tpu.memory_space<vmem>>, vector<8x8xf32>,
    %224 = vector.extract_strided_slice %198 {offsets = [0, 8], sizes = [8, 8], strides = [1, 1]} : vector<8x64xf32> to vector<8x8xf32>
    %225 = arith.truncf %224 : vector<8x8xf32> to vector<8x8xbf16>
    %226 = vector.extract_strided_slice %198 {offsets = [0, 40], sizes = [8, 8], strides = [1, 1]} : vector<8x64xf32> to vector<8x8xf32>
    %227 = arith.truncf %226 : vector<8x8xf32> to vector<8x8xbf16>
    %cst_92 = arith.constant dense<0.000000e+00> : vector<8x8xf32>
    %228 = tpu.matmul %225, %225, %cst_92 {dimension_numbers = #tpu.dot_dimension_numbers<[1], [1], [0], [0], [0, 0, 1, 0], [], []>} : vector<8x8xbf16>, vector<8x8xbf16>, vector<8x8xf32> -> vector<8x8xf32>
    %cst_93 = arith.constant -1.000000e+30 : f32
    %229 = vector.shape_cast %7 : vector<1x8xi1> to vector<1x8xi1>
    %230 = vector.broadcast %229 : vector<1x8xi1> to vector<8x8xi1>
    %231 = vector.broadcast %cst_93 : f32 to vector<8x8xf32>
    %232 = arith.select %230, %231, %228 : vector<8x8xi1>, vector<8x8xf32>
    %cst_94 = arith.constant dense<0xFF800000> : vector<8xf32>
    %233 = vector.multi_reduction <maximumf>, %232, %cst_94 [1] : vector<8x8xf32> to vector<8xf32>
    %234 = vector.shape_cast %233 : vector<8xf32> to vector<8x1xf32>
    %235 = vector.broadcast %234 : vector<8x1xf32> to vector<8x8xf32>
    %236 = arith.subf %232, %235 : vector<8x8xf32>
    %237 = math.exp %236 : vector<8x8xf32>
    %238 = arith.mulf %237, %3 : vector<8x8xf32>
    %cst_95 = arith.constant dense<0.000000e+00> : vector<8xf32>
    %239 = vector.multi_reduction <add>, %238, %cst_95 [1] : vector<8x8xf32> to vector<8xf32>
    %240 = vector.shape_cast %239 : vector<8xf32> to vector<8x1xf32>
    %cst_96 = arith.constant 9.99999997E-7 : f32
    %241 = vector.broadcast %cst_96 : f32 to vector<8x1xf32>
    %242 = arith.maximumf %240, %241 : vector<8x1xf32>
    %243 = arith.truncf %238 : vector<8x8xf32> to vector<8x8xbf16>
    %cst_97 = arith.constant dense<0.000000e+00> : vector<8x8xf32>
    %244 = tpu.matmul %243, %227, %cst_97 {dimension_numbers = #tpu.dot_dimension_numbers<[1], [0], [0], [1], [0, 0, 1, 1], [], []>} : vector<8x8xbf16>, vector<8x8xbf16>, vector<8x8xf32> -> vector<8x8xf32>
    %245 = tpu.reciprocal %242 {approx = true} : vector<8x1xf32> -> vector<8x1xf32>
    %246 = vector.broadcast %245 : vector<8x1xf32> to vector<8x8xf32>
    %247 = arith.mulf %244, %246 : vector<8x8xf32>
    %c0_98 = arith.constant 0 : index
    %c8_99 = arith.constant 8 : index
    %248 = vector.load %arg18[%c0_98, %c8_99] : memref<8x32xf32, #tpu.memory_space<vmem>>, vector<8x8xf32>
    tpu.vector_store %arg18[%c0_98, %c8_99], %247 {strides = array<i32>} : memref<8x32xf32, #tpu.memory_space<vmem>>, vector<8x8xf32>,
    %249 = vector.extract_strided_slice %198 {offsets = [0, 16], sizes = [8, 8], strides = [1, 1]} : vector<8x64xf32> to vector<8x8xf32>
    %250 = arith.truncf %249 : vector<8x8xf32> to vector<8x8xbf16>
    %251 = vector.extract_strided_slice %198 {offsets = [0, 48], sizes = [8, 8], strides = [1, 1]} : vector<8x64xf32> to vector<8x8xf32>
    %252 = arith.truncf %251 : vector<8x8xf32> to vector<8x8xbf16>
    %cst_100 = arith.constant dense<0.000000e+00> : vector<8x8xf32>
    %253 = tpu.matmul %250, %250, %cst_100 {dimension_numbers = #tpu.dot_dimension_numbers<[1], [1], [0], [0], [0, 0, 1, 0], [], []>} : vector<8x8xbf16>, vector<8x8xbf16>, vector<8x8xf32> -> vector<8x8xf32>
    %cst_101 = arith.constant -1.000000e+30 : f32
    %254 = vector.shape_cast %7 : vector<1x8xi1> to vector<1x8xi1>
    %255 = vector.broadcast %254 : vector<1x8xi1> to vector<8x8xi1>
    %256 = vector.broadcast %cst_101 : f32 to vector<8x8xf32>
    %257 = arith.select %255, %256, %253 : vector<8x8xi1>, vector<8x8xf32>
    %cst_102 = arith.constant dense<0xFF800000> : vector<8xf32>
    %258 = vector.multi_reduction <maximumf>, %257, %cst_102 [1] : vector<8x8xf32> to vector<8xf32>
    %259 = vector.shape_cast %258 : vector<8xf32> to vector<8x1xf32>
    %260 = vector.broadcast %259 : vector<8x1xf32> to vector<8x8xf32>
    %261 = arith.subf %257, %260 : vector<8x8xf32>
    %262 = math.exp %261 : vector<8x8xf32>
    %263 = arith.mulf %262, %3 : vector<8x8xf32>
    %cst_103 = arith.constant dense<0.000000e+00> : vector<8xf32>
    %264 = vector.multi_reduction <add>, %263, %cst_103 [1] : vector<8x8xf32> to vector<8xf32>
    %265 = vector.shape_cast %264 : vector<8xf32> to vector<8x1xf32>
    %cst_104 = arith.constant 9.99999997E-7 : f32
    %266 = vector.broadcast %cst_104 : f32 to vector<8x1xf32>
    %267 = arith.maximumf %265, %266 : vector<8x1xf32>
    %268 = arith.truncf %263 : vector<8x8xf32> to vector<8x8xbf16>
    %cst_105 = arith.constant dense<0.000000e+00> : vector<8x8xf32>
    %269 = tpu.matmul %268, %252, %cst_105 {dimension_numbers = #tpu.dot_dimension_numbers<[1], [0], [0], [1], [0, 0, 1, 1], [], []>} : vector<8x8xbf16>, vector<8x8xbf16>, vector<8x8xf32> -> vector<8x8xf32>
    %270 = tpu.reciprocal %267 {approx = true} : vector<8x1xf32> -> vector<8x1xf32>
    %271 = vector.broadcast %270 : vector<8x1xf32> to vector<8x8xf32>
    %272 = arith.mulf %269, %271 : vector<8x8xf32>
    %c0_106 = arith.constant 0 : index
    %c16_107 = arith.constant 16 : index
    %273 = vector.load %arg18[%c0_106, %c16_107] : memref<8x32xf32, #tpu.memory_space<vmem>>, vector<8x8xf32>
    tpu.vector_store %arg18[%c0_106, %c16_107], %272 {strides = array<i32>} : memref<8x32xf32, #tpu.memory_space<vmem>>, vector<8x8xf32>,
    %274 = vector.extract_strided_slice %198 {offsets = [0, 24], sizes = [8, 8], strides = [1, 1]} : vector<8x64xf32> to vector<8x8xf32>
    %275 = arith.truncf %274 : vector<8x8xf32> to vector<8x8xbf16>
    %276 = vector.extract_strided_slice %198 {offsets = [0, 56], sizes = [8, 8], strides = [1, 1]} : vector<8x64xf32> to vector<8x8xf32>
    %277 = arith.truncf %276 : vector<8x8xf32> to vector<8x8xbf16>
    %cst_108 = arith.constant dense<0.000000e+00> : vector<8x8xf32>
    %278 = tpu.matmul %275, %275, %cst_108 {dimension_numbers = #tpu.dot_dimension_numbers<[1], [1], [0], [0], [0, 0, 1, 0], [], []>} : vector<8x8xbf16>, vector<8x8xbf16>, vector<8x8xf32> -> vector<8x8xf32>
    %cst_109 = arith.constant -1.000000e+30 : f32
    %279 = vector.shape_cast %7 : vector<1x8xi1> to vector<1x8xi1>
    %280 = vector.broadcast %279 : vector<1x8xi1> to vector<8x8xi1>
    %281 = vector.broadcast %cst_109 : f32 to vector<8x8xf32>
    %282 = arith.select %280, %281, %278 : vector<8x8xi1>, vector<8x8xf32>
    %cst_110 = arith.constant dense<0xFF800000> : vector<8xf32>
    %283 = vector.multi_reduction <maximumf>, %282, %cst_110 [1] : vector<8x8xf32> to vector<8xf32>
    %284 = vector.shape_cast %283 : vector<8xf32> to vector<8x1xf32>
    %285 = vector.broadcast %284 : vector<8x1xf32> to vector<8x8xf32>
    %286 = arith.subf %282, %285 : vector<8x8xf32>
    %287 = math.exp %286 : vector<8x8xf32>
    %288 = arith.mulf %287, %3 : vector<8x8xf32>
    %cst_111 = arith.constant dense<0.000000e+00> : vector<8xf32>
    %289 = vector.multi_reduction <add>, %288, %cst_111 [1] : vector<8x8xf32> to vector<8xf32>
    %290 = vector.shape_cast %289 : vector<8xf32> to vector<8x1xf32>
    %cst_112 = arith.constant 9.99999997E-7 : f32
    %291 = vector.broadcast %cst_112 : f32 to vector<8x1xf32>
    %292 = arith.maximumf %290, %291 : vector<8x1xf32>
    %293 = arith.truncf %288 : vector<8x8xf32> to vector<8x8xbf16>
    %cst_113 = arith.constant dense<0.000000e+00> : vector<8x8xf32>
    %294 = tpu.matmul %293, %277, %cst_113 {dimension_numbers = #tpu.dot_dimension_numbers<[1], [0], [0], [1], [0, 0, 1, 1], [], []>} : vector<8x8xbf16>, vector<8x8xbf16>, vector<8x8xf32> -> vector<8x8xf32>
    %295 = tpu.reciprocal %292 {approx = true} : vector<8x1xf32> -> vector<8x1xf32>
    %296 = vector.broadcast %295 : vector<8x1xf32> to vector<8x8xf32>
    %297 = arith.mulf %294, %296 : vector<8x8xf32>
    %c0_114 = arith.constant 0 : index
    %c24_115 = arith.constant 24 : index
    %298 = vector.load %arg18[%c0_114, %c24_115] : memref<8x32xf32, #tpu.memory_space<vmem>>, vector<8x8xf32>
    tpu.vector_store %arg18[%c0_114, %c24_115], %297 {strides = array<i32>} : memref<8x32xf32, #tpu.memory_space<vmem>>, vector<8x8xf32>,
    %c0_116 = arith.constant 0 : index
    %c0_117 = arith.constant 0 : index
    %299 = vector.load %arg18[%c0_116, %c0_117] : memref<8x32xf32, #tpu.memory_space<vmem>>, vector<8x32xf32>
    %300 = arith.truncf %299 : vector<8x32xf32> to vector<8x32xbf16>
    %c1_118 = arith.constant 1 : index
    %c0_119 = arith.constant 0 : index
    %c0_120 = arith.constant 0 : index
    %301 = vector.load %arg8[%c1_118, %c0_119, %c0_120] : memref<2x32x32xbf16, #tpu.memory_space<vmem>>, vector<1x32x32xbf16>
    %302 = vector.shape_cast %301 : vector<1x32x32xbf16> to vector<32x32xbf16>
    %cst_121 = arith.constant dense<0.000000e+00> : vector<8x32xf32>
    %303 = tpu.matmul %300, %302, %cst_121 {dimension_numbers = #tpu.dot_dimension_numbers<[1], [0], [0], [1], [0, 0, 1, 1], [], []>} : vector<8x32xbf16>, vector<32x32xbf16>, vector<8x32xf32> -> vector<8x32xf32>
    %304 = vector.broadcast %11 : vector<8x1xf32> to vector<8x32xf32>
    %305 = arith.mulf %304, %303 : vector<8x32xf32>
    %306 = arith.addf %194, %305 : vector<8x32xf32>
    %c1_122 = arith.constant 1 : index
    %c0_123 = arith.constant 0 : index
    %c0_124 = arith.constant 0 : index
    %307 = vector.load %arg12[%c1_122, %c0_123, %c0_124] : memref<2x5x32xf32, #tpu.memory_space<vmem>>, vector<1x5x32xf32>
    %308 = vector.shape_cast %307 : vector<1x5x32xf32> to vector<5x32xf32>
    %309 = vector.extract_strided_slice %308 {offsets = [0, 0], sizes = [1, 32], strides = [1, 1]} : vector<5x32xf32> to vector<1x32xf32>
    %310 = vector.extract_strided_slice %308 {offsets = [1, 0], sizes = [1, 32], strides = [1, 1]} : vector<5x32xf32> to vector<1x32xf32>
    %311 = vector.extract_strided_slice %308 {offsets = [2, 0], sizes = [1, 32], strides = [1, 1]} : vector<5x32xf32> to vector<1x32xf32>
    %312 = vector.extract_strided_slice %308 {offsets = [3, 0], sizes = [1, 32], strides = [1, 1]} : vector<5x32xf32> to vector<1x32xf32>
    %313 = vector.extract_strided_slice %308 {offsets = [4, 0], sizes = [1, 32], strides = [1, 1]} : vector<5x32xf32> to vector<1x32xf32>
    %cst_125 = arith.constant dense<0.000000e+00> : vector<8xf32>
    %314 = vector.multi_reduction <add>, %306, %cst_125 [1] : vector<8x32xf32> to vector<8xf32>
    %315 = vector.shape_cast %314 : vector<8xf32> to vector<8x1xf32>
    %cst_126 = arith.constant 3.200000e+01 : f32
    %316 = vector.broadcast %cst_126 : f32 to vector<8x1xf32>
    %317 = arith.divf %315, %316 : vector<8x1xf32>
    %318 = vector.broadcast %317 : vector<8x1xf32> to vector<8x32xf32>
    %319 = arith.subf %306, %318 : vector<8x32xf32>
    %320 = arith.mulf %319, %319 : vector<8x32xf32>
    %cst_127 = arith.constant dense<0.000000e+00> : vector<8xf32>
    %321 = vector.multi_reduction <add>, %320, %cst_127 [1] : vector<8x32xf32> to vector<8xf32>
    %322 = vector.shape_cast %321 : vector<8xf32> to vector<8x1xf32>
    %cst_128 = arith.constant 3.200000e+01 : f32
    %323 = vector.broadcast %cst_128 : f32 to vector<8x1xf32>
    %324 = arith.divf %322, %323 : vector<8x1xf32>
    %325 = vector.broadcast %317 : vector<8x1xf32> to vector<8x32xf32>
    %326 = arith.subf %306, %325 : vector<8x32xf32>
    %cst_129 = arith.constant 9.99999974E-6 : f32
    %327 = vector.broadcast %cst_129 : f32 to vector<8x1xf32>
    %328 = arith.addf %324, %327 : vector<8x1xf32>
    %329 = math.rsqrt %328 : vector<8x1xf32>
    %330 = vector.broadcast %329 : vector<8x1xf32> to vector<8x32xf32>
    %331 = arith.mulf %326, %330 : vector<8x32xf32>
    %332 = vector.broadcast %310 : vector<1x32xf32> to vector<8x32xf32>
    %333 = arith.mulf %331, %332 : vector<8x32xf32>
    %334 = vector.broadcast %311 : vector<1x32xf32> to vector<8x32xf32>
    %335 = arith.addf %333, %334 : vector<8x32xf32>
    %336 = arith.truncf %335 : vector<8x32xf32> to vector<8x32xbf16>
    %c1_130 = arith.constant 1 : index
    %c0_131 = arith.constant 0 : index
    %c0_132 = arith.constant 0 : index
    %337 = vector.load %arg9[%c1_130, %c0_131, %c0_132] : memref<2x32x64xbf16, #tpu.memory_space<vmem>>, vector<1x32x64xbf16>
    %338 = vector.shape_cast %337 : vector<1x32x64xbf16> to vector<32x64xbf16>
    %cst_133 = arith.constant dense<0.000000e+00> : vector<8x64xf32>
    %339 = tpu.matmul %336, %338, %cst_133 {dimension_numbers = #tpu.dot_dimension_numbers<[1], [0], [0], [1], [0, 0, 1, 1], [], []>} : vector<8x32xbf16>, vector<32x64xbf16>, vector<8x64xf32> -> vector<8x64xf32>
    %c1_134 = arith.constant 1 : index
    %c0_135 = arith.constant 0 : index
    %c0_136 = arith.constant 0 : index
    %340 = vector.load %arg10[%c1_134, %c0_135, %c0_136] : memref<2x1x64xf32, #tpu.memory_space<vmem>>, vector<1x1x64xf32>
    %341 = vector.shape_cast %340 : vector<1x1x64xf32> to vector<1x64xf32>
    %342 = vector.broadcast %341 : vector<1x64xf32> to vector<8x64xf32>
    %343 = arith.addf %339, %342 : vector<8x64xf32>
    %cst_137 = arith.constant 0.000000e+00 : f32
    %344 = vector.broadcast %cst_137 : f32 to vector<8x64xf32>
    %345 = arith.maximumf %343, %344 : vector<8x64xf32>
    %346 = arith.truncf %345 : vector<8x64xf32> to vector<8x64xbf16>
    %c1_138 = arith.constant 1 : index
    %c0_139 = arith.constant 0 : index
    %c0_140 = arith.constant 0 : index
    %347 = vector.load %arg11[%c1_138, %c0_139, %c0_140] : memref<2x64x32xbf16, #tpu.memory_space<vmem>>, vector<1x64x32xbf16>
    %348 = vector.shape_cast %347 : vector<1x64x32xbf16> to vector<64x32xbf16>
    %cst_141 = arith.constant dense<0.000000e+00> : vector<8x32xf32>
    %349 = tpu.matmul %346, %348, %cst_141 {dimension_numbers = #tpu.dot_dimension_numbers<[1], [0], [0], [1], [0, 0, 1, 1], [], []>} : vector<8x64xbf16>, vector<64x32xbf16>, vector<8x32xf32> -> vector<8x32xf32>
    %350 = vector.broadcast %309 : vector<1x32xf32> to vector<8x32xf32>
    %351 = arith.addf %349, %350 : vector<8x32xf32>
    %352 = arith.addf %335, %351 : vector<8x32xf32>
    %cst_142 = arith.constant dense<0.000000e+00> : vector<8xf32>
    %353 = vector.multi_reduction <add>, %352, %cst_142 [1] : vector<8x32xf32> to vector<8xf32>
    %354 = vector.shape_cast %353 : vector<8xf32> to vector<8x1xf32>
    %cst_143 = arith.constant 3.200000e+01 : f32
    %355 = vector.broadcast %cst_143 : f32 to vector<8x1xf32>
    %356 = arith.divf %354, %355 : vector<8x1xf32>
    %357 = vector.broadcast %356 : vector<8x1xf32> to vector<8x32xf32>
    %358 = arith.subf %352, %357 : vector<8x32xf32>
    %359 = arith.mulf %358, %358 : vector<8x32xf32>
    %cst_144 = arith.constant dense<0.000000e+00> : vector<8xf32>
    %360 = vector.multi_reduction <add>, %359, %cst_144 [1] : vector<8x32xf32> to vector<8xf32>
    %361 = vector.shape_cast %360 : vector<8xf32> to vector<8x1xf32>
    %cst_145 = arith.constant 3.200000e+01 : f32
    %362 = vector.broadcast %cst_145 : f32 to vector<8x1xf32>
    %363 = arith.divf %361, %362 : vector<8x1xf32>
    %364 = vector.broadcast %356 : vector<8x1xf32> to vector<8x32xf32>
    %365 = arith.subf %352, %364 : vector<8x32xf32>
    %cst_146 = arith.constant 9.99999974E-6 : f32
    %366 = vector.broadcast %cst_146 : f32 to vector<8x1xf32>
    %367 = arith.addf %363, %366 : vector<8x1xf32>
    %368 = math.rsqrt %367 : vector<8x1xf32>
    %369 = vector.broadcast %368 : vector<8x1xf32> to vector<8x32xf32>
    %370 = arith.mulf %365, %369 : vector<8x32xf32>
    %371 = vector.broadcast %312 : vector<1x32xf32> to vector<8x32xf32>
    %372 = arith.mulf %370, %371 : vector<8x32xf32>
    %373 = vector.broadcast %313 : vector<1x32xf32> to vector<8x32xf32>
    %374 = arith.addf %372, %373 : vector<8x32xf32>
    %375 = vector.broadcast %9 : vector<8x1xf32> to vector<8x32xf32>
    %376 = arith.mulf %374, %375 : vector<8x32xf32>
    %cst_147 = arith.constant dense<0.000000e+00> : vector<32xf32>
    %377 = vector.multi_reduction <add>, %376, %cst_147 [0] : vector<8x32xf32> to vector<32xf32>
    %378 = vector.shape_cast %377 : vector<32xf32> to vector<1x32xf32>
    %cst_148 = arith.constant dense<0.000000e+00> : vector<1xf32>
    %379 = vector.multi_reduction <add>, %9, %cst_148 [0] : vector<8x1xf32> to vector<1xf32>
    %380 = vector.shape_cast %379 : vector<1xf32> to vector<1x1xf32>
    %381 = vector.broadcast %380 : vector<1x1xf32> to vector<1x32xf32>
    %382 = arith.divf %378, %381 : vector<1x32xf32>
    %383 = arith.truncf %382 : vector<1x32xf32> to vector<1x32xbf16>
    %c0_149 = arith.constant 0 : index
    %c0_150 = arith.constant 0 : index
    %384 = vector.load %arg13[%c0_149, %c0_150] : memref<32x32xbf16, #tpu.memory_space<vmem>>, vector<32x32xbf16>
    %cst_151 = arith.constant dense<0.000000e+00> : vector<1x32xf32>
    %385 = tpu.matmul %383, %384, %cst_151 {dimension_numbers = #tpu.dot_dimension_numbers<[1], [0], [0], [1], [0, 0, 1, 1], [], []>} : vector<1x32xbf16>, vector<32x32xbf16>, vector<1x32xf32> -> vector<1x32xf32>
    %c0_152 = arith.constant 0 : index
    %c0_153 = arith.constant 0 : index
    %386 = vector.load %arg14[%c0_152, %c0_153] : memref<1x32xf32, #tpu.memory_space<vmem>>, vector<1x32xf32>
    %387 = arith.addf %385, %386 : vector<1x32xf32>
    %cst_154 = arith.constant 0.000000e+00 : f32
    %388 = vector.broadcast %cst_154 : f32 to vector<1x32xf32>
    %389 = arith.maximumf %387, %388 : vector<1x32xf32>
    %390 = arith.truncf %389 : vector<1x32xf32> to vector<1x32xbf16>
    %c0_155 = arith.constant 0 : index
    %c0_156 = arith.constant 0 : index
    %391 = vector.load %arg15[%c0_155, %c0_156] : memref<32x5xbf16, #tpu.memory_space<vmem>>, vector<32x5xbf16>
    %cst_157 = arith.constant dense<0.000000e+00> : vector<1x5xf32>
    %392 = tpu.matmul %390, %391, %cst_157 {dimension_numbers = #tpu.dot_dimension_numbers<[1], [0], [0], [1], [0, 0, 1, 1], [], []>} : vector<1x32xbf16>, vector<32x5xbf16>, vector<1x5xf32> -> vector<1x5xf32>
    %c0_158 = arith.constant 0 : index
    %c0_159 = arith.constant 0 : index
    %393 = vector.load %arg16[%c0_158, %c0_159] : memref<1x5xf32, #tpu.memory_space<vmem>>, vector<1x5xf32>
    %394 = arith.addf %392, %393 : vector<1x5xf32>
    %c0_160 = arith.constant 0 : index
    %c0_161 = arith.constant 0 : index
    %c0_162 = arith.constant 0 : index
    %395 = vector.load %arg17[%c0_160, %c0_161, %c0_162] : memref<1x1x5xf32, #tpu.memory_space<vmem>>, vector<1x1x5xf32>
    %396 = vector.shape_cast %395 : vector<1x1x5xf32> to vector<1x5xf32>
    %397 = vector.shape_cast %394 : vector<1x5xf32> to vector<1x1x5xf32>
    tpu.vector_store %arg17[%c0_160, %c0_161, %c0_162], %397 {strides = array<i32>} : memref<1x1x5xf32, #tpu.memory_space<vmem>>, vector<1x1x5xf32>,
    return
  }
  func.func @transform_0(%arg0: i32) -> (i32, i32, i32) {
    %c0_i32 = arith.constant 0 : i32
    %c0_i32_0 = arith.constant 0 : i32
    %c0_i32_1 = arith.constant 0 : i32
    return %arg0, %c0_i32, %c0_i32_0 : i32, i32, i32
  }
  func.func @transform_1(%arg0: i32) -> (i32, i32, i32) {
    %c0_i32 = arith.constant 0 : i32
    %c0_i32_0 = arith.constant 0 : i32
    %c0_i32_1 = arith.constant 0 : i32
    return %arg0, %c0_i32, %c0_i32_0 : i32, i32, i32
  }
  func.func @transform_2(%arg0: i32) -> (i32, i32, i32) {
    %c0_i32 = arith.constant 0 : i32
    %c0_i32_0 = arith.constant 0 : i32
    %c0_i32_1 = arith.constant 0 : i32
    return %arg0, %c0_i32, %c0_i32_0 : i32, i32, i32
  }
  func.func @transform_3(%arg0: i32) -> (i32, i32, i32) {
    %c0_i32 = arith.constant 0 : i32
    %c0_i32_0 = arith.constant 0 : i32
    %c0_i32_1 = arith.constant 0 : i32
    return %arg0, %c0_i32, %c0_i32_0 : i32, i32, i32
  }
  func.func @transform_4(%arg0: i32) -> (i32, i32, i32) {
    %c0_i32 = arith.constant 0 : i32
    %c0_i32_0 = arith.constant 0 : i32
    %c0_i32_1 = arith.constant 0 : i32
    return %arg0, %c0_i32, %c0_i32_0 : i32, i32, i32
  }
  func.func @transform_5(%arg0: i32) -> (i32, i32) {
    %c0_i32 = arith.constant 0 : i32
    %c0_i32_0 = arith.constant 0 : i32
    %c0_i32_1 = arith.constant 0 : i32
    return %c0_i32, %c0_i32_0 : i32, i32
  }
  func.func @transform_6(%arg0: i32) -> (i32, i32, i32) {
    %c0_i32 = arith.constant 0 : i32
    %c0_i32_0 = arith.constant 0 : i32
    %c0_i32_1 = arith.constant 0 : i32
    %c0_i32_2 = arith.constant 0 : i32
    return %c0_i32, %c0_i32_0, %c0_i32_1 : i32, i32, i32
  }
  func.func @transform_7(%arg0: i32) -> (i32, i32, i32) {
    %c0_i32 = arith.constant 0 : i32
    %c0_i32_0 = arith.constant 0 : i32
    %c0_i32_1 = arith.constant 0 : i32
    %c0_i32_2 = arith.constant 0 : i32
    return %c0_i32, %c0_i32_0, %c0_i32_1 : i32, i32, i32
  }
  func.func @transform_8(%arg0: i32) -> (i32, i32, i32) {
    %c0_i32 = arith.constant 0 : i32
    %c0_i32_0 = arith.constant 0 : i32
    %c0_i32_1 = arith.constant 0 : i32
    %c0_i32_2 = arith.constant 0 : i32
    return %c0_i32, %c0_i32_0, %c0_i32_1 : i32, i32, i32
  }
  func.func @transform_9(%arg0: i32) -> (i32, i32, i32) {
    %c0_i32 = arith.constant 0 : i32
    %c0_i32_0 = arith.constant 0 : i32
    %c0_i32_1 = arith.constant 0 : i32
    %c0_i32_2 = arith.constant 0 : i32
    return %c0_i32, %c0_i32_0, %c0_i32_1 : i32, i32, i32
  }
  func.func @transform_10(%arg0: i32) -> (i32, i32, i32) {
    %c0_i32 = arith.constant 0 : i32
    %c0_i32_0 = arith.constant 0 : i32
    %c0_i32_1 = arith.constant 0 : i32
    %c0_i32_2 = arith.constant 0 : i32
    return %c0_i32, %c0_i32_0, %c0_i32_1 : i32, i32, i32
  }
  func.func @transform_11(%arg0: i32) -> (i32, i32, i32) {
    %c0_i32 = arith.constant 0 : i32
    %c0_i32_0 = arith.constant 0 : i32
    %c0_i32_1 = arith.constant 0 : i32
    %c0_i32_2 = arith.constant 0 : i32
    return %c0_i32, %c0_i32_0, %c0_i32_1 : i32, i32, i32
  }
  func.func @transform_12(%arg0: i32) -> (i32, i32) {
    %c0_i32 = arith.constant 0 : i32
    %c0_i32_0 = arith.constant 0 : i32
    %c0_i32_1 = arith.constant 0 : i32
    return %c0_i32, %c0_i32_0 : i32, i32
  }
  func.func @transform_13(%arg0: i32) -> (i32, i32) {
    %c0_i32 = arith.constant 0 : i32
    %c0_i32_0 = arith.constant 0 : i32
    %c0_i32_1 = arith.constant 0 : i32
    return %c0_i32, %c0_i32_0 : i32, i32
  }
  func.func @transform_14(%arg0: i32) -> (i32, i32) {
    %c0_i32 = arith.constant 0 : i32
    %c0_i32_0 = arith.constant 0 : i32
    %c0_i32_1 = arith.constant 0 : i32
    return %c0_i32, %c0_i32_0 : i32, i32
  }
  func.func @transform_15(%arg0: i32) -> (i32, i32) {
    %c0_i32 = arith.constant 0 : i32
    %c0_i32_0 = arith.constant 0 : i32
    %c0_i32_1 = arith.constant 0 : i32
    return %c0_i32, %c0_i32_0 : i32, i32
  }
  func.func @transform_16(%arg0: i32) -> (i32, i32, i32) {
    %c0_i32 = arith.constant 0 : i32
    %c0_i32_0 = arith.constant 0 : i32
    %c0_i32_1 = arith.constant 0 : i32
    return %arg0, %c0_i32, %c0_i32_0 : i32, i32, i32
  }
}

</mosaic_0001>

<llo_original>
// kernel: diff_graph_transformer_forward.1
$region0: #{diff_graph_transformer_forward.1}
  #allocation0 [shape = 'u32[]', space=smem, size = 0x4, offset = 0x4, fixed_abs, tag = 'smem constant byte address 0x4 - core index']
  #allocation1 [shape = 'u32[144,128]{1,0:T(1,128)}', space=vmem, size = 0x12000, scoped, tag = 'internal scratch']
  #allocation2 [shape = 'f32[8,32]{1,0:T(8,128)}', space=vmem, size = 0x1000, scoped, tag = 'scratch operand']
  %s0 = inlined_call_operand.vmem [shape: f32[2,8,16], index: 0, kind: input, shape index: {}]
  %s1 = inlined_call_operand.vmem [shape: f32[2,8,8], index: 1, kind: input, shape index: {}]
  %s2 = inlined_call_operand.vmem [shape: f32[2,1,8], index: 2, kind: input, shape index: {}]
  %s3 = inlined_call_operand.vmem [shape: f32[2,8,1], index: 3, kind: input, shape index: {}]
  %s4 = inlined_call_operand.vmem [shape: f32[2,8,1], index: 4, kind: input, shape index: {}]
  %s5 = inlined_call_operand.vmem [shape: bf16[16,32], index: 5, kind: input, shape index: {}]
  %s6 = inlined_call_operand.vmem [shape: bf16[2,32,64], index: 6, kind: input, shape index: {}]
  %s7 = inlined_call_operand.vmem [shape: bf16[2,32,32], index: 7, kind: input, shape index: {}]
  %s8 = inlined_call_operand.vmem [shape: bf16[2,32,64], index: 8, kind: input, shape index: {}]
  %s9 = inlined_call_operand.vmem [shape: f32[2,1,64], index: 9, kind: input, shape index: {}]
  %s10 = inlined_call_operand.vmem [shape: bf16[2,64,32], index: 10, kind: input, shape index: {}]
  %s11 = inlined_call_operand.vmem [shape: f32[2,5,32], index: 11, kind: input, shape index: {}]
  %s12 = inlined_call_operand.vmem [shape: bf16[32,32], index: 12, kind: input, shape index: {}]
  %s13 = inlined_call_operand.vmem [shape: f32[1,32], index: 13, kind: input, shape index: {}]
  %s14 = inlined_call_operand.vmem [shape: bf16[32,5], index: 14, kind: input, shape index: {}]
  %s15 = inlined_call_operand.vmem [shape: f32[1,5], index: 15, kind: input, shape index: {}]
  %s16 = inlined_call_operand.hbm [shape: f32[2,1,5], index: 16, kind: output, shape index: {}]
  %s17 = sld [smem:[#allocation0]]
  $region97: #{diff_graph_transformer_forward.1} parent=0
    _
  %s19 = ssub.s32 1, %s17
  %s20 = scalar_select 0, %s19, %s17
  $region1: #{diff_graph_transformer_forward.1} parent=0
    #allocation3 [shape = 'u8[1024]{0}', space=vmem, size = 0x400, scoped, tag = 'output window, operand 0']
    #allocation4 [shape = 's32[2]{0}', space=sflag, size = 0x8, scoped, tag = 'scoped memory for diff_graph_transformer_forward.1']
    %21 = vsyncpa [#allocation4], 0
    %s22 = scalar_lea.sflag [#allocation4], 1
    %23 = vsyncpa %s22, 0
    loop: start=0, step=1, limit=4
    $region2: #{diff_graph_transformer_forward.1} parent=1 // loop_pre_header
      _
    $region3: #{diff_graph_transformer_forward.1} parent=1 // loop_header
      %s25 = sphi 0, %s29
      %p26 = scmp.ge.s32.totalorder %s25, 4
      %s35 = sphi 0, %s37
      %s38 = sphi 0, %s35
      %s39 = sphi 0, %s38
      %s55 = sphi 0, %s39
      %s61 = sphi 0, %s63
      %s64 = sphi 0, %s61
      %s65 = sphi 0, %s64
      %s81 = sphi 0, %s65
      %s87 = sphi 0, %s89
      %s90 = sphi 0, %s87
      %s91 = sphi 0, %s90
      %s107 = sphi 0, %s91
      %s113 = sphi 0, %s115
      %s116 = sphi 0, %s113
      %s117 = sphi 0, %s116
      %s133 = sphi 0, %s117
      %s139 = sphi 0, %s141
      %s142 = sphi 0, %s139
      %s143 = sphi 0, %s142
      %s159 = sphi 0, %s143
      %s163 = sphi 0, %s163
      %s165 = sphi 0, %s163
      %s166 = sphi 0, %s165
      %s180 = sphi 0, %s166
      %s184 = sphi 0, %s184
      %s186 = sphi 0, %s184
      %s187 = sphi 0, %s186
      %s201 = sphi 0, %s187
      %s205 = sphi 0, %s205
      %s207 = sphi 0, %s205
      %s208 = sphi 0, %s207
      %s222 = sphi 0, %s208
      %s226 = sphi 0, %s226
      %s228 = sphi 0, %s226
      %s229 = sphi 0, %s228
      %s243 = sphi 0, %s229
      %s247 = sphi 0, %s247
      %s249 = sphi 0, %s247
      %s250 = sphi 0, %s249
      %s264 = sphi 0, %s250
      %s268 = sphi 0, %s268
      %s270 = sphi 0, %s268
      %s271 = sphi 0, %s270
      %s285 = sphi 0, %s271
      %s289 = sphi 0, %s289
      %s291 = sphi 0, %s289
      %s292 = sphi 0, %s291
      %s306 = sphi 0, %s292
      %s310 = sphi 0, %s310
      %s312 = sphi 0, %s310
      %s313 = sphi 0, %s312
      %s327 = sphi 0, %s313
      %s331 = sphi 0, %s331
      %s333 = sphi 0, %s331
      %s334 = sphi 0, %s333
      %s348 = sphi 0, %s334
      %s352 = sphi 0, %s352
      %s354 = sphi 0, %s352
      %s355 = sphi 0, %s354
      %s369 = sphi 0, %s355
      %s373 = sphi 0, %s373
      %s375 = sphi 0, %s373
      %s376 = sphi 0, %s375
      %s390 = sphi 0, %s376
      %s396 = sphi 0, %s398
      %s399 = sphi 0, %s396
      %s400 = sphi 0, %s399
      %s416 = sphi 0, %s400
    $region4: #{diff_graph_transformer_forward.1} parent=1 // loop_header_branch
      %28 = sbr.rel (%p26) target = $region8
    $region5: #{diff_graph_transformer_forward.1} parent=1 // loop_body
      %s30 = ssub.s32 %s25, 1
      %s31 = ssub.s32 %s25, 2
      %s32 = sadd.s32 %s25, 1
      %s33 = ssub.s32 %s25, %s32
      %p34 = scmp.eq.s32.totalorder %s33, 0
      %s36 = sadd.s32 %s35, 1
      %s37 = scalar_select %p34, %s35, %s36
      %p40 = pneg %p34
      %p41 = scmp.eq.s32.totalorder %s25, 1
      %p42 = por %p40, %p41
      %p43 = scmp.ne.s32.totalorder %s35, %s38
      %p44 = scmp.eq.s32.totalorder %s25, 0
      %p45 = por %p43, %p44
      %p46 = scmp.ne.s32.totalorder %s35, %s38
      %p47 = scmp.eq.s32.totalorder %s30, 1
      %p48 = por %p46, %p47
      %p49 = scmp.ne.s32.totalorder %s38, %s39
      %p50 = scmp.eq.s32.totalorder %s30, 0
      %p51 = por %p49, %p50
      %p52 = scmp.ne.s32.totalorder %s38, %s39
      %p53 = scmp.eq.s32.totalorder %s31, 1
      %p54 = por %p52, %p53
      %p56 = scmp.ne.s32.totalorder %s39, %s55
      %p57 = scmp.eq.s32.totalorder %s31, 0
      %p58 = por %p56, %p57
      %s59 = ssub.s32 %s25, %s32
      %p60 = scmp.eq.s32.totalorder %s59, 0
      %s62 = sadd.s32 %s61, 1
      %s63 = scalar_select %p60, %s61, %s62
      %p66 = pneg %p60
      %p67 = scmp.eq.s32.totalorder %s25, 1
      %p68 = por %p66, %p67
      %p69 = scmp.ne.s32.totalorder %s61, %s64
      %p70 = scmp.eq.s32.totalorder %s25, 0
      %p71 = por %p69, %p70
      %p72 = scmp.ne.s32.totalorder %s61, %s64
      %p73 = scmp.eq.s32.totalorder %s30, 1
      %p74 = por %p72, %p73
      %p75 = scmp.ne.s32.totalorder %s64, %s65
      %p76 = scmp.eq.s32.totalorder %s30, 0
      %p77 = por %p75, %p76
      %p78 = scmp.ne.s32.totalorder %s64, %s65
      %p79 = scmp.eq.s32.totalorder %s31, 1
      %p80 = por %p78, %p79
      %p82 = scmp.ne.s32.totalorder %s65, %s81
      %p83 = scmp.eq.s32.totalorder %s31, 0
      %p84 = por %p82, %p83
      %s85 = ssub.s32 %s25, %s32
      %p86 = scmp.eq.s32.totalorder %s85, 0
      %s88 = sadd.s32 %s87, 1
      %s89 = scalar_select %p86, %s87, %s88
      %p92 = pneg %p86
      %p93 = scmp.eq.s32.totalorder %s25, 1
      %p94 = por %p92, %p93
      %p95 = scmp.ne.s32.totalorder %s87, %s90
      %p96 = scmp.eq.s32.totalorder %s25, 0
      %p97 = por %p95, %p96
      %p98 = scmp.ne.s32.totalorder %s87, %s90
      %p99 = scmp.eq.s32.totalorder %s30, 1
      %p100 = por %p98, %p99
      %p101 = scmp.ne.s32.totalorder %s90, %s91
      %p102 = scmp.eq.s32.totalorder %s30, 0
      %p103 = por %p101, %p102
      %p104 = scmp.ne.s32.totalorder %s90, %s91
      %p105 = scmp.eq.s32.totalorder %s31, 1
      %p106 = por %p104, %p105
      %p108 = scmp.ne.s32.totalorder %s91, %s107
      %p109 = scmp.eq.s32.totalorder %s31, 0
      %p110 = por %p108, %p109
      %s111 = ssub.s32 %s25, %s32
      %p112 = scmp.eq.s32.totalorder %s111, 0
      %s114 = sadd.s32 %s113, 1
      %s115 = scalar_select %p112, %s113, %s114
      %p118 = pneg %p112
      %p119 = scmp.eq.s32.totalorder %s25, 1
      %p120 = por %p118, %p119
      %p121 = scmp.ne.s32.totalorder %s113, %s116
      %p122 = scmp.eq.s32.totalorder %s25, 0
      %p123 = por %p121, %p122
      %p124 = scmp.ne.s32.totalorder %s113, %s116
      %p125 = scmp.eq.s32.totalorder %s30, 1
      %p126 = por %p124, %p125
      %p127 = scmp.ne.s32.totalorder %s116, %s117
      %p128 = scmp.eq.s32.totalorder %s30, 0
      %p129 = por %p127, %p128
      %p130 = scmp.ne.s32.totalorder %s116, %s117
      %p131 = scmp.eq.s32.totalorder %s31, 1
      %p132 = por %p130, %p131
      %p134 = scmp.ne.s32.totalorder %s117, %s133
      %p135 = scmp.eq.s32.totalorder %s31, 0
      %p136 = por %p134, %p135
      %s137 = ssub.s32 %s25, %s32
      %p138 = scmp.eq.s32.totalorder %s137, 0
      %s140 = sadd.s32 %s139, 1
      %s141 = scalar_select %p138, %s139, %s140
      %p144 = pneg %p138
      %p145 = scmp.eq.s32.totalorder %s25, 1
      %p146 = por %p144, %p145
      %p147 = scmp.ne.s32.totalorder %s139, %s142
      %p148 = scmp.eq.s32.totalorder %s25, 0
      %p149 = por %p147, %p148
      %p150 = scmp.ne.s32.totalorder %s139, %s142
      %p151 = scmp.eq.s32.totalorder %s30, 1
      %p152 = por %p150, %p151
      %p153 = scmp.ne.s32.totalorder %s142, %s143
      %p154 = scmp.eq.s32.totalorder %s30, 0
      %p155 = por %p153, %p154
      %p156 = scmp.ne.s32.totalorder %s142, %s143
      %p157 = scmp.eq.s32.totalorder %s31, 1
      %p158 = por %p156, %p157
      %p160 = scmp.ne.s32.totalorder %s143, %s159
      %p161 = scmp.eq.s32.totalorder %s31, 0
      %p162 = por %p160, %p161
      %s164 = sadd.s32 %s163, 1
      %p167 = scmp.eq.s32.totalorder %s25, 1
      %p168 = scmp.ne.s32.totalorder %s163, %s165
      %p169 = scmp.eq.s32.totalorder %s25, 0
      %p170 = por %p168, %p169
      %p171 = scmp.ne.s32.totalorder %s163, %s165
      %p172 = scmp.eq.s32.totalorder %s30, 1
      %p173 = por %p171, %p172
      %p174 = scmp.ne.s32.totalorder %s165, %s166
      %p175 = scmp.eq.s32.totalorder %s30, 0
      %p176 = por %p174, %p175
      %p177 = scmp.ne.s32.totalorder %s165, %s166
      %p178 = scmp.eq.s32.totalorder %s31, 1
      %p179 = por %p177, %p178
      %p181 = scmp.ne.s32.totalorder %s166, %s180
      %p182 = scmp.eq.s32.totalorder %s31, 0
      %p183 = por %p181, %p182
      %s185 = sadd.s32 %s184, 1
      %p188 = scmp.eq.s32.totalorder %s25, 1
      %p189 = scmp.ne.s32.totalorder %s184, %s186
      %p190 = scmp.eq.s32.totalorder %s25, 0
      %p191 = por %p189, %p190
      %p192 = scmp.ne.s32.totalorder %s184, %s186
      %p193 = scmp.eq.s32.totalorder %s30, 1
      %p194 = por %p192, %p193
      %p195 = scmp.ne.s32.totalorder %s186, %s187
      %p196 = scmp.eq.s32.totalorder %s30, 0
      %p197 = por %p195, %p196
      %p198 = scmp.ne.s32.totalorder %s186, %s187
      %p199 = scmp.eq.s32.totalorder %s31, 1
      %p200 = por %p198, %p199
      %p202 = scmp.ne.s32.totalorder %s187, %s201
      %p203 = scmp.eq.s32.totalorder %s31, 0
      %p204 = por %p202, %p203
      %s206 = sadd.s32 %s205, 1
      %p209 = scmp.eq.s32.totalorder %s25, 1
      %p210 = scmp.ne.s32.totalorder %s205, %s207
      %p211 = scmp.eq.s32.totalorder %s25, 0
      %p212 = por %p210, %p211
      %p213 = scmp.ne.s32.totalorder %s205, %s207
      %p214 = scmp.eq.s32.totalorder %s30, 1
      %p215 = por %p213, %p214
      %p216 = scmp.ne.s32.totalorder %s207, %s208
      %p217 = scmp.eq.s32.totalorder %s30, 0
      %p218 = por %p216, %p217
      %p219 = scmp.ne.s32.totalorder %s207, %s208
      %p220 = scmp.eq.s32.totalorder %s31, 1
      %p221 = por %p219, %p220
      %p223 = scmp.ne.s32.totalorder %s208, %s222
      %p224 = scmp.eq.s32.totalorder %s31, 0
      %p225 = por %p223, %p224
      %s227 = sadd.s32 %s226, 1
      %p230 = scmp.eq.s32.totalorder %s25, 1
      %p231 = scmp.ne.s32.totalorder %s226, %s228
      %p232 = scmp.eq.s32.totalorder %s25, 0
      %p233 = por %p231, %p232
      %p234 = scmp.ne.s32.totalorder %s226, %s228
      %p235 = scmp.eq.s32.totalorder %s30, 1
      %p236 = por %p234, %p235
      %p237 = scmp.ne.s32.totalorder %s228, %s229
      %p238 = scmp.eq.s32.totalorder %s30, 0
      %p239 = por %p237, %p238
      %p240 = scmp.ne.s32.totalorder %s228, %s229
      %p241 = scmp.eq.s32.totalorder %s31, 1
      %p242 = por %p240, %p241
      %p244 = scmp.ne.s32.totalorder %s229, %s243
      %p245 = scmp.eq.s32.totalorder %s31, 0
      %p246 = por %p244, %p245
      %s248 = sadd.s32 %s247, 1
      %p251 = scmp.eq.s32.totalorder %s25, 1
      %p252 = scmp.ne.s32.totalorder %s247, %s249
      %p253 = scmp.eq.s32.totalorder %s25, 0
      %p254 = por %p252, %p253
      %p255 = scmp.ne.s32.totalorder %s247, %s249
      %p256 = scmp.eq.s32.totalorder %s30, 1
      %p257 = por %p255, %p256
      %p258 = scmp.ne.s32.totalorder %s249, %s250
      %p259 = scmp.eq.s32.totalorder %s30, 0
      %p260 = por %p258, %p259
      %p261 = scmp.ne.s32.totalorder %s249, %s250
      %p262 = scmp.eq.s32.totalorder %s31, 1
      %p263 = por %p261, %p262
      %p265 = scmp.ne.s32.totalorder %s250, %s264
      %p266 = scmp.eq.s32.totalorder %s31, 0
      %p267 = por %p265, %p266
      %s269 = sadd.s32 %s268, 1
      %p272 = scmp.eq.s32.totalorder %s25, 1
      %p273 = scmp.ne.s32.totalorder %s268, %s270
      %p274 = scmp.eq.s32.totalorder %s25, 0
      %p275 = por %p273, %p274
      %p276 = scmp.ne.s32.totalorder %s268, %s270
      %p277 = scmp.eq.s32.totalorder %s30, 1
      %p278 = por %p276, %p277
      %p279 = scmp.ne.s32.totalorder %s270, %s271
      %p280 = scmp.eq.s32.totalorder %s30, 0
      %p281 = por %p279, %p280
      %p282 = scmp.ne.s32.totalorder %s270, %s271
      %p283 = scmp.eq.s32.totalorder %s31, 1
      %p284 = por %p282, %p283
      %p286 = scmp.ne.s32.totalorder %s271, %s285
      %p287 = scmp.eq.s32.totalorder %s31, 0
      %p288 = por %p286, %p287
      %s290 = sadd.s32 %s289, 1
      %p293 = scmp.eq.s32.totalorder %s25, 1
      %p294 = scmp.ne.s32.totalorder %s289, %s291
      %p295 = scmp.eq.s32.totalorder %s25, 0
      %p296 = por %p294, %p295
      %p297 = scmp.ne.s32.totalorder %s289, %s291
      %p298 = scmp.eq.s32.totalorder %s30, 1
      %p299 = por %p297, %p298
      %p300 = scmp.ne.s32.totalorder %s291, %s292
      %p301 = scmp.eq.s32.totalorder %s30, 0
      %p302 = por %p300, %p301
      %p303 = scmp.ne.s32.totalorder %s291, %s292
      %p304 = scmp.eq.s32.totalorder %s31, 1
      %p305 = por %p303, %p304
      %p307 = scmp.ne.s32.totalorder %s292, %s306
      %p308 = scmp.eq.s32.totalorder %s31, 0
      %p309 = por %p307, %p308
      %s311 = sadd.s32 %s310, 1
      %p314 = scmp.eq.s32.totalorder %s25, 1
      %p315 = scmp.ne.s32.totalorder %s310, %s312
      %p316 = scmp.eq.s32.totalorder %s25, 0
      %p317 = por %p315, %p316
      %p318 = scmp.ne.s32.totalorder %s310, %s312
      %p319 = scmp.eq.s32.totalorder %s30, 1
      %p320 = por %p318, %p319
      %p321 = scmp.ne.s32.totalorder %s312, %s313
      %p322 = scmp.eq.s32.totalorder %s30, 0
      %p323 = por %p321, %p322
      %p324 = scmp.ne.s32.totalorder %s312, %s313
      %p325 = scmp.eq.s32.totalorder %s31, 1
      %p326 = por %p324, %p325
      %p328 = scmp.ne.s32.totalorder %s313, %s327
      %p329 = scmp.eq.s32.totalorder %s31, 0
      %p330 = por %p328, %p329
      %s332 = sadd.s32 %s331, 1
      %p335 = scmp.eq.s32.totalorder %s25, 1
      %p336 = scmp.ne.s32.totalorder %s331, %s333
      %p337 = scmp.eq.s32.totalorder %s25, 0
      %p338 = por %p336, %p337
      %p339 = scmp.ne.s32.totalorder %s331, %s333
      %p340 = scmp.eq.s32.totalorder %s30, 1
      %p341 = por %p339, %p340
      %p342 = scmp.ne.s32.totalorder %s333, %s334
      %p343 = scmp.eq.s32.totalorder %s30, 0
      %p344 = por %p342, %p343
      %p345 = scmp.ne.s32.totalorder %s333, %s334
      %p346 = scmp.eq.s32.totalorder %s31, 1
      %p347 = por %p345, %p346
      %p349 = scmp.ne.s32.totalorder %s334, %s348
      %p350 = scmp.eq.s32.totalorder %s31, 0
      %p351 = por %p349, %p350
      %s353 = sadd.s32 %s352, 1
      %p356 = scmp.eq.s32.totalorder %s25, 1
      %p357 = scmp.ne.s32.totalorder %s352, %s354
      %p358 = scmp.eq.s32.totalorder %s25, 0
      %p359 = por %p357, %p358
      %p360 = scmp.ne.s32.totalorder %s352, %s354
      %p361 = scmp.eq.s32.totalorder %s30, 1
      %p362 = por %p360, %p361
      %p363 = scmp.ne.s32.totalorder %s354, %s355
      %p364 = scmp.eq.s32.totalorder %s30, 0
      %p365 = por %p363, %p364
      %p366 = scmp.ne.s32.totalorder %s354, %s355
      %p367 = scmp.eq.s32.totalorder %s31, 1
      %p368 = por %p366, %p367
      %p370 = scmp.ne.s32.totalorder %s355, %s369
      %p371 = scmp.eq.s32.totalorder %s31, 0
      %p372 = por %p370, %p371
      %s374 = sadd.s32 %s373, 1
      %p377 = scmp.eq.s32.totalorder %s25, 1
      %p378 = scmp.ne.s32.totalorder %s373, %s375
      %p379 = scmp.eq.s32.totalorder %s25, 0
      %p380 = por %p378, %p379
      %p381 = scmp.ne.s32.totalorder %s373, %s375
      %p382 = scmp.eq.s32.totalorder %s30, 1
      %p383 = por %p381, %p382
      %p384 = scmp.ne.s32.totalorder %s375, %s376
      %p385 = scmp.eq.s32.totalorder %s30, 0
      %p386 = por %p384, %p385
      %p387 = scmp.ne.s32.totalorder %s375, %s376
      %p388 = scmp.eq.s32.totalorder %s31, 1
      %p389 = por %p387, %p388
      %p391 = scmp.ne.s32.totalorder %s376, %s390
      %p392 = scmp.eq.s32.totalorder %s31, 0
      %p393 = por %p391, %p392
      %s394 = ssub.s32 %s25, %s32
      %p395 = scmp.eq.s32.totalorder %s394, 0
      %s397 = sadd.s32 %s396, 1
      %s398 = scalar_select %p395, %s396, %s397
      %p401 = pneg %p395
      %p402 = scmp.eq.s32.totalorder %s25, 1
      %p403 = por %p401, %p402
      %p404 = scmp.ne.s32.totalorder %s396, %s399
      %p405 = scmp.eq.s32.totalorder %s25, 0
      %p406 = por %p404, %p405
      %p407 = scmp.ne.s32.totalorder %s396, %s399
      %p408 = scmp.eq.s32.totalorder %s30, 1
      %p409 = por %p407, %p408
      %p410 = scmp.ne.s32.totalorder %s399, %s400
      %p411 = scmp.eq.s32.totalorder %s30, 0
      %p412 = por %p410, %p411
      %p413 = scmp.ne.s32.totalorder %s399, %s400
      %p414 = scmp.eq.s32.totalorder %s31, 1
      %p415 = por %p413, %p414
      %p417 = scmp.ne.s32.totalorder %s400, %s416
      %p418 = scmp.eq.s32.totalorder %s31, 0
      %p419 = por %p417, %p418
      %p420 = scmp.le.s32.totalorder 1, %s25
      %p421 = scmp.lt.s32.totalorder %s25, 3
      %p422 = pnand %p420, %p421
      %p423 = pneg %p422
      // Predicated region
      $region9: #{diff_graph_transformer_forward.1} parent=5 // pred_check
        _
      $region10: #{diff_graph_transformer_forward.1} parent=5 // pred_check_branch
        %425 = sbr.rel (%p422) target = $region12
      $region11: #{diff_graph_transformer_forward.1} parent=5 // pred_region
        %s426 = ssub.s32 %s25, 1
        // Predicated region
        $region13: #{diff_graph_transformer_forward.1} parent=11 // pred_check
          %p427 = pneg %p176
        $region14: #{diff_graph_transformer_forward.1} parent=11 // pred_check_branch
          %429 = sbr.rel (%p427) target = $region16
        $region15: #{diff_graph_transformer_forward.1} parent=11 // pred_region
          _
        $region16: #{diff_graph_transformer_forward.1} parent=11 // pred_fallthru
          _
        // Predicated region
        $region17: #{diff_graph_transformer_forward.1} parent=11 // pred_check
          %p430 = pneg %p197
        $region18: #{diff_graph_transformer_forward.1} parent=11 // pred_check_branch
          %432 = sbr.rel (%p430) target = $region20
        $region19: #{diff_graph_transformer_forward.1} parent=11 // pred_region
          _
        $region20: #{diff_graph_transformer_forward.1} parent=11 // pred_fallthru
          _
        // Predicated region
        $region21: #{diff_graph_transformer_forward.1} parent=11 // pred_check
          %p433 = pneg %p218
        $region22: #{diff_graph_transformer_forward.1} parent=11 // pred_check_branch
          %435 = sbr.rel (%p433) target = $region24
        $region23: #{diff_graph_transformer_forward.1} parent=11 // pred_region
          _
        $region24: #{diff_graph_transformer_forward.1} parent=11 // pred_fallthru
          _
        // Predicated region
        $region25: #{diff_graph_transformer_forward.1} parent=11 // pred_check
          %p436 = pneg %p239
        $region26: #{diff_graph_transformer_forward.1} parent=11 // pred_check_branch
          %438 = sbr.rel (%p436) target = $region28
        $region27: #{diff_graph_transformer_forward.1} parent=11 // pred_region
          _
        $region28: #{diff_graph_transformer_forward.1} parent=11 // pred_fallthru
          _
        // Predicated region
        $region29: #{diff_graph_transformer_forward.1} parent=11 // pred_check
          %p439 = pneg %p260
        $region30: #{diff_graph_transformer_forward.1} parent=11 // pred_check_branch
          %441 = sbr.rel (%p439) target = $region32
        $region31: #{diff_graph_transformer_forward.1} parent=11 // pred_region
          _
        $region32: #{diff_graph_transformer_forward.1} parent=11 // pred_fallthru
          _
        // Predicated region
        $region33: #{diff_graph_transformer_forward.1} parent=11 // pred_check
          %p442 = pneg %p281
        $region34: #{diff_graph_transformer_forward.1} parent=11 // pred_check_branch
          %444 = sbr.rel (%p442) target = $region36
        $region35: #{diff_graph_transformer_forward.1} parent=11 // pred_region
          _
        $region36: #{diff_graph_transformer_forward.1} parent=11 // pred_fallthru
          _
        // Predicated region
        $region37: #{diff_graph_transformer_forward.1} parent=11 // pred_check
          %p445 = pneg %p302
        $region38: #{diff_graph_transformer_forward.1} parent=11 // pred_check_branch
          %447 = sbr.rel (%p445) target = $region40
        $region39: #{diff_graph_transformer_forward.1} parent=11 // pred_region
          _
        $region40: #{diff_graph_transformer_forward.1} parent=11 // pred_fallthru
          _
        // Predicated region
        $region41: #{diff_graph_transformer_forward.1} parent=11 // pred_check
          %p448 = pneg %p323
        $region42: #{diff_graph_transformer_forward.1} parent=11 // pred_check_branch
          %450 = sbr.rel (%p448) target = $region44
        $region43: #{diff_graph_transformer_forward.1} parent=11 // pred_region
          _
        $region44: #{diff_graph_transformer_forward.1} parent=11 // pred_fallthru
          _
        // Predicated region
        $region45: #{diff_graph_transformer_forward.1} parent=11 // pred_check
          %p451 = pneg %p344
        $region46: #{diff_graph_transformer_forward.1} parent=11 // pred_check_branch
          %453 = sbr.rel (%p451) target = $region48
        $region47: #{diff_graph_transformer_forward.1} parent=11 // pred_region
          _
        $region48: #{diff_graph_transformer_forward.1} parent=11 // pred_fallthru
          _
        // Predicated region
        $region49: #{diff_graph_transformer_forward.1} parent=11 // pred_check
          %p454 = pneg %p365
        $region50: #{diff_graph_transformer_forward.1} parent=11 // pred_check_branch
          %456 = sbr.rel (%p454) target = $region52
        $region51: #{diff_graph_transformer_forward.1} parent=11 // pred_region
          _
        $region52: #{diff_graph_transformer_forward.1} parent=11 // pred_fallthru
          _
        // Predicated region
        $region53: #{diff_graph_transformer_forward.1} parent=11 // pred_check
          %p457 = pneg %p386
        $region54: #{diff_graph_transformer_forward.1} parent=11 // pred_check_branch
          %459 = sbr.rel (%p457) target = $region56
        $region55: #{diff_graph_transformer_forward.1} parent=11 // pred_region
          _
        $region56: #{diff_graph_transformer_forward.1} parent=11 // pred_fallthru
          _
      $region12: #{diff_graph_transformer_forward.1} parent=5 // pred_fallthru
        _
      %p460 = scmp.lt.s32.totalorder %s25, 2
      // Predicated region
      $region57: #{diff_graph_transformer_forward.1} parent=5 // pred_check
        %p461 = pneg %p460
      $region58: #{diff_graph_transformer_forward.1} parent=5 // pred_check_branch
        %463 = sbr.rel (%p461) target = $region60
      $region59: #{diff_graph_transformer_forward.1} parent=5 // pred_region
        // Predicated region
        $region61: #{diff_graph_transformer_forward.1} parent=59 // pred_check
          %p464 = pneg %p45
        $region62: #{diff_graph_transformer_forward.1} parent=59 // pred_check_branch
          %466 = sbr.rel (%p464) target = $region64
        $region63: #{diff_graph_transformer_forward.1} parent=59 // pred_region
          %p467 = scmp.lt.s32.totalorder %s25, 1
          %s468 = scalar_select %p467, %s25, 1
          %s469 = smul.addr %s468, 8
          %s470 = scalar_lea.vmem %s0, %s469
        $region64: #{diff_graph_transformer_forward.1} parent=59 // pred_fallthru
          _
        // Predicated region
        $region65: #{diff_graph_transformer_forward.1} parent=59 // pred_check
          %p471 = pneg %p71
        $region66: #{diff_graph_transformer_forward.1} parent=59 // pred_check_branch
          %473 = sbr.rel (%p471) target = $region68
        $region67: #{diff_graph_transformer_forward.1} parent=59 // pred_region
          %p474 = scmp.lt.s32.totalorder %s25, 1
          %s475 = scalar_select %p474, %s25, 1
          %s476 = smul.addr %s475, 8
          %s477 = scalar_lea.vmem %s1, %s476
        $region68: #{diff_graph_transformer_forward.1} parent=59 // pred_fallthru
          _
        // Predicated region
        $region69: #{diff_graph_transformer_forward.1} parent=59 // pred_check
          %p478 = pneg %p97
        $region70: #{diff_graph_transformer_forward.1} parent=59 // pred_check_branch
          %480 = sbr.rel (%p478) target = $region72
        $region71: #{diff_graph_transformer_forward.1} parent=59 // pred_region
          %p481 = scmp.lt.s32.totalorder %s25, 1
          %s482 = scalar_select %p481, %s25, 1
          %s483 = scalar_lea.vmem %s2, %s482
        $region72: #{diff_graph_transformer_forward.1} parent=59 // pred_fallthru
          _
        // Predicated region
        $region73: #{diff_graph_transformer_forward.1} parent=59 // pred_check
          %p484 = pneg %p123
        $region74: #{diff_graph_transformer_forward.1} parent=59 // pred_check_branch
          %486 = sbr.rel (%p484) target = $region76
        $region75: #{diff_graph_transformer_forward.1} parent=59 // pred_region
          %p487 = scmp.lt.s32.totalorder %s25, 1
          %s488 = scalar_select %p487, %s25, 1
          %s489 = smul.addr %s488, 8
          %s490 = scalar_lea.vmem %s3, %s489
        $region76: #{diff_graph_transformer_forward.1} parent=59 // pred_fallthru
          _
        // Predicated region
        $region77: #{diff_graph_transformer_forward.1} parent=59 // pred_check
          %p491 = pneg %p149
        $region78: #{diff_graph_transformer_forward.1} parent=59 // pred_check_branch
          %493 = sbr.rel (%p491) target = $region80
        $region79: #{diff_graph_transformer_forward.1} parent=59 // pred_region
          %p494 = scmp.lt.s32.totalorder %s25, 1
          %s495 = scalar_select %p494, %s25, 1
          %s496 = smul.addr %s495, 8
          %s497 = scalar_lea.vmem %s4, %s496
        $region80: #{diff_graph_transformer_forward.1} parent=59 // pred_fallthru
          _
      $region60: #{diff_graph_transformer_forward.1} parent=5 // pred_fallthru
        _
      %p498 = scmp.le.s32.totalorder 1, %s25
      %p499 = scmp.lt.s32.totalorder %s25, 3
      %p500 = pnand %p498, %p499
      %p501 = pneg %p500
      // Predicated region
      $region81: #{diff_graph_transformer_forward.1} parent=5 // pred_check
        _
      $region82: #{diff_graph_transformer_forward.1} parent=5 // pred_check_branch
        %503 = sbr.rel (%p500) target = $region84
      $region83: #{diff_graph_transformer_forward.1} parent=5 // pred_region
        %s504 = ssub.s32 %s25, 1
        %p505 = scmp.lt.s32.totalorder %s30, 1
        %s506 = scalar_select %p505, %s30, 1
        %s507 = smul.addr %s506, 8
        %s508 = scalar_lea.vmem %s0, %s507
        %p509 = pneg %p51
        %p510 = pneg %p48
        %p511 = scmp.lt.s32.totalorder %s30, 1
        %s512 = scalar_select %p511, %s30, 1
        %s513 = smul.addr %s512, 8
        %s514 = scalar_lea.vmem %s1, %s513
        %p515 = pneg %p77
        %p516 = pneg %p74
        %p517 = scmp.lt.s32.totalorder %s30, 1
        %s518 = scalar_select %p517, %s30, 1
        %s519 = scalar_lea.vmem %s2, %s518
        %p520 = pneg %p103
        %p521 = pneg %p100
        %p522 = scmp.lt.s32.totalorder %s30, 1
        %s523 = scalar_select %p522, %s30, 1
        %s524 = smul.addr %s523, 8
        %s525 = scalar_lea.vmem %s3, %s524
        %p526 = pneg %p129
        %p527 = pneg %p126
        %p528 = scmp.lt.s32.totalorder %s30, 1
        %s529 = scalar_select %p528, %s30, 1
        %s530 = smul.addr %s529, 8
        %s531 = scalar_lea.vmem %s4, %s530
        %p532 = pneg %p155
        %p533 = pneg %p152
        %p534 = pneg %p176
        %p535 = pneg %p173
        %p536 = pneg %p197
        %p537 = pneg %p194
        %p538 = pneg %p218
        %p539 = pneg %p215
        %p540 = pneg %p239
        %p541 = pneg %p236
        %p542 = pneg %p260
        %p543 = pneg %p257
        %p544 = pneg %p281
        %p545 = pneg %p278
        %p546 = pneg %p302
        %p547 = pneg %p299
        %p548 = pneg %p323
        %p549 = pneg %p320
        %p550 = pneg %p344
        %p551 = pneg %p341
        %p552 = pneg %p365
        %p553 = pneg %p362
        %p554 = pneg %p386
        %p555 = pneg %p383
        %p556 = pneg %p412
        %p557 = pneg %p409
        %s558 = sand.u32 %s399, 1
        %s559 = scalar_lea.sflag [#allocation4], %s558
        %s560 = sand.u32 %s399, 1
        %s561 = scalar_lea.vmem [#allocation3], %s560
        %p562 = scmp.lt.s32.totalorder %s30, 1
        %s563 = scalar_select %p562, %s30, 1
        %s564 = smul.addr %s563, 8
        %s565 = scalar_lea.vmem %s0, %s564
        %p566 = scmp.lt.s32.totalorder %s30, 1
        %s567 = scalar_select %p566, %s30, 1
        %s568 = smul.addr %s567, 8
        %s569 = scalar_lea.vmem %s1, %s568
        %p570 = scmp.lt.s32.totalorder %s30, 1
        %s571 = scalar_select %p570, %s30, 1
        %s572 = scalar_lea.vmem %s2, %s571
        %p573 = scmp.lt.s32.totalorder %s30, 1
        %s574 = scalar_select %p573, %s30, 1
        %s575 = smul.addr %s574, 8
        %s576 = scalar_lea.vmem %s3, %s575
        %p577 = scmp.lt.s32.totalorder %s30, 1
        %s578 = scalar_select %p577, %s30, 1
        %s579 = smul.addr %s578, 8
        %s580 = scalar_lea.vmem %s4, %s579
        %v582 = vld [vmem:[%s565] sm:$0xff]
        %v583 = vld [vmem:[%s569] sm:$0xff]
        %v584 = vld [vmem:[%s572] sm:$0x1]
        %vm585 = vcmp.gt.f32.partialorder %v584, 0.5
        %v586 = vld [vmem:[%s576] sm:$0xff]
        %v587 = vld [vmem:[%s580] sm:$0xff]
        %v588 = vpack.c.bf16 %v582, %v582
        %v589 = vld [vmem:[%s5] sm:$0xf]
        %v590 = vld [vmem:[%s5 + $0x4] sm:$0xf]
        %v593 = vunpack.c.l.b16 %v589
        %v594 = vunpack.c.l.b16 %v590
        %v595 = vpack.c.b16 %v594, %v593
        %vm597 = vcmask 130048
        %v599 = vsel %vm597, %v588, 0
        %601 = vmatprep.subr.bf16.mxu0 0
        %602 = vmatpush1.bf16.msra.mxu0 %v595
        %603 = vmatprep.subr.bf16.mxu0 0
        %604 = vmatpush1.bf16.msra.mxu0 0
        %605 = vmatprep.subr.bf16.mxu0 0
        %606 = vmatpush1.bf16.msra.mxu0 0
        %607 = vmatprep.subr.bf16.mxu0 0
        %608 = vmatpush1.bf16.msra.mxu0 0
        %609 = vmatprep.subr.bf16.mxu0 0
        %610 = vmatpush1.bf16.msra.mxu0 0
        %611 = vmatprep.subr.bf16.mxu0 0
        %612 = vmatpush1.bf16.msra.mxu0 0
        %613 = vmatprep.subr.bf16.mxu0 0
        %614 = vmatpush1.bf16.msra.mxu0 0
        %615 = vmatprep.subr.bf16.mxu0 0
        %616 = vmatpush1.bf16.msra.mxu0 0
        %617 = vmatprep.subr.bf16.mxu0 0
        %618 = vmatpush1.bf16.msra.mxu0 0
        %619 = vmatprep.subr.bf16.mxu0 0
        %620 = vmatpush1.bf16.msra.mxu0 0
        %621 = vmatprep.subr.bf16.mxu0 0
        %622 = vmatpush1.bf16.msra.mxu0 0
        %623 = vmatprep.subr.bf16.mxu0 0
        %624 = vmatpush1.bf16.msra.mxu0 0
        %625 = vmatprep.subr.bf16.mxu0 0
        %626 = vmatpush1.bf16.msra.mxu0 0
        %627 = vmatprep.subr.bf16.mxu0 0
        %628 = vmatpush1.bf16.msra.mxu0 0
        %629 = vmatprep.subr.bf16.mxu0 0
        %630 = vmatpush1.bf16.msra.mxu0 0
        %631 = vmatprep.subr.bf16.mxu0 0
        %632 = vmatpush1.bf16.msra.mxu0 0
        %633 = vmatprep.mubr.bf16.mxu0 0
        %634 = vmatmul.mubr.bf16.gmra.mrb[0].mxu0 %v599
        %v635 = vpop.f32.mrb[0].mxu0
        %v636 = vadd.f32 0.0, %v635
        %v637 = vpop.f32.mrb[0].mxu0
        %v638 = vpop.f32.mrb[0].mxu0
        %v639 = vpop.f32.mrb[0].mxu0
        %640 = vdwg.mxu0
        %v641 = vpack.c.bf16 %v636, %v636
        %v642 = vld [vmem:[%s6] sm:$0xf]
        %v643 = vld [vmem:[%s6 + $0x4] sm:$0xf]
        %v644 = vld [vmem:[%s6 + $0x8] sm:$0xf]
        %v645 = vld [vmem:[%s6 + $0xc] sm:$0xf]
        %v650 = vunpack.c.l.b16 %v642
        %v651 = vunpack.c.l.b16 %v643
        %v652 = vunpack.c.l.b16 %v644
        %v653 = vunpack.c.l.b16 %v645
        %v654 = vpack.c.b16 %v651, %v650
        %v655 = vpack.c.b16 %v653, %v652
        %vm658 = vcmask 261120
        %v660 = vsel %vm658, %v641, 0
        %662 = vmatprep.subr.bf16.mxu0 0
        %663 = vmatpush1.bf16.msra.mxu0 %v654
        %664 = vmatprep.subr.bf16.mxu0 0
        %665 = vmatpush1.bf16.msra.mxu0 %v655
        %666 = vmatprep.subr.bf16.mxu0 0
        %667 = vmatpush1.bf16.msra.mxu0 0
        %668 = vmatprep.subr.bf16.mxu0 0
        %669 = vmatpush1.bf16.msra.mxu0 0
        %670 = vmatprep.subr.bf16.mxu0 0
        %671 = vmatpush1.bf16.msra.mxu0 0
        %672 = vmatprep.subr.bf16.mxu0 0
        %673 = vmatpush1.bf16.msra.mxu0 0
        %674 = vmatprep.subr.bf16.mxu0 0
        %675 = vmatpush1.bf16.msra.mxu0 0
        %676 = vmatprep.subr.bf16.mxu0 0
        %677 = vmatpush1.bf16.msra.mxu0 0
        %678 = vmatprep.subr.bf16.mxu0 0
        %679 = vmatpush1.bf16.msra.mxu0 0
        %680 = vmatprep.subr.bf16.mxu0 0
        %681 = vmatpush1.bf16.msra.mxu0 0
        %682 = vmatprep.subr.bf16.mxu0 0
        %683 = vmatpush1.bf16.msra.mxu0 0
        %684 = vmatprep.subr.bf16.mxu0 0
        %685 = vmatpush1.bf16.msra.mxu0 0
        %686 = vmatprep.subr.bf16.mxu0 0
        %687 = vmatpush1.bf16.msra.mxu0 0
        %688 = vmatprep.subr.bf16.mxu0 0
        %689 = vmatpush1.bf16.msra.mxu0 0
        %690 = vmatprep.subr.bf16.mxu0 0
        %691 = vmatpush1.bf16.msra.mxu0 0
        %692 = vmatprep.subr.bf16.mxu0 0
        %693 = vmatpush1.bf16.msra.mxu0 0
        %694 = vmatprep.mubr.bf16.mxu0 0
        %695 = vmatmul.mubr.bf16.gmra.mrb[0].mxu0 %v660
        %v696 = vpop.f32.mrb[0].mxu0
        %v697 = vadd.f32 0.0, %v696
        %v698 = vpop.f32.mrb[0].mxu0
        %v699 = vpop.f32.mrb[0].mxu0
        %v700 = vpop.f32.mrb[0].mxu0
        %701 = vdwg.mxu0
        %v702 = vpack.c.bf16 %v697, %v697
        %vm703 = vcmask 64512
        %v705 = vsel %vm703, %v702, 0
        %707 = vmatprep.subr.bf16.mxu0 0
        %708 = vmatpush1.bf16.xpose.msra.mxu0 %v705
        %709 = vmatprep.subr.bf16.mxu0 0
        %710 = vmatpush1.bf16.xpose.msra.mxu0 0
        %711 = vmatprep.subr.bf16.mxu0 0
        %712 = vmatpush1.bf16.xpose.msra.mxu0 0
        %713 = vmatprep.subr.bf16.mxu0 0
        %714 = vmatpush1.bf16.xpose.msra.mxu0 0
        %715 = vmatprep.subr.bf16.mxu0 0
        %716 = vmatpush1.bf16.xpose.msra.mxu0 0
        %717 = vmatprep.subr.bf16.mxu0 0
        %718 = vmatpush1.bf16.xpose.msra.mxu0 0
        %719 = vmatprep.subr.bf16.mxu0 0
        %720 = vmatpush1.bf16.xpose.msra.mxu0 0
        %721 = vmatprep.subr.bf16.mxu0 0
        %722 = vmatpush1.bf16.xpose.msra.mxu0 0
        %723 = vmatprep.subr.bf16.mxu0 0
        %724 = vmatpush1.bf16.xpose.msra.mxu0 0
        %725 = vmatprep.subr.bf16.mxu0 0
        %726 = vmatpush1.bf16.xpose.msra.mxu0 0
        %727 = vmatprep.subr.bf16.mxu0 0
        %728 = vmatpush1.bf16.xpose.msra.mxu0 0
        %729 = vmatprep.subr.bf16.mxu0 0
        %730 = vmatpush1.bf16.xpose.msra.mxu0 0
        %731 = vmatprep.subr.bf16.mxu0 0
        %732 = vmatpush1.bf16.xpose.msra.mxu0 0
        %733 = vmatprep.subr.bf16.mxu0 0
        %734 = vmatpush1.bf16.xpose.msra.mxu0 0
        %735 = vmatprep.subr.bf16.mxu0 0
        %736 = vmatpush1.bf16.xpose.msra.mxu0 0
        %737 = vmatprep.subr.bf16.mxu0 0
        %738 = vmatpush1.bf16.xpose.msra.mxu0 0
        %739 = vmatprep.mubr.bf16.mxu0 0
        %740 = vmatmul.mubr.bf16.gmra.mrb[0].mxu0 %v705
        %v741 = vpop.f32.mrb[0].mxu0
        %v742 = vadd.f32 0.0, %v741
        %v743 = vpop.f32.mrb[0].mxu0
        %v744 = vpop.f32.mrb[0].mxu0
        %v745 = vpop.f32.mrb[0].mxu0
        %746 = vdwg.mxu0
        %v747 = vsel %vm585, 1, 0
        %v748 = vlaneseq
        %v749 = vshrl.u32 %v748, 7
        %v750 = vsub.s32 0, %v749
        %v751 = vrot.slane %v747, %v750
        %vm752 = vcmp.eq.s32.totalorder %v751, 1
        %v753 = vsel %vm752, -1e+30, %v742
        %v754 = vsel %vm703, %v753, -inf
        %755 = vmax.xlane.f32.xlu0 %v754
        %v756 = vpop.xlane.xlu0 %755
        %v757 = vsub.f32 %v753, %v756
        %v758 = vmul.f32 %v757, 1.442695
        %v759 = vpow.pop %v758
        %v760 = vmul.f32 %v759, %v583
        %v761 = vsel %vm703, %v760, 0.0
        %762 = vadd.xlane.f32.xlu0 %v761
        %v763 = vpop.xlane.xlu0 %762
        %v764 = vmax.f32 %v763, 1e-06
        %v765 = vpack.c.bf16 %v760, %v760
        %767 = vrot.lane.b32.xlu0 %v702, 96
        %v768 = vpop.permute.xlu0 %767
        %v770 = vsel %vm703, %v765, 0
        %vm772 = vcmask 1043456
        %v774 = vsel %vm772, %v768, 0
        %776 = vmatprep.subr.bf16.mxu0 0
        %777 = vmatpush1.bf16.msra.mxu0 %v774
        %778 = vmatprep.subr.bf16.mxu0 0
        %779 = vmatpush1.bf16.msra.mxu0 0
        %780 = vmatprep.subr.bf16.mxu0 0
        %781 = vmatpush1.bf16.msra.mxu0 0
        %782 = vmatprep.subr.bf16.mxu0 0
        %783 = vmatpush1.bf16.msra.mxu0 0
        %784 = vmatprep.subr.bf16.mxu0 0
        %785 = vmatpush1.bf16.msra.mxu0 0
        %786 = vmatprep.subr.bf16.mxu0 0
        %787 = vmatpush1.bf16.msra.mxu0 0
        %788 = vmatprep.subr.bf16.mxu0 0
        %789 = vmatpush1.bf16.msra.mxu0 0
        %790 = vmatprep.subr.bf16.mxu0 0
        %791 = vmatpush1.bf16.msra.mxu0 0
        %792 = vmatprep.subr.bf16.mxu0 0
        %793 = vmatpush1.bf16.msra.mxu0 0
        %794 = vmatprep.subr.bf16.mxu0 0
        %795 = vmatpush1.bf16.msra.mxu0 0
        %796 = vmatprep.subr.bf16.mxu0 0
        %797 = vmatpush1.bf16.msra.mxu0 0
        %798 = vmatprep.subr.bf16.mxu0 0
        %799 = vmatpush1.bf16.msra.mxu0 0
        %800 = vmatprep.subr.bf16.mxu0 0
        %801 = vmatpush1.bf16.msra.mxu0 0
        %802 = vmatprep.subr.bf16.mxu0 0
        %803 = vmatpush1.bf16.msra.mxu0 0
        %804 = vmatprep.subr.bf16.mxu0 0
        %805 = vmatpush1.bf16.msra.mxu0 0
        %806 = vmatprep.subr.bf16.mxu0 0
        %807 = vmatpush1.bf16.msra.mxu0 0
        %808 = vmatprep.mubr.bf16.mxu0 0
        %809 = vmatmul.mubr.bf16.gmra.mrb[0].mxu0 %v770
        %v810 = vpop.f32.mrb[0].mxu0
        %v811 = vadd.f32 0.0, %v810
        %v812 = vpop.f32.mrb[0].mxu0
        %v813 = vpop.f32.mrb[0].mxu0
        %v814 = vpop.f32.mrb[0].mxu0
        %815 = vdwg.mxu0
        %v816 = vrcp.pop %v764
        %v817 = vmul.f32 %v811, %v816
        %818 = vst.msk [vmem:[#allocation2] sm:$0xff] %vm703, %v817
        %819 = vrot.lane.b32.xlu0 %v702, 120
        %v820 = vpop.permute.xlu0 %819
        %v822 = vsel %vm703, %v820, 0
        %824 = vmatprep.subr.bf16.mxu0 0
        %825 = vmatpush1.bf16.xpose.msra.mxu0 %v822
        %826 = vmatprep.subr.bf16.mxu0 0
        %827 = vmatpush1.bf16.xpose.msra.mxu0 0
        %828 = vmatprep.subr.bf16.mxu0 0
        %829 = vmatpush1.bf16.xpose.msra.mxu0 0
        %830 = vmatprep.subr.bf16.mxu0 0
        %831 = vmatpush1.bf16.xpose.msra.mxu0 0
        %832 = vmatprep.subr.bf16.mxu0 0
        %833 = vmatpush1.bf16.xpose.msra.mxu0 0
        %834 = vmatprep.subr.bf16.mxu0 0
        %835 = vmatpush1.bf16.xpose.msra.mxu0 0
        %836 = vmatprep.subr.bf16.mxu0 0
        %837 = vmatpush1.bf16.xpose.msra.mxu0 0
        %838 = vmatprep.subr.bf16.mxu0 0
        %839 = vmatpush1.bf16.xpose.msra.mxu0 0
        %840 = vmatprep.subr.bf16.mxu0 0
        %841 = vmatpush1.bf16.xpose.msra.mxu0 0
        %842 = vmatprep.subr.bf16.mxu0 0
        %843 = vmatpush1.bf16.xpose.msra.mxu0 0
        %844 = vmatprep.subr.bf16.mxu0 0
        %845 = vmatpush1.bf16.xpose.msra.mxu0 0
        %846 = vmatprep.subr.bf16.mxu0 0
        %847 = vmatpush1.bf16.xpose.msra.mxu0 0
        %848 = vmatprep.subr.bf16.mxu0 0
        %849 = vmatpush1.bf16.xpose.msra.mxu0 0
        %850 = vmatprep.subr.bf16.mxu0 0
        %851 = vmatpush1.bf16.xpose.msra.mxu0 0
        %852 = vmatprep.subr.bf16.mxu0 0
        %853 = vmatpush1.bf16.xpose.msra.mxu0 0
        %854 = vmatprep.subr.bf16.mxu0 0
        %855 = vmatpush1.bf16.xpose.msra.mxu0 0
        %856 = vmatprep.mubr.bf16.mxu0 0
        %857 = vmatmul.mubr.bf16.gmra.mrb[0].mxu0 %v822
        %v858 = vpop.f32.mrb[0].mxu0
        %v859 = vadd.f32 0.0, %v858
        %v860 = vpop.f32.mrb[0].mxu0
        %v861 = vpop.f32.mrb[0].mxu0
        %v862 = vpop.f32.mrb[0].mxu0
        %863 = vdwg.mxu0
        %v864 = vsel %vm752, -1e+30, %v859
        %v865 = vsel %vm703, %v864, -inf
        %866 = vmax.xlane.f32.xlu0 %v865
        %v867 = vpop.xlane.xlu0 %866
        %v868 = vsub.f32 %v864, %v867
        %v869 = vmul.f32 %v868, 1.442695
        %v870 = vpow.pop %v869
        %v871 = vmul.f32 %v870, %v583
        %v872 = vsel %vm703, %v871, 0.0
        %873 = vadd.xlane.f32.xlu0 %v872
        %v874 = vpop.xlane.xlu0 %873
        %v875 = vmax.f32 %v874, 1e-06
        %v876 = vpack.c.bf16 %v871, %v871
        %877 = vrot.lane.b32.xlu0 %v702, 88
        %v878 = vpop.permute.xlu0 %877
        %v880 = vsel %vm703, %v876, 0
        %v883 = vsel %vm772, %v878, 0
        %885 = vmatprep.subr.bf16.mxu0 0
        %886 = vmatpush1.bf16.msra.mxu0 %v883
        %887 = vmatprep.subr.bf16.mxu0 0
        %888 = vmatpush1.bf16.msra.mxu0 0
        %889 = vmatprep.subr.bf16.mxu0 0
        %890 = vmatpush1.bf16.msra.mxu0 0
        %891 = vmatprep.subr.bf16.mxu0 0
        %892 = vmatpush1.bf16.msra.mxu0 0
        %893 = vmatprep.subr.bf16.mxu0 0
        %894 = vmatpush1.bf16.msra.mxu0 0
        %895 = vmatprep.subr.bf16.mxu0 0
        %896 = vmatpush1.bf16.msra.mxu0 0
        %897 = vmatprep.subr.bf16.mxu0 0
        %898 = vmatpush1.bf16.msra.mxu0 0
        %899 = vmatprep.subr.bf16.mxu0 0
        %900 = vmatpush1.bf16.msra.mxu0 0
        %901 = vmatprep.subr.bf16.mxu0 0
        %902 = vmatpush1.bf16.msra.mxu0 0
        %903 = vmatprep.subr.bf16.mxu0 0
        %904 = vmatpush1.bf16.msra.mxu0 0
        %905 = vmatprep.subr.bf16.mxu0 0
        %906 = vmatpush1.bf16.msra.mxu0 0
        %907 = vmatprep.subr.bf16.mxu0 0
        %908 = vmatpush1.bf16.msra.mxu0 0
        %909 = vmatprep.subr.bf16.mxu0 0
        %910 = vmatpush1.bf16.msra.mxu0 0
        %911 = vmatprep.subr.bf16.mxu0 0
        %912 = vmatpush1.bf16.msra.mxu0 0
        %913 = vmatprep.subr.bf16.mxu0 0
        %914 = vmatpush1.bf16.msra.mxu0 0
        %915 = vmatprep.subr.bf16.mxu0 0
        %916 = vmatpush1.bf16.msra.mxu0 0
        %917 = vmatprep.mubr.bf16.mxu0 0
        %918 = vmatmul.mubr.bf16.gmra.mrb[0].mxu0 %v880
        %v919 = vpop.f32.mrb[0].mxu0
        %v920 = vadd.f32 0.0, %v919
        %v921 = vpop.f32.mrb[0].mxu0
        %v922 = vpop.f32.mrb[0].mxu0
        %v923 = vpop.f32.mrb[0].mxu0
        %924 = vdwg.mxu0
        %v925 = vrcp.pop %v875
        %v926 = vmul.f32 %v920, %v925
        %928 = vrot.lane.b32.xlu0 %v926, 8
        %v929 = vpop.permute.xlu0 %928
        %vm931 = vcmask 130112
        %932 = vst.msk [vmem:[#allocation2] sm:$0xff] %vm931, %v929
        %933 = vrot.lane.b32.xlu0 %v702, 112
        %v934 = vpop.permute.xlu0 %933
        %v936 = vsel %vm703, %v934, 0
        %938 = vmatprep.subr.bf16.mxu0 0
        %939 = vmatpush1.bf16.xpose.msra.mxu0 %v936
        %940 = vmatprep.subr.bf16.mxu0 0
        %941 = vmatpush1.bf16.xpose.msra.mxu0 0
        %942 = vmatprep.subr.bf16.mxu0 0
        %943 = vmatpush1.bf16.xpose.msra.mxu0 0
        %944 = vmatprep.subr.bf16.mxu0 0
        %945 = vmatpush1.bf16.xpose.msra.mxu0 0
        %946 = vmatprep.subr.bf16.mxu0 0
        %947 = vmatpush1.bf16.xpose.msra.mxu0 0
        %948 = vmatprep.subr.bf16.mxu0 0
        %949 = vmatpush1.bf16.xpose.msra.mxu0 0
        %950 = vmatprep.subr.bf16.mxu0 0
        %951 = vmatpush1.bf16.xpose.msra.mxu0 0
        %952 = vmatprep.subr.bf16.mxu0 0
        %953 = vmatpush1.bf16.xpose.msra.mxu0 0
        %954 = vmatprep.subr.bf16.mxu0 0
        %955 = vmatpush1.bf16.xpose.msra.mxu0 0
        %956 = vmatprep.subr.bf16.mxu0 0
        %957 = vmatpush1.bf16.xpose.msra.mxu0 0
        %958 = vmatprep.subr.bf16.mxu0 0
        %959 = vmatpush1.bf16.xpose.msra.mxu0 0
        %960 = vmatprep.subr.bf16.mxu0 0
        %961 = vmatpush1.bf16.xpose.msra.mxu0 0
        %962 = vmatprep.subr.bf16.mxu0 0
        %963 = vmatpush1.bf16.xpose.msra.mxu0 0
        %964 = vmatprep.subr.bf16.mxu0 0
        %965 = vmatpush1.bf16.xpose.msra.mxu0 0
        %966 = vmatprep.subr.bf16.mxu0 0
        %967 = vmatpush1.bf16.xpose.msra.mxu0 0
        %968 = vmatprep.subr.bf16.mxu0 0
        %969 = vmatpush1.bf16.xpose.msra.mxu0 0
        %970 = vmatprep.mubr.bf16.mxu0 0
        %971 = vmatmul.mubr.bf16.gmra.mrb[0].mxu0 %v936
        %v972 = vpop.f32.mrb[0].mxu0
        %v973 = vadd.f32 0.0, %v972
        %v974 = vpop.f32.mrb[0].mxu0
        %v975 = vpop.f32.mrb[0].mxu0
        %v976 = vpop.f32.mrb[0].mxu0
        %977 = vdwg.mxu0
        %v978 = vsel %vm752, -1e+30, %v973
        %v979 = vsel %vm703, %v978, -inf
        %980 = vmax.xlane.f32.xlu0 %v979
        %v981 = vpop.xlane.xlu0 %980
        %v982 = vsub.f32 %v978, %v981
        %v983 = vmul.f32 %v982, 1.442695
        %v984 = vpow.pop %v983
        %v985 = vmul.f32 %v984, %v583
        %v986 = vsel %vm703, %v985, 0.0
        %987 = vadd.xlane.f32.xlu0 %v986
        %v988 = vpop.xlane.xlu0 %987
        %v989 = vmax.f32 %v988, 1e-06
        %v990 = vpack.c.bf16 %v985, %v985
        %991 = vrot.lane.b32.xlu0 %v702, 80
        %v992 = vpop.permute.xlu0 %991
        %v994 = vsel %vm703, %v990, 0
        %v997 = vsel %vm772, %v992, 0
        %999 = vmatprep.subr.bf16.mxu0 0
        %1000 = vmatpush1.bf16.msra.mxu0 %v997
        %1001 = vmatprep.subr.bf16.mxu0 0
        %1002 = vmatpush1.bf16.msra.mxu0 0
        %1003 = vmatprep.subr.bf16.mxu0 0
        %1004 = vmatpush1.bf16.msra.mxu0 0
        %1005 = vmatprep.subr.bf16.mxu0 0
        %1006 = vmatpush1.bf16.msra.mxu0 0
        %1007 = vmatprep.subr.bf16.mxu0 0
        %1008 = vmatpush1.bf16.msra.mxu0 0
        %1009 = vmatprep.subr.bf16.mxu0 0
        %1010 = vmatpush1.bf16.msra.mxu0 0
        %1011 = vmatprep.subr.bf16.mxu0 0
        %1012 = vmatpush1.bf16.msra.mxu0 0
        %1013 = vmatprep.subr.bf16.mxu0 0
        %1014 = vmatpush1.bf16.msra.mxu0 0
        %1015 = vmatprep.subr.bf16.mxu0 0
        %1016 = vmatpush1.bf16.msra.mxu0 0
        %1017 = vmatprep.subr.bf16.mxu0 0
        %1018 = vmatpush1.bf16.msra.mxu0 0
        %1019 = vmatprep.subr.bf16.mxu0 0
        %1020 = vmatpush1.bf16.msra.mxu0 0
        %1021 = vmatprep.subr.bf16.mxu0 0
        %1022 = vmatpush1.bf16.msra.mxu0 0
        %1023 = vmatprep.subr.bf16.mxu0 0
        %1024 = vmatpush1.bf16.msra.mxu0 0
        %1025 = vmatprep.subr.bf16.mxu0 0
        %1026 = vmatpush1.bf16.msra.mxu0 0
        %1027 = vmatprep.subr.bf16.mxu0 0
        %1028 = vmatpush1.bf16.msra.mxu0 0
        %1029 = vmatprep.subr.bf16.mxu0 0
        %1030 = vmatpush1.bf16.msra.mxu0 0
        %1031 = vmatprep.mubr.bf16.mxu0 0
        %1032 = vmatmul.mubr.bf16.gmra.mrb[0].mxu0 %v994
        %v1033 = vpop.f32.mrb[0].mxu0
        %v1034 = vadd.f32 0.0, %v1033
        %v1035 = vpop.f32.mrb[0].mxu0
        %v1036 = vpop.f32.mrb[0].mxu0
        %v1037 = vpop.f32.mrb[0].mxu0
        %1038 = vdwg.mxu0
        %v1039 = vrcp.pop %v989
        %v1040 = vmul.f32 %v1034, %v1039
        %1042 = vrot.lane.b32.xlu0 %v1040, 16
        %v1043 = vpop.permute.xlu0 %1042
        %vm1045 = vcmask 195712
        %1046 = vst.msk [vmem:[#allocation2] sm:$0xff] %vm1045, %v1043
        %1047 = vrot.lane.b32.xlu0 %v702, 104
        %v1048 = vpop.permute.xlu0 %1047
        %v1050 = vsel %vm703, %v1048, 0
        %1052 = vmatprep.subr.bf16.mxu0 0
        %1053 = vmatpush1.bf16.xpose.msra.mxu0 %v1050
        %1054 = vmatprep.subr.bf16.mxu0 0
        %1055 = vmatpush1.bf16.xpose.msra.mxu0 0
        %1056 = vmatprep.subr.bf16.mxu0 0
        %1057 = vmatpush1.bf16.xpose.msra.mxu0 0
        %1058 = vmatprep.subr.bf16.mxu0 0
        %1059 = vmatpush1.bf16.xpose.msra.mxu0 0
        %1060 = vmatprep.subr.bf16.mxu0 0
        %1061 = vmatpush1.bf16.xpose.msra.mxu0 0
        %1062 = vmatprep.subr.bf16.mxu0 0
        %1063 = vmatpush1.bf16.xpose.msra.mxu0 0
        %1064 = vmatprep.subr.bf16.mxu0 0
        %1065 = vmatpush1.bf16.xpose.msra.mxu0 0
        %1066 = vmatprep.subr.bf16.mxu0 0
        %1067 = vmatpush1.bf16.xpose.msra.mxu0 0
        %1068 = vmatprep.subr.bf16.mxu0 0
        %1069 = vmatpush1.bf16.xpose.msra.mxu0 0
        %1070 = vmatprep.subr.bf16.mxu0 0
        %1071 = vmatpush1.bf16.xpose.msra.mxu0 0
        %1072 = vmatprep.subr.bf16.mxu0 0
        %1073 = vmatpush1.bf16.xpose.msra.mxu0 0
        %1074 = vmatprep.subr.bf16.mxu0 0
        %1075 = vmatpush1.bf16.xpose.msra.mxu0 0
        %1076 = vmatprep.subr.bf16.mxu0 0
        %1077 = vmatpush1.bf16.xpose.msra.mxu0 0
        %1078 = vmatprep.subr.bf16.mxu0 0
        %1079 = vmatpush1.bf16.xpose.msra.mxu0 0
        %1080 = vmatprep.subr.bf16.mxu0 0
        %1081 = vmatpush1.bf16.xpose.msra.mxu0 0
        %1082 = vmatprep.subr.bf16.mxu0 0
        %1083 = vmatpush1.bf16.xpose.msra.mxu0 0
        %1084 = vmatprep.mubr.bf16.mxu0 0
        %1085 = vmatmul.mubr.bf16.gmra.mrb[0].mxu0 %v1050
        %v1086 = vpop.f32.mrb[0].mxu0
        %v1087 = vadd.f32 0.0, %v1086
        %v1088 = vpop.f32.mrb[0].mxu0
        %v1089 = vpop.f32.mrb[0].mxu0
        %v1090 = vpop.f32.mrb[0].mxu0
        %1091 = vdwg.mxu0
        %v1092 = vsel %vm752, -1e+30, %v1087
        %v1093 = vsel %vm703, %v1092, -inf
        %1094 = vmax.xlane.f32.xlu0 %v1093
        %v1095 = vpop.xlane.xlu0 %1094
        %v1096 = vsub.f32 %v1092, %v1095
        %v1097 = vmul.f32 %v1096, 1.442695
        %v1098 = vpow.pop %v1097
        %v1099 = vmul.f32 %v1098, %v583
        %v1100 = vsel %vm703, %v1099, 0.0
        %1101 = vadd.xlane.f32.xlu0 %v1100
        %v1102 = vpop.xlane.xlu0 %1101
        %v1103 = vmax.f32 %v1102, 1e-06
        %v1104 = vpack.c.bf16 %v1099, %v1099
        %1105 = vrot.lane.b32.xlu0 %v702, 72
        %v1106 = vpop.permute.xlu0 %1105
        %v1108 = vsel %vm703, %v1104, 0
        %v1111 = vsel %vm772, %v1106, 0
        %1113 = vmatprep.subr.bf16.mxu0 0
        %1114 = vmatpush1.bf16.msra.mxu0 %v1111
        %1115 = vmatprep.subr.bf16.mxu0 0
        %1116 = vmatpush1.bf16.msra.mxu0 0
        %1117 = vmatprep.subr.bf16.mxu0 0
        %1118 = vmatpush1.bf16.msra.mxu0 0
        %1119 = vmatprep.subr.bf16.mxu0 0
        %1120 = vmatpush1.bf16.msra.mxu0 0
        %1121 = vmatprep.subr.bf16.mxu0 0
        %1122 = vmatpush1.bf16.msra.mxu0 0
        %1123 = vmatprep.subr.bf16.mxu0 0
        %1124 = vmatpush1.bf16.msra.mxu0 0
        %1125 = vmatprep.subr.bf16.mxu0 0
        %1126 = vmatpush1.bf16.msra.mxu0 0
        %1127 = vmatprep.subr.bf16.mxu0 0
        %1128 = vmatpush1.bf16.msra.mxu0 0
        %1129 = vmatprep.subr.bf16.mxu0 0
        %1130 = vmatpush1.bf16.msra.mxu0 0
        %1131 = vmatprep.subr.bf16.mxu0 0
        %1132 = vmatpush1.bf16.msra.mxu0 0
        %1133 = vmatprep.subr.bf16.mxu0 0
        %1134 = vmatpush1.bf16.msra.mxu0 0
        %1135 = vmatprep.subr.bf16.mxu0 0
        %1136 = vmatpush1.bf16.msra.mxu0 0
        %1137 = vmatprep.subr.bf16.mxu0 0
        %1138 = vmatpush1.bf16.msra.mxu0 0
        %1139 = vmatprep.subr.bf16.mxu0 0
        %1140 = vmatpush1.bf16.msra.mxu0 0
        %1141 = vmatprep.subr.bf16.mxu0 0
        %1142 = vmatpush1.bf16.msra.mxu0 0
        %1143 = vmatprep.subr.bf16.mxu0 0
        %1144 = vmatpush1.bf16.msra.mxu0 0
        %1145 = vmatprep.mubr.bf16.mxu0 0
        %1146 = vmatmul.mubr.bf16.gmra.mrb[0].mxu0 %v1108
        %v1147 = vpop.f32.mrb[0].mxu0
        %v1148 = vadd.f32 0.0, %v1147
        %v1149 = vpop.f32.mrb[0].mxu0
        %v1150 = vpop.f32.mrb[0].mxu0
        %v1151 = vpop.f32.mrb[0].mxu0
        %1152 = vdwg.mxu0
        %v1153 = vrcp.pop %v1103
        %v1154 = vmul.f32 %v1148, %v1153
        %1156 = vrot.lane.b32.xlu0 %v1154, 24
        %v1157 = vpop.permute.xlu0 %1156
        %vm1159 = vcmask 261312
        %1160 = vst.msk [vmem:[#allocation2] sm:$0xff] %vm1159, %v1157
        %v1161 = vld [vmem:[#allocation2] sm:$0xff]
        %v1162 = vpack.c.bf16 %v1161, %v1161
        %v1163 = vld [vmem:[%s7] sm:$0xf]
        %v1164 = vld [vmem:[%s7 + $0x4] sm:$0xf]
        %v1165 = vld [vmem:[%s7 + $0x8] sm:$0xf]
        %v1166 = vld [vmem:[%s7 + $0xc] sm:$0xf]
        %v1171 = vunpack.c.l.b16 %v1163
        %v1172 = vunpack.c.l.b16 %v1164
        %v1173 = vunpack.c.l.b16 %v1165
        %v1174 = vunpack.c.l.b16 %v1166
        %v1175 = vpack.c.b16 %v1172, %v1171
        %v1176 = vpack.c.b16 %v1174, %v1173
        %v1180 = vsel %vm658, %v1162, 0
        %1182 = vmatprep.subr.bf16.mxu0 0
        %1183 = vmatpush1.bf16.msra.mxu0 %v1175
        %1184 = vmatprep.subr.bf16.mxu0 0
        %1185 = vmatpush1.bf16.msra.mxu0 %v1176
        %1186 = vmatprep.subr.bf16.mxu0 0
        %1187 = vmatpush1.bf16.msra.mxu0 0
        %1188 = vmatprep.subr.bf16.mxu0 0
        %1189 = vmatpush1.bf16.msra.mxu0 0
        %1190 = vmatprep.subr.bf16.mxu0 0
        %1191 = vmatpush1.bf16.msra.mxu0 0
        %1192 = vmatprep.subr.bf16.mxu0 0
        %1193 = vmatpush1.bf16.msra.mxu0 0
        %1194 = vmatprep.subr.bf16.mxu0 0
        %1195 = vmatpush1.bf16.msra.mxu0 0
        %1196 = vmatprep.subr.bf16.mxu0 0
        %1197 = vmatpush1.bf16.msra.mxu0 0
        %1198 = vmatprep.subr.bf16.mxu0 0
        %1199 = vmatpush1.bf16.msra.mxu0 0
        %1200 = vmatprep.subr.bf16.mxu0 0
        %1201 = vmatpush1.bf16.msra.mxu0 0
        %1202 = vmatprep.subr.bf16.mxu0 0
        %1203 = vmatpush1.bf16.msra.mxu0 0
        %1204 = vmatprep.subr.bf16.mxu0 0
        %1205 = vmatpush1.bf16.msra.mxu0 0
        %1206 = vmatprep.subr.bf16.mxu0 0
        %1207 = vmatpush1.bf16.msra.mxu0 0
        %1208 = vmatprep.subr.bf16.mxu0 0
        %1209 = vmatpush1.bf16.msra.mxu0 0
        %1210 = vmatprep.subr.bf16.mxu0 0
        %1211 = vmatpush1.bf16.msra.mxu0 0
        %1212 = vmatprep.subr.bf16.mxu0 0
        %1213 = vmatpush1.bf16.msra.mxu0 0
        %1214 = vmatprep.mubr.bf16.mxu0 0
        %1215 = vmatmul.mubr.bf16.gmra.mrb[0].mxu0 %v1180
        %v1216 = vpop.f32.mrb[0].mxu0
        %v1217 = vadd.f32 0.0, %v1216
        %v1218 = vpop.f32.mrb[0].mxu0
        %v1219 = vpop.f32.mrb[0].mxu0
        %v1220 = vpop.f32.mrb[0].mxu0
        %1221 = vdwg.mxu0
        %1223 = vset.pattern.permute.xlu0 0
        %1224 = vperm.xlu0 %1223, %v587
        %v1225 = vpop.permute.xlu0 %1224
        %v1227 = vmul.f32 %v1225, %v1217
        %v1228 = vadd.f32 %v636, %v1227
        %v1229 = vld [vmem:[%s11] sm:$0x1f]
        %v1230 = vsel %vm658, %v1228, 0.0
        %1231 = vadd.xlane.f32.xlu0 %v1230
        %v1232 = vpop.xlane.xlu0 %1231
        %v1233 = vrcp.pop 32.0
        %v1234 = vmul.f32 %v1232, %v1233
        %v1235 = vsub.f32 %v1228, %v1234
        %v1236 = vmul.f32 %v1235, %v1235
        %v1237 = vsel %vm658, %v1236, 0.0
        %1238 = vadd.xlane.f32.xlu0 %v1237
        %v1239 = vpop.xlane.xlu0 %1238
        %v1240 = vmul.f32 %v1239, %v1233
        %v1241 = vadd.f32 %v1240, 1e-05
        %v1242 = vrsqrt.pop %v1241
        %v1243 = vmul.f32 %v1235, %v1242
        %v1244 = vlaneseq
        %v1245 = vshrl.u32 %v1244, 7
        %v1246 = vsub.s32 1, %v1245
        %v1247 = vrot.slane %v1229, %v1246
        %v1248 = vmul.f32 %v1243, %v1247
        %v1249 = vlaneseq
        %v1250 = vshrl.u32 %v1249, 7
        %v1251 = vsub.s32 2, %v1250
        %v1252 = vrot.slane %v1229, %v1251
        %v1253 = vadd.f32 %v1248, %v1252
        %v1254 = vpack.c.bf16 %v1253, %v1253
        %v1255 = vld [vmem:[%s8] sm:$0xf]
        %v1256 = vld [vmem:[%s8 + $0x4] sm:$0xf]
        %v1257 = vld [vmem:[%s8 + $0x8] sm:$0xf]
        %v1258 = vld [vmem:[%s8 + $0xc] sm:$0xf]
        %v1259 = vld [vmem:[%s9] sm:$0x1]
        %v1261 = vlaneseq
        %v1262 = vshrl.u32 %v1261, 7
        %v1263 = vsub.s32 0, %v1262
        %v1264 = vrot.slane %v1259, %v1263
        %v1270 = vunpack.c.l.b16 %v1255
        %v1271 = vunpack.c.l.b16 %v1256
        %v1272 = vunpack.c.l.b16 %v1257
        %v1273 = vunpack.c.l.b16 %v1258
        %v1274 = vpack.c.b16 %v1271, %v1270
        %v1275 = vpack.c.b16 %v1273, %v1272
        %v1279 = vsel %vm658, %v1254, 0
        %1281 = vmatprep.subr.bf16.mxu0 0
        %1282 = vmatpush1.bf16.msra.mxu0 %v1274
        %1283 = vmatprep.subr.bf16.mxu0 0
        %1284 = vmatpush1.bf16.msra.mxu0 %v1275
        %1285 = vmatprep.subr.bf16.mxu0 0
        %1286 = vmatpush1.bf16.msra.mxu0 0
        %1287 = vmatprep.subr.bf16.mxu0 0
        %1288 = vmatpush1.bf16.msra.mxu0 0
        %1289 = vmatprep.subr.bf16.mxu0 0
        %1290 = vmatpush1.bf16.msra.mxu0 0
        %1291 = vmatprep.subr.bf16.mxu0 0
        %1292 = vmatpush1.bf16.msra.mxu0 0
        %1293 = vmatprep.subr.bf16.mxu0 0
        %1294 = vmatpush1.bf16.msra.mxu0 0
        %1295 = vmatprep.subr.bf16.mxu0 0
        %1296 = vmatpush1.bf16.msra.mxu0 0
        %1297 = vmatprep.subr.bf16.mxu0 0
        %1298 = vmatpush1.bf16.msra.mxu0 0
        %1299 = vmatprep.subr.bf16.mxu0 0
        %1300 = vmatpush1.bf16.msra.mxu0 0
        %1301 = vmatprep.subr.bf16.mxu0 0
        %1302 = vmatpush1.bf16.msra.mxu0 0
        %1303 = vmatprep.subr.bf16.mxu0 0
        %1304 = vmatpush1.bf16.msra.mxu0 0
        %1305 = vmatprep.subr.bf16.mxu0 0
        %1306 = vmatpush1.bf16.msra.mxu0 0
        %1307 = vmatprep.subr.bf16.mxu0 0
        %1308 = vmatpush1.bf16.msra.mxu0 0
        %1309 = vmatprep.subr.bf16.mxu0 0
        %1310 = vmatpush1.bf16.msra.mxu0 0
        %1311 = vmatprep.subr.bf16.mxu0 0
        %1312 = vmatpush1.bf16.msra.mxu0 0
        %1313 = vmatprep.mubr.bf16.mxu0 0
        %1314 = vmatmul.mubr.bf16.gmra.mrb[0].mxu0 %v1279
        %v1315 = vpop.f32.mrb[0].mxu0
        %v1316 = vadd.f32 %v1264, %v1315
        %v1317 = vpop.f32.mrb[0].mxu0
        %v1318 = vpop.f32.mrb[0].mxu0
        %v1319 = vpop.f32.mrb[0].mxu0
        %1320 = vdwg.mxu0
        %v1321 = vmax.f32 %v1316, 0.0
        %v1322 = vpack.c.bf16 %v1321, %v1321
        %v1323 = vld [vmem:[%s10] sm:$0xf]
        %v1324 = vld [vmem:[%s10 + $0x4] sm:$0xf]
        %v1325 = vld [vmem:[%s10 + $0x8] sm:$0xf]
        %v1326 = vld [vmem:[%s10 + $0xc] sm:$0xf]
        %v1327 = vld [vmem:[%s10 + $0x10] sm:$0xf]
        %v1328 = vld [vmem:[%s10 + $0x14] sm:$0xf]
        %v1329 = vld [vmem:[%s10 + $0x18] sm:$0xf]
        %v1330 = vld [vmem:[%s10 + $0x1c] sm:$0xf]
        %v1331 = vlaneseq
        %v1332 = vshrl.u32 %v1331, 7
        %v1333 = vsub.s32 0, %v1332
        %v1334 = vrot.slane %v1229, %v1333
        %v1343 = vunpack.c.l.b16 %v1323
        %v1344 = vunpack.c.l.b16 %v1324
        %v1345 = vunpack.c.l.b16 %v1325
        %v1346 = vunpack.c.l.b16 %v1326
        %v1347 = vunpack.c.l.b16 %v1327
        %v1348 = vunpack.c.l.b16 %v1328
        %v1349 = vunpack.c.l.b16 %v1329
        %v1350 = vunpack.c.l.b16 %v1330
        %v1351 = vpack.c.b16 %v1344, %v1343
        %v1352 = vpack.c.b16 %v1346, %v1345
        %v1353 = vpack.c.b16 %v1348, %v1347
        %v1354 = vpack.c.b16 %v1350, %v1349
        %vm1359 = vcmask 523264
        %v1361 = vsel %vm1359, %v1322, 0
        %1363 = vmatprep.subr.bf16.mxu0 0
        %1364 = vmatpush1.bf16.msra.mxu0 %v1351
        %1365 = vmatprep.subr.bf16.mxu0 0
        %1366 = vmatpush1.bf16.msra.mxu0 %v1352
        %1367 = vmatprep.subr.bf16.mxu0 0
        %1368 = vmatpush1.bf16.msra.mxu0 %v1353
        %1369 = vmatprep.subr.bf16.mxu0 0
        %1370 = vmatpush1.bf16.msra.mxu0 %v1354
        %1371 = vmatprep.subr.bf16.mxu0 0
        %1372 = vmatpush1.bf16.msra.mxu0 0
        %1373 = vmatprep.subr.bf16.mxu0 0
        %1374 = vmatpush1.bf16.msra.mxu0 0
        %1375 = vmatprep.subr.bf16.mxu0 0
        %1376 = vmatpush1.bf16.msra.mxu0 0
        %1377 = vmatprep.subr.bf16.mxu0 0
        %1378 = vmatpush1.bf16.msra.mxu0 0
        %1379 = vmatprep.subr.bf16.mxu0 0
        %1380 = vmatpush1.bf16.msra.mxu0 0
        %1381 = vmatprep.subr.bf16.mxu0 0
        %1382 = vmatpush1.bf16.msra.mxu0 0
        %1383 = vmatprep.subr.bf16.mxu0 0
        %1384 = vmatpush1.bf16.msra.mxu0 0
        %1385 = vmatprep.subr.bf16.mxu0 0
        %1386 = vmatpush1.bf16.msra.mxu0 0
        %1387 = vmatprep.subr.bf16.mxu0 0
        %1388 = vmatpush1.bf16.msra.mxu0 0
        %1389 = vmatprep.subr.bf16.mxu0 0
        %1390 = vmatpush1.bf16.msra.mxu0 0
        %1391 = vmatprep.subr.bf16.mxu0 0
        %1392 = vmatpush1.bf16.msra.mxu0 0
        %1393 = vmatprep.subr.bf16.mxu0 0
        %1394 = vmatpush1.bf16.msra.mxu0 0
        %1395 = vmatprep.mubr.bf16.mxu0 0
        %1396 = vmatmul.mubr.bf16.gmra.mrb[0].mxu0 %v1361
        %v1397 = vpop.f32.mrb[0].mxu0
        %v1398 = vadd.f32 %v1334, %v1397
        %v1399 = vpop.f32.mrb[0].mxu0
        %v1400 = vpop.f32.mrb[0].mxu0
        %v1401 = vpop.f32.mrb[0].mxu0
        %1402 = vdwg.mxu0
        %v1403 = vadd.f32 %v1253, %v1398
        %v1404 = vsel %vm658, %v1403, 0.0
        %1405 = vadd.xlane.f32.xlu0 %v1404
        %v1406 = vpop.xlane.xlu0 %1405
        %v1407 = vmul.f32 %v1406, %v1233
        %v1408 = vsub.f32 %v1403, %v1407
        %v1409 = vmul.f32 %v1408, %v1408
        %v1410 = vsel %vm658, %v1409, 0.0
        %1411 = vadd.xlane.f32.xlu0 %v1410
        %v1412 = vpop.xlane.xlu0 %1411
        %v1413 = vmul.f32 %v1412, %v1233
        %v1414 = vadd.f32 %v1413, 1e-05
        %v1415 = vrsqrt.pop %v1414
        %v1416 = vmul.f32 %v1408, %v1415
        %v1417 = vlaneseq
        %v1418 = vshrl.u32 %v1417, 7
        %v1419 = vsub.s32 3, %v1418
        %v1420 = vrot.slane %v1229, %v1419
        %v1421 = vmul.f32 %v1416, %v1420
        %v1422 = vlaneseq
        %v1423 = vshrl.u32 %v1422, 7
        %v1424 = vsub.s32 4, %v1423
        %v1425 = vrot.slane %v1229, %v1424
        %v1426 = vadd.f32 %v1421, %v1425
        %v1427 = vpack.c.bf16 %v1426, %v1426
        %s1428 = scalar_lea.vmem %s6, 16
        %v1429 = vld [vmem:[%s1428] sm:$0xf]
        %v1430 = vld [vmem:[%s1428 + $0x4] sm:$0xf]
        %v1431 = vld [vmem:[%s1428 + $0x8] sm:$0xf]
        %v1432 = vld [vmem:[%s1428 + $0xc] sm:$0xf]
        %v1437 = vunpack.c.l.b16 %v1429
        %v1438 = vunpack.c.l.b16 %v1430
        %v1439 = vunpack.c.l.b16 %v1431
        %v1440 = vunpack.c.l.b16 %v1432
        %v1441 = vpack.c.b16 %v1438, %v1437
        %v1442 = vpack.c.b16 %v1440, %v1439
        %v1446 = vsel %vm658, %v1427, 0
        %1448 = vmatprep.subr.bf16.mxu0 0
        %1449 = vmatpush1.bf16.msra.mxu0 %v1441
        %1450 = vmatprep.subr.bf16.mxu0 0
        %1451 = vmatpush1.bf16.msra.mxu0 %v1442
        %1452 = vmatprep.subr.bf16.mxu0 0
        %1453 = vmatpush1.bf16.msra.mxu0 0
        %1454 = vmatprep.subr.bf16.mxu0 0
        %1455 = vmatpush1.bf16.msra.mxu0 0
        %1456 = vmatprep.subr.bf16.mxu0 0
        %1457 = vmatpush1.bf16.msra.mxu0 0
        %1458 = vmatprep.subr.bf16.mxu0 0
        %1459 = vmatpush1.bf16.msra.mxu0 0
        %1460 = vmatprep.subr.bf16.mxu0 0
        %1461 = vmatpush1.bf16.msra.mxu0 0
        %1462 = vmatprep.subr.bf16.mxu0 0
        %1463 = vmatpush1.bf16.msra.mxu0 0
        %1464 = vmatprep.subr.bf16.mxu0 0
        %1465 = vmatpush1.bf16.msra.mxu0 0
        %1466 = vmatprep.subr.bf16.mxu0 0
        %1467 = vmatpush1.bf16.msra.mxu0 0
        %1468 = vmatprep.subr.bf16.mxu0 0
        %1469 = vmatpush1.bf16.msra.mxu0 0
        %1470 = vmatprep.subr.bf16.mxu0 0
        %1471 = vmatpush1.bf16.msra.mxu0 0
        %1472 = vmatprep.subr.bf16.mxu0 0
        %1473 = vmatpush1.bf16.msra.mxu0 0
        %1474 = vmatprep.subr.bf16.mxu0 0
        %1475 = vmatpush1.bf16.msra.mxu0 0
        %1476 = vmatprep.subr.bf16.mxu0 0
        %1477 = vmatpush1.bf16.msra.mxu0 0
        %1478 = vmatprep.subr.bf16.mxu0 0
        %1479 = vmatpush1.bf16.msra.mxu0 0
        %1480 = vmatprep.mubr.bf16.mxu0 0
        %1481 = vmatmul.mubr.bf16.gmra.mrb[0].mxu0 %v1446
        %v1482 = vpop.f32.mrb[0].mxu0
        %v1483 = vadd.f32 0.0, %v1482
        %v1484 = vpop.f32.mrb[0].mxu0
        %v1485 = vpop.f32.mrb[0].mxu0
        %v1486 = vpop.f32.mrb[0].mxu0
        %1487 = vdwg.mxu0
        %v1488 = vpack.c.bf16 %v1483, %v1483
        %v1490 = vsel %vm703, %v1488, 0
        %1492 = vmatprep.subr.bf16.mxu0 0
        %1493 = vmatpush1.bf16.xpose.msra.mxu0 %v1490
        %1494 = vmatprep.subr.bf16.mxu0 0
        %1495 = vmatpush1.bf16.xpose.msra.mxu0 0
        %1496 = vmatprep.subr.bf16.mxu0 0
        %1497 = vmatpush1.bf16.xpose.msra.mxu0 0
        %1498 = vmatprep.subr.bf16.mxu0 0
        %1499 = vmatpush1.bf16.xpose.msra.mxu0 0
        %1500 = vmatprep.subr.bf16.mxu0 0
        %1501 = vmatpush1.bf16.xpose.msra.mxu0 0
        %1502 = vmatprep.subr.bf16.mxu0 0
        %1503 = vmatpush1.bf16.xpose.msra.mxu0 0
        %1504 = vmatprep.subr.bf16.mxu0 0
        %1505 = vmatpush1.bf16.xpose.msra.mxu0 0
        %1506 = vmatprep.subr.bf16.mxu0 0
        %1507 = vmatpush1.bf16.xpose.msra.mxu0 0
        %1508 = vmatprep.subr.bf16.mxu0 0
        %1509 = vmatpush1.bf16.xpose.msra.mxu0 0
        %1510 = vmatprep.subr.bf16.mxu0 0
        %1511 = vmatpush1.bf16.xpose.msra.mxu0 0
        %1512 = vmatprep.subr.bf16.mxu0 0
        %1513 = vmatpush1.bf16.xpose.msra.mxu0 0
        %1514 = vmatprep.subr.bf16.mxu0 0
        %1515 = vmatpush1.bf16.xpose.msra.mxu0 0
        %1516 = vmatprep.subr.bf16.mxu0 0
        %1517 = vmatpush1.bf16.xpose.msra.mxu0 0
        %1518 = vmatprep.subr.bf16.mxu0 0
        %1519 = vmatpush1.bf16.xpose.msra.mxu0 0
        %1520 = vmatprep.subr.bf16.mxu0 0
        %1521 = vmatpush1.bf16.xpose.msra.mxu0 0
        %1522 = vmatprep.subr.bf16.mxu0 0
        %1523 = vmatpush1.bf16.xpose.msra.mxu0 0
        %1524 = vmatprep.mubr.bf16.mxu0 0
        %1525 = vmatmul.mubr.bf16.gmra.mrb[0].mxu0 %v1490
        %v1526 = vpop.f32.mrb[0].mxu0
        %v1527 = vadd.f32 0.0, %v1526
        %v1528 = vpop.f32.mrb[0].mxu0
        %v1529 = vpop.f32.mrb[0].mxu0
        %v1530 = vpop.f32.mrb[0].mxu0
        %1531 = vdwg.mxu0
        %v1532 = vsel %vm752, -1e+30, %v1527
        %v1533 = vsel %vm703, %v1532, -inf
        %1534 = vmax.xlane.f32.xlu0 %v1533
        %v1535 = vpop.xlane.xlu0 %1534
        %v1536 = vsub.f32 %v1532, %v1535
        %v1537 = vmul.f32 %v1536, 1.442695
        %v1538 = vpow.pop %v1537
        %v1539 = vmul.f32 %v1538, %v583
        %v1540 = vsel %vm703, %v1539, 0.0
        %1541 = vadd.xlane.f32.xlu0 %v1540
        %v1542 = vpop.xlane.xlu0 %1541
        %v1543 = vmax.f32 %v1542, 1e-06
        %v1544 = vpack.c.bf16 %v1539, %v1539
        %1546 = vrot.lane.b32.xlu0 %v1488, 96
        %v1547 = vpop.permute.xlu0 %1546
        %v1549 = vsel %vm703, %v1544, 0
        %v1552 = vsel %vm772, %v1547, 0
        %1554 = vmatprep.subr.bf16.mxu0 0
        %1555 = vmatpush1.bf16.msra.mxu0 %v1552
        %1556 = vmatprep.subr.bf16.mxu0 0
        %1557 = vmatpush1.bf16.msra.mxu0 0
        %1558 = vmatprep.subr.bf16.mxu0 0
        %1559 = vmatpush1.bf16.msra.mxu0 0
        %1560 = vmatprep.subr.bf16.mxu0 0
        %1561 = vmatpush1.bf16.msra.mxu0 0
        %1562 = vmatprep.subr.bf16.mxu0 0
        %1563 = vmatpush1.bf16.msra.mxu0 0
        %1564 = vmatprep.subr.bf16.mxu0 0
        %1565 = vmatpush1.bf16.msra.mxu0 0
        %1566 = vmatprep.subr.bf16.mxu0 0
        %1567 = vmatpush1.bf16.msra.mxu0 0
        %1568 = vmatprep.subr.bf16.mxu0 0
        %1569 = vmatpush1.bf16.msra.mxu0 0
        %1570 = vmatprep.subr.bf16.mxu0 0
        %1571 = vmatpush1.bf16.msra.mxu0 0
        %1572 = vmatprep.subr.bf16.mxu0 0
        %1573 = vmatpush1.bf16.msra.mxu0 0
        %1574 = vmatprep.subr.bf16.mxu0 0
        %1575 = vmatpush1.bf16.msra.mxu0 0
        %1576 = vmatprep.subr.bf16.mxu0 0
        %1577 = vmatpush1.bf16.msra.mxu0 0
        %1578 = vmatprep.subr.bf16.mxu0 0
        %1579 = vmatpush1.bf16.msra.mxu0 0
        %1580 = vmatprep.subr.bf16.mxu0 0
        %1581 = vmatpush1.bf16.msra.mxu0 0
        %1582 = vmatprep.subr.bf16.mxu0 0
        %1583 = vmatpush1.bf16.msra.mxu0 0
        %1584 = vmatprep.subr.bf16.mxu0 0
        %1585 = vmatpush1.bf16.msra.mxu0 0
        %1586 = vmatprep.mubr.bf16.mxu0 0
        %1587 = vmatmul.mubr.bf16.gmra.mrb[0].mxu0 %v1549
        %v1588 = vpop.f32.mrb[0].mxu0
        %v1589 = vadd.f32 0.0, %v1588
        %v1590 = vpop.f32.mrb[0].mxu0
        %v1591 = vpop.f32.mrb[0].mxu0
        %v1592 = vpop.f32.mrb[0].mxu0
        %1593 = vdwg.mxu0
        %v1594 = vrcp.pop %v1543
        %v1595 = vmul.f32 %v1589, %v1594
        %1596 = vst.msk [vmem:[#allocation2] sm:$0xff] %vm703, %v1595
        %1597 = vrot.lane.b32.xlu0 %v1488, 120
        %v1598 = vpop.permute.xlu0 %1597
        %v1600 = vsel %vm703, %v1598, 0
        %1602 = vmatprep.subr.bf16.mxu0 0
        %1603 = vmatpush1.bf16.xpose.msra.mxu0 %v1600
        %1604 = vmatprep.subr.bf16.mxu0 0
        %1605 = vmatpush1.bf16.xpose.msra.mxu0 0
        %1606 = vmatprep.subr.bf16.mxu0 0
        %1607 = vmatpush1.bf16.xpose.msra.mxu0 0
        %1608 = vmatprep.subr.bf16.mxu0 0
        %1609 = vmatpush1.bf16.xpose.msra.mxu0 0
        %1610 = vmatprep.subr.bf16.mxu0 0
        %1611 = vmatpush1.bf16.xpose.msra.mxu0 0
        %1612 = vmatprep.subr.bf16.mxu0 0
        %1613 = vmatpush1.bf16.xpose.msra.mxu0 0
        %1614 = vmatprep.subr.bf16.mxu0 0
        %1615 = vmatpush1.bf16.xpose.msra.mxu0 0
        %1616 = vmatprep.subr.bf16.mxu0 0
        %1617 = vmatpush1.bf16.xpose.msra.mxu0 0
        %1618 = vmatprep.subr.bf16.mxu0 0
        %1619 = vmatpush1.bf16.xpose.msra.mxu0 0
        %1620 = vmatprep.subr.bf16.mxu0 0
        %1621 = vmatpush1.bf16.xpose.msra.mxu0 0
        %1622 = vmatprep.subr.bf16.mxu0 0
        %1623 = vmatpush1.bf16.xpose.msra.mxu0 0
        %1624 = vmatprep.subr.bf16.mxu0 0
        %1625 = vmatpush1.bf16.xpose.msra.mxu0 0
        %1626 = vmatprep.subr.bf16.mxu0 0
        %1627 = vmatpush1.bf16.xpose.msra.mxu0 0
        %1628 = vmatprep.subr.bf16.mxu0 0
        %1629 = vmatpush1.bf16.xpose.msra.mxu0 0
        %1630 = vmatprep.subr.bf16.mxu0 0
        %1631 = vmatpush1.bf16.xpose.msra.mxu0 0
        %1632 = vmatprep.subr.bf16.mxu0 0
        %1633 = vmatpush1.bf16.xpose.msra.mxu0 0
        %1634 = vmatprep.mubr.bf16.mxu0 0
        %1635 = vmatmul.mubr.bf16.gmra.mrb[0].mxu0 %v1600
        %v1636 = vpop.f32.mrb[0].mxu0
        %v1637 = vadd.f32 0.0, %v1636
        %v1638 = vpop.f32.mrb[0].mxu0
        %v1639 = vpop.f32.mrb[0].mxu0
        %v1640 = vpop.f32.mrb[0].mxu0
        %1641 = vdwg.mxu0
        %v1642 = vsel %vm752, -1e+30, %v1637
        %v1643 = vsel %vm703, %v1642, -inf
        %1644 = vmax.xlane.f32.xlu0 %v1643
        %v1645 = vpop.xlane.xlu0 %1644
        %v1646 = vsub.f32 %v1642, %v1645
        %v1647 = vmul.f32 %v1646, 1.442695
        %v1648 = vpow.pop %v1647
        %v1649 = vmul.f32 %v1648, %v583
        %v1650 = vsel %vm703, %v1649, 0.0
        %1651 = vadd.xlane.f32.xlu0 %v1650
        %v1652 = vpop.xlane.xlu0 %1651
        %v1653 = vmax.f32 %v1652, 1e-06
        %v1654 = vpack.c.bf16 %v1649, %v1649
        %1655 = vrot.lane.b32.xlu0 %v1488, 88
        %v1656 = vpop.permute.xlu0 %1655
        %v1658 = vsel %vm703, %v1654, 0
        %v1661 = vsel %vm772, %v1656, 0
        %1663 = vmatprep.subr.bf16.mxu0 0
        %1664 = vmatpush1.bf16.msra.mxu0 %v1661
        %1665 = vmatprep.subr.bf16.mxu0 0
        %1666 = vmatpush1.bf16.msra.mxu0 0
        %1667 = vmatprep.subr.bf16.mxu0 0
        %1668 = vmatpush1.bf16.msra.mxu0 0
        %1669 = vmatprep.subr.bf16.mxu0 0
        %1670 = vmatpush1.bf16.msra.mxu0 0
        %1671 = vmatprep.subr.bf16.mxu0 0
        %1672 = vmatpush1.bf16.msra.mxu0 0
        %1673 = vmatprep.subr.bf16.mxu0 0
        %1674 = vmatpush1.bf16.msra.mxu0 0
        %1675 = vmatprep.subr.bf16.mxu0 0
        %1676 = vmatpush1.bf16.msra.mxu0 0
        %1677 = vmatprep.subr.bf16.mxu0 0
        %1678 = vmatpush1.bf16.msra.mxu0 0
        %1679 = vmatprep.subr.bf16.mxu0 0
        %1680 = vmatpush1.bf16.msra.mxu0 0
        %1681 = vmatprep.subr.bf16.mxu0 0
        %1682 = vmatpush1.bf16.msra.mxu0 0
        %1683 = vmatprep.subr.bf16.mxu0 0
        %1684 = vmatpush1.bf16.msra.mxu0 0
        %1685 = vmatprep.subr.bf16.mxu0 0
        %1686 = vmatpush1.bf16.msra.mxu0 0
        %1687 = vmatprep.subr.bf16.mxu0 0
        %1688 = vmatpush1.bf16.msra.mxu0 0
        %1689 = vmatprep.subr.bf16.mxu0 0
        %1690 = vmatpush1.bf16.msra.mxu0 0
        %1691 = vmatprep.subr.bf16.mxu0 0
        %1692 = vmatpush1.bf16.msra.mxu0 0
        %1693 = vmatprep.subr.bf16.mxu0 0
        %1694 = vmatpush1.bf16.msra.mxu0 0
        %1695 = vmatprep.mubr.bf16.mxu0 0
        %1696 = vmatmul.mubr.bf16.gmra.mrb[0].mxu0 %v1658
        %v1697 = vpop.f32.mrb[0].mxu0
        %v1698 = vadd.f32 0.0, %v1697
        %v1699 = vpop.f32.mrb[0].mxu0
        %v1700 = vpop.f32.mrb[0].mxu0
        %v1701 = vpop.f32.mrb[0].mxu0
        %1702 = vdwg.mxu0
        %v1703 = vrcp.pop %v1653
        %v1704 = vmul.f32 %v1698, %v1703
        %1706 = vrot.lane.b32.xlu0 %v1704, 8
        %v1707 = vpop.permute.xlu0 %1706
        %1709 = vst.msk [vmem:[#allocation2] sm:$0xff] %vm931, %v1707
        %1710 = vrot.lane.b32.xlu0 %v1488, 112
        %v1711 = vpop.permute.xlu0 %1710
        %v1713 = vsel %vm703, %v1711, 0
        %1715 = vmatprep.subr.bf16.mxu0 0
        %1716 = vmatpush1.bf16.xpose.msra.mxu0 %v1713
        %1717 = vmatprep.subr.bf16.mxu0 0
        %1718 = vmatpush1.bf16.xpose.msra.mxu0 0
        %1719 = vmatprep.subr.bf16.mxu0 0
        %1720 = vmatpush1.bf16.xpose.msra.mxu0 0
        %1721 = vmatprep.subr.bf16.mxu0 0
        %1722 = vmatpush1.bf16.xpose.msra.mxu0 0
        %1723 = vmatprep.subr.bf16.mxu0 0
        %1724 = vmatpush1.bf16.xpose.msra.mxu0 0
        %1725 = vmatprep.subr.bf16.mxu0 0
        %1726 = vmatpush1.bf16.xpose.msra.mxu0 0
        %1727 = vmatprep.subr.bf16.mxu0 0
        %1728 = vmatpush1.bf16.xpose.msra.mxu0 0
        %1729 = vmatprep.subr.bf16.mxu0 0
        %1730 = vmatpush1.bf16.xpose.msra.mxu0 0
        %1731 = vmatprep.subr.bf16.mxu0 0
        %1732 = vmatpush1.bf16.xpose.msra.mxu0 0
        %1733 = vmatprep.subr.bf16.mxu0 0
        %1734 = vmatpush1.bf16.xpose.msra.mxu0 0
        %1735 = vmatprep.subr.bf16.mxu0 0
        %1736 = vmatpush1.bf16.xpose.msra.mxu0 0
        %1737 = vmatprep.subr.bf16.mxu0 0
        %1738 = vmatpush1.bf16.xpose.msra.mxu0 0
        %1739 = vmatprep.subr.bf16.mxu0 0
        %1740 = vmatpush1.bf16.xpose.msra.mxu0 0
        %1741 = vmatprep.subr.bf16.mxu0 0
        %1742 = vmatpush1.bf16.xpose.msra.mxu0 0
        %1743 = vmatprep.subr.bf16.mxu0 0
        %1744 = vmatpush1.bf16.xpose.msra.mxu0 0
        %1745 = vmatprep.subr.bf16.mxu0 0
        %1746 = vmatpush1.bf16.xpose.msra.mxu0 0
        %1747 = vmatprep.mubr.bf16.mxu0 0
        %1748 = vmatmul.mubr.bf16.gmra.mrb[0].mxu0 %v1713
        %v1749 = vpop.f32.mrb[0].mxu0
        %v1750 = vadd.f32 0.0, %v1749
        %v1751 = vpop.f32.mrb[0].mxu0
        %v1752 = vpop.f32.mrb[0].mxu0
        %v1753 = vpop.f32.mrb[0].mxu0
        %1754 = vdwg.mxu0
        %v1755 = vsel %vm752, -1e+30, %v1750
        %v1756 = vsel %vm703, %v1755, -inf
        %1757 = vmax.xlane.f32.xlu0 %v1756
        %v1758 = vpop.xlane.xlu0 %1757
        %v1759 = vsub.f32 %v1755, %v1758
        %v1760 = vmul.f32 %v1759, 1.442695
        %v1761 = vpow.pop %v1760
        %v1762 = vmul.f32 %v1761, %v583
        %v1763 = vsel %vm703, %v1762, 0.0
        %1764 = vadd.xlane.f32.xlu0 %v1763
        %v1765 = vpop.xlane.xlu0 %1764
        %v1766 = vmax.f32 %v1765, 1e-06
        %v1767 = vpack.c.bf16 %v1762, %v1762
        %1768 = vrot.lane.b32.xlu0 %v1488, 80
        %v1769 = vpop.permute.xlu0 %1768
        %v1771 = vsel %vm703, %v1767, 0
        %v1774 = vsel %vm772, %v1769, 0
        %1776 = vmatprep.subr.bf16.mxu0 0
        %1777 = vmatpush1.bf16.msra.mxu0 %v1774
        %1778 = vmatprep.subr.bf16.mxu0 0
        %1779 = vmatpush1.bf16.msra.mxu0 0
        %1780 = vmatprep.subr.bf16.mxu0 0
        %1781 = vmatpush1.bf16.msra.mxu0 0
        %1782 = vmatprep.subr.bf16.mxu0 0
        %1783 = vmatpush1.bf16.msra.mxu0 0
        %1784 = vmatprep.subr.bf16.mxu0 0
        %1785 = vmatpush1.bf16.msra.mxu0 0
        %1786 = vmatprep.subr.bf16.mxu0 0
        %1787 = vmatpush1.bf16.msra.mxu0 0
        %1788 = vmatprep.subr.bf16.mxu0 0
        %1789 = vmatpush1.bf16.msra.mxu0 0
        %1790 = vmatprep.subr.bf16.mxu0 0
        %1791 = vmatpush1.bf16.msra.mxu0 0
        %1792 = vmatprep.subr.bf16.mxu0 0
        %1793 = vmatpush1.bf16.msra.mxu0 0
        %1794 = vmatprep.subr.bf16.mxu0 0
        %1795 = vmatpush1.bf16.msra.mxu0 0
        %1796 = vmatprep.subr.bf16.mxu0 0
        %1797 = vmatpush1.bf16.msra.mxu0 0
        %1798 = vmatprep.subr.bf16.mxu0 0
        %1799 = vmatpush1.bf16.msra.mxu0 0
        %1800 = vmatprep.subr.bf16.mxu0 0
        %1801 = vmatpush1.bf16.msra.mxu0 0
        %1802 = vmatprep.subr.bf16.mxu0 0
        %1803 = vmatpush1.bf16.msra.mxu0 0
        %1804 = vmatprep.subr.bf16.mxu0 0
        %1805 = vmatpush1.bf16.msra.mxu0 0
        %1806 = vmatprep.subr.bf16.mxu0 0
        %1807 = vmatpush1.bf16.msra.mxu0 0
        %1808 = vmatprep.mubr.bf16.mxu0 0
        %1809 = vmatmul.mubr.bf16.gmra.mrb[0].mxu0 %v1771
        %v1810 = vpop.f32.mrb[0].mxu0
        %v1811 = vadd.f32 0.0, %v1810
        %v1812 = vpop.f32.mrb[0].mxu0
        %v1813 = vpop.f32.mrb[0].mxu0
        %v1814 = vpop.f32.mrb[0].mxu0
        %1815 = vdwg.mxu0
        %v1816 = vrcp.pop %v1766
        %v1817 = vmul.f32 %v1811, %v1816
        %1819 = vrot.lane.b32.xlu0 %v1817, 16
        %v1820 = vpop.permute.xlu0 %1819
        %1822 = vst.msk [vmem:[#allocation2] sm:$0xff] %vm1045, %v1820
        %1823 = vrot.lane.b32.xlu0 %v1488, 104
        %v1824 = vpop.permute.xlu0 %1823
        %v1826 = vsel %vm703, %v1824, 0
        %1828 = vmatprep.subr.bf16.mxu0 0
        %1829 = vmatpush1.bf16.xpose.msra.mxu0 %v1826
        %1830 = vmatprep.subr.bf16.mxu0 0
        %1831 = vmatpush1.bf16.xpose.msra.mxu0 0
        %1832 = vmatprep.subr.bf16.mxu0 0
        %1833 = vmatpush1.bf16.xpose.msra.mxu0 0
        %1834 = vmatprep.subr.bf16.mxu0 0
        %1835 = vmatpush1.bf16.xpose.msra.mxu0 0
        %1836 = vmatprep.subr.bf16.mxu0 0
        %1837 = vmatpush1.bf16.xpose.msra.mxu0 0
        %1838 = vmatprep.subr.bf16.mxu0 0
        %1839 = vmatpush1.bf16.xpose.msra.mxu0 0
        %1840 = vmatprep.subr.bf16.mxu0 0
        %1841 = vmatpush1.bf16.xpose.msra.mxu0 0
        %1842 = vmatprep.subr.bf16.mxu0 0
        %1843 = vmatpush1.bf16.xpose.msra.mxu0 0
        %1844 = vmatprep.subr.bf16.mxu0 0
        %1845 = vmatpush1.bf16.xpose.msra.mxu0 0
        %1846 = vmatprep.subr.bf16.mxu0 0
        %1847 = vmatpush1.bf16.xpose.msra.mxu0 0
        %1848 = vmatprep.subr.bf16.mxu0 0
        %1849 = vmatpush1.bf16.xpose.msra.mxu0 0
        %1850 = vmatprep.subr.bf16.mxu0 0
        %1851 = vmatpush1.bf16.xpose.msra.mxu0 0
        %1852 = vmatprep.subr.bf16.mxu0 0
        %1853 = vmatpush1.bf16.xpose.msra.mxu0 0
        %1854 = vmatprep.subr.bf16.mxu0 0
        %1855 = vmatpush1.bf16.xpose.msra.mxu0 0
        %1856 = vmatprep.subr.bf16.mxu0 0
        %1857 = vmatpush1.bf16.xpose.msra.mxu0 0
        %1858 = vmatprep.subr.bf16.mxu0 0
        %1859 = vmatpush1.bf16.xpose.msra.mxu0 0
        %1860 = vmatprep.mubr.bf16.mxu0 0
        %1861 = vmatmul.mubr.bf16.gmra.mrb[0].mxu0 %v1826
        %v1862 = vpop.f32.mrb[0].mxu0
        %v1863 = vadd.f32 0.0, %v1862
        %v1864 = vpop.f32.mrb[0].mxu0
        %v1865 = vpop.f32.mrb[0].mxu0
        %v1866 = vpop.f32.mrb[0].mxu0
        %1867 = vdwg.mxu0
        %v1868 = vsel %vm752, -1e+30, %v1863
        %v1869 = vsel %vm703, %v1868, -inf
        %1870 = vmax.xlane.f32.xlu0 %v1869
        %v1871 = vpop.xlane.xlu0 %1870
        %v1872 = vsub.f32 %v1868, %v1871
        %v1873 = vmul.f32 %v1872, 1.442695
        %v1874 = vpow.pop %v1873
        %v1875 = vmul.f32 %v1874, %v583
        %v1876 = vsel %vm703, %v1875, 0.0
        %1877 = vadd.xlane.f32.xlu0 %v1876
        %v1878 = vpop.xlane.xlu0 %1877
        %v1879 = vmax.f32 %v1878, 1e-06
        %v1880 = vpack.c.bf16 %v1875, %v1875
        %1881 = vrot.lane.b32.xlu0 %v1488, 72
        %v1882 = vpop.permute.xlu0 %1881
        %v1884 = vsel %vm703, %v1880, 0
        %v1887 = vsel %vm772, %v1882, 0
        %1889 = vmatprep.subr.bf16.mxu0 0
        %1890 = vmatpush1.bf16.msra.mxu0 %v1887
        %1891 = vmatprep.subr.bf16.mxu0 0
        %1892 = vmatpush1.bf16.msra.mxu0 0
        %1893 = vmatprep.subr.bf16.mxu0 0
        %1894 = vmatpush1.bf16.msra.mxu0 0
        %1895 = vmatprep.subr.bf16.mxu0 0
        %1896 = vmatpush1.bf16.msra.mxu0 0
        %1897 = vmatprep.subr.bf16.mxu0 0
        %1898 = vmatpush1.bf16.msra.mxu0 0
        %1899 = vmatprep.subr.bf16.mxu0 0
        %1900 = vmatpush1.bf16.msra.mxu0 0
        %1901 = vmatprep.subr.bf16.mxu0 0
        %1902 = vmatpush1.bf16.msra.mxu0 0
        %1903 = vmatprep.subr.bf16.mxu0 0
        %1904 = vmatpush1.bf16.msra.mxu0 0
        %1905 = vmatprep.subr.bf16.mxu0 0
        %1906 = vmatpush1.bf16.msra.mxu0 0
        %1907 = vmatprep.subr.bf16.mxu0 0
        %1908 = vmatpush1.bf16.msra.mxu0 0
        %1909 = vmatprep.subr.bf16.mxu0 0
        %1910 = vmatpush1.bf16.msra.mxu0 0
        %1911 = vmatprep.subr.bf16.mxu0 0
        %1912 = vmatpush1.bf16.msra.mxu0 0
        %1913 = vmatprep.subr.bf16.mxu0 0
        %1914 = vmatpush1.bf16.msra.mxu0 0
        %1915 = vmatprep.subr.bf16.mxu0 0
        %1916 = vmatpush1.bf16.msra.mxu0 0
        %1917 = vmatprep.subr.bf16.mxu0 0
        %1918 = vmatpush1.bf16.msra.mxu0 0
        %1919 = vmatprep.subr.bf16.mxu0 0
        %1920 = vmatpush1.bf16.msra.mxu0 0
        %1921 = vmatprep.mubr.bf16.mxu0 0
        %1922 = vmatmul.mubr.bf16.gmra.mrb[0].mxu0 %v1884
        %v1923 = vpop.f32.mrb[0].mxu0
        %v1924 = vadd.f32 0.0, %v1923
        %v1925 = vpop.f32.mrb[0].mxu0
        %v1926 = vpop.f32.mrb[0].mxu0
        %v1927 = vpop.f32.mrb[0].mxu0
        %1928 = vdwg.mxu0
        %v1929 = vrcp.pop %v1879
        %v1930 = vmul.f32 %v1924, %v1929
        %1932 = vrot.lane.b32.xlu0 %v1930, 24
        %v1933 = vpop.permute.xlu0 %1932
        %1935 = vst.msk [vmem:[#allocation2] sm:$0xff] %vm1159, %v1933
        %v1936 = vld [vmem:[#allocation2] sm:$0xff]
        %v1937 = vpack.c.bf16 %v1936, %v1936
        %s1938 = scalar_lea.vmem %s7, 16
        %v1939 = vld [vmem:[%s1938] sm:$0xf]
        %v1940 = vld [vmem:[%s1938 + $0x4] sm:$0xf]
        %v1941 = vld [vmem:[%s1938 + $0x8] sm:$0xf]
        %v1942 = vld [vmem:[%s1938 + $0xc] sm:$0xf]
        %v1947 = vunpack.c.l.b16 %v1939
        %v1948 = vunpack.c.l.b16 %v1940
        %v1949 = vunpack.c.l.b16 %v1941
        %v1950 = vunpack.c.l.b16 %v1942
        %v1951 = vpack.c.b16 %v1948, %v1947
        %v1952 = vpack.c.b16 %v1950, %v1949
        %v1956 = vsel %vm658, %v1937, 0
        %1958 = vmatprep.subr.bf16.mxu0 0
        %1959 = vmatpush1.bf16.msra.mxu0 %v1951
        %1960 = vmatprep.subr.bf16.mxu0 0
        %1961 = vmatpush1.bf16.msra.mxu0 %v1952
        %1962 = vmatprep.subr.bf16.mxu0 0
        %1963 = vmatpush1.bf16.msra.mxu0 0
        %1964 = vmatprep.subr.bf16.mxu0 0
        %1965 = vmatpush1.bf16.msra.mxu0 0
        %1966 = vmatprep.subr.bf16.mxu0 0
        %1967 = vmatpush1.bf16.msra.mxu0 0
        %1968 = vmatprep.subr.bf16.mxu0 0
        %1969 = vmatpush1.bf16.msra.mxu0 0
        %1970 = vmatprep.subr.bf16.mxu0 0
        %1971 = vmatpush1.bf16.msra.mxu0 0
        %1972 = vmatprep.subr.bf16.mxu0 0
        %1973 = vmatpush1.bf16.msra.mxu0 0
        %1974 = vmatprep.subr.bf16.mxu0 0
        %1975 = vmatpush1.bf16.msra.mxu0 0
        %1976 = vmatprep.subr.bf16.mxu0 0
        %1977 = vmatpush1.bf16.msra.mxu0 0
        %1978 = vmatprep.subr.bf16.mxu0 0
        %1979 = vmatpush1.bf16.msra.mxu0 0
        %1980 = vmatprep.subr.bf16.mxu0 0
        %1981 = vmatpush1.bf16.msra.mxu0 0
        %1982 = vmatprep.subr.bf16.mxu0 0
        %1983 = vmatpush1.bf16.msra.mxu0 0
        %1984 = vmatprep.subr.bf16.mxu0 0
        %1985 = vmatpush1.bf16.msra.mxu0 0
        %1986 = vmatprep.subr.bf16.mxu0 0
        %1987 = vmatpush1.bf16.msra.mxu0 0
        %1988 = vmatprep.subr.bf16.mxu0 0
        %1989 = vmatpush1.bf16.msra.mxu0 0
        %1990 = vmatprep.mubr.bf16.mxu0 0
        %1991 = vmatmul.mubr.bf16.gmra.mrb[0].mxu0 %v1956
        %v1992 = vpop.f32.mrb[0].mxu0
        %v1993 = vadd.f32 0.0, %v1992
        %v1994 = vpop.f32.mrb[0].mxu0
        %v1995 = vpop.f32.mrb[0].mxu0
        %v1996 = vpop.f32.mrb[0].mxu0
        %1997 = vdwg.mxu0
        %v1998 = vmul.f32 %v1225, %v1993
        %v1999 = vadd.f32 %v1426, %v1998
        %s2000 = scalar_lea.vmem %s11, 8
        %v2001 = vld [vmem:[%s2000] sm:$0x1f]
        %v2002 = vsel %vm658, %v1999, 0.0
        %2003 = vadd.xlane.f32.xlu0 %v2002
        %v2004 = vpop.xlane.xlu0 %2003
        %v2005 = vmul.f32 %v2004, %v1233
        %v2006 = vsub.f32 %v1999, %v2005
        %v2007 = vmul.f32 %v2006, %v2006
        %v2008 = vsel %vm658, %v2007, 0.0
        %2009 = vadd.xlane.f32.xlu0 %v2008
        %v2010 = vpop.xlane.xlu0 %2009
        %v2011 = vmul.f32 %v2010, %v1233
        %v2012 = vadd.f32 %v2011, 1e-05
        %v2013 = vrsqrt.pop %v2012
        %v2014 = vmul.f32 %v2006, %v2013
        %v2015 = vlaneseq
        %v2016 = vshrl.u32 %v2015, 7
        %v2017 = vsub.s32 1, %v2016
        %v2018 = vrot.slane %v2001, %v2017
        %v2019 = vmul.f32 %v2014, %v2018
        %v2020 = vlaneseq
        %v2021 = vshrl.u32 %v2020, 7
        %v2022 = vsub.s32 2, %v2021
        %v2023 = vrot.slane %v2001, %v2022
        %v2024 = vadd.f32 %v2019, %v2023
        %v2025 = vpack.c.bf16 %v2024, %v2024
        %s2026 = scalar_lea.vmem %s8, 16
        %v2027 = vld [vmem:[%s2026] sm:$0xf]
        %v2028 = vld [vmem:[%s2026 + $0x4] sm:$0xf]
        %v2029 = vld [vmem:[%s2026 + $0x8] sm:$0xf]
        %v2030 = vld [vmem:[%s2026 + $0xc] sm:$0xf]
        %s2031 = scalar_lea.vmem %s9, 1
        %v2032 = vld [vmem:[%s2031] sm:$0x1]
        %v2034 = vlaneseq
        %v2035 = vshrl.u32 %v2034, 7
        %v2036 = vsub.s32 0, %v2035
        %v2037 = vrot.slane %v2032, %v2036
        %v2043 = vunpack.c.l.b16 %v2027
        %v2044 = vunpack.c.l.b16 %v2028
        %v2045 = vunpack.c.l.b16 %v2029
        %v2046 = vunpack.c.l.b16 %v2030
        %v2047 = vpack.c.b16 %v2044, %v2043
        %v2048 = vpack.c.b16 %v2046, %v2045
        %v2052 = vsel %vm658, %v2025, 0
        %2054 = vmatprep.subr.bf16.mxu0 0
        %2055 = vmatpush1.bf16.msra.mxu0 %v2047
        %2056 = vmatprep.subr.bf16.mxu0 0
        %2057 = vmatpush1.bf16.msra.mxu0 %v2048
        %2058 = vmatprep.subr.bf16.mxu0 0
        %2059 = vmatpush1.bf16.msra.mxu0 0
        %2060 = vmatprep.subr.bf16.mxu0 0
        %2061 = vmatpush1.bf16.msra.mxu0 0
        %2062 = vmatprep.subr.bf16.mxu0 0
        %2063 = vmatpush1.bf16.msra.mxu0 0
        %2064 = vmatprep.subr.bf16.mxu0 0
        %2065 = vmatpush1.bf16.msra.mxu0 0
        %2066 = vmatprep.subr.bf16.mxu0 0
        %2067 = vmatpush1.bf16.msra.mxu0 0
        %2068 = vmatprep.subr.bf16.mxu0 0
        %2069 = vmatpush1.bf16.msra.mxu0 0
        %2070 = vmatprep.subr.bf16.mxu0 0
        %2071 = vmatpush1.bf16.msra.mxu0 0
        %2072 = vmatprep.subr.bf16.mxu0 0
        %2073 = vmatpush1.bf16.msra.mxu0 0
        %2074 = vmatprep.subr.bf16.mxu0 0
        %2075 = vmatpush1.bf16.msra.mxu0 0
        %2076 = vmatprep.subr.bf16.mxu0 0
        %2077 = vmatpush1.bf16.msra.mxu0 0
        %2078 = vmatprep.subr.bf16.mxu0 0
        %2079 = vmatpush1.bf16.msra.mxu0 0
        %2080 = vmatprep.subr.bf16.mxu0 0
        %2081 = vmatpush1.bf16.msra.mxu0 0
        %2082 = vmatprep.subr.bf16.mxu0 0
        %2083 = vmatpush1.bf16.msra.mxu0 0
        %2084 = vmatprep.subr.bf16.mxu0 0
        %2085 = vmatpush1.bf16.msra.mxu0 0
        %2086 = vmatprep.mubr.bf16.mxu0 0
        %2087 = vmatmul.mubr.bf16.gmra.mrb[0].mxu0 %v2052
        %v2088 = vpop.f32.mrb[0].mxu0
        %v2089 = vadd.f32 %v2037, %v2088
        %v2090 = vpop.f32.mrb[0].mxu0
        %v2091 = vpop.f32.mrb[0].mxu0
        %v2092 = vpop.f32.mrb[0].mxu0
        %2093 = vdwg.mxu0
        %v2094 = vmax.f32 %v2089, 0.0
        %v2095 = vpack.c.bf16 %v2094, %v2094
        %s2096 = scalar_lea.vmem %s10, 32
        %v2097 = vld [vmem:[%s2096] sm:$0xf]
        %v2098 = vld [vmem:[%s2096 + $0x4] sm:$0xf]
        %v2099 = vld [vmem:[%s2096 + $0x8] sm:$0xf]
        %v2100 = vld [vmem:[%s2096 + $0xc] sm:$0xf]
        %v2101 = vld [vmem:[%s2096 + $0x10] sm:$0xf]
        %v2102 = vld [vmem:[%s2096 + $0x14] sm:$0xf]
        %v2103 = vld [vmem:[%s2096 + $0x18] sm:$0xf]
        %v2104 = vld [vmem:[%s2096 + $0x1c] sm:$0xf]
        %v2105 = vlaneseq
        %v2106 = vshrl.u32 %v2105, 7
        %v2107 = vsub.s32 0, %v2106
        %v2108 = vrot.slane %v2001, %v2107
        %v2117 = vunpack.c.l.b16 %v2097
        %v2118 = vunpack.c.l.b16 %v2098
        %v2119 = vunpack.c.l.b16 %v2099
        %v2120 = vunpack.c.l.b16 %v2100
        %v2121 = vunpack.c.l.b16 %v2101
        %v2122 = vunpack.c.l.b16 %v2102
        %v2123 = vunpack.c.l.b16 %v2103
        %v2124 = vunpack.c.l.b16 %v2104
        %v2125 = vpack.c.b16 %v2118, %v2117
        %v2126 = vpack.c.b16 %v2120, %v2119
        %v2127 = vpack.c.b16 %v2122, %v2121
        %v2128 = vpack.c.b16 %v2124, %v2123
        %v2134 = vsel %vm1359, %v2095, 0
        %2136 = vmatprep.subr.bf16.mxu0 0
        %2137 = vmatpush1.bf16.msra.mxu0 %v2125
        %2138 = vmatprep.subr.bf16.mxu0 0
        %2139 = vmatpush1.bf16.msra.mxu0 %v2126
        %2140 = vmatprep.subr.bf16.mxu0 0
        %2141 = vmatpush1.bf16.msra.mxu0 %v2127
        %2142 = vmatprep.subr.bf16.mxu0 0
        %2143 = vmatpush1.bf16.msra.mxu0 %v2128
        %2144 = vmatprep.subr.bf16.mxu0 0
        %2145 = vmatpush1.bf16.msra.mxu0 0
        %2146 = vmatprep.subr.bf16.mxu0 0
        %2147 = vmatpush1.bf16.msra.mxu0 0
        %2148 = vmatprep.subr.bf16.mxu0 0
        %2149 = vmatpush1.bf16.msra.mxu0 0
        %2150 = vmatprep.subr.bf16.mxu0 0
        %2151 = vmatpush1.bf16.msra.mxu0 0
        %2152 = vmatprep.subr.bf16.mxu0 0
        %2153 = vmatpush1.bf16.msra.mxu0 0
        %2154 = vmatprep.subr.bf16.mxu0 0
        %2155 = vmatpush1.bf16.msra.mxu0 0
        %2156 = vmatprep.subr.bf16.mxu0 0
        %2157 = vmatpush1.bf16.msra.mxu0 0
        %2158 = vmatprep.subr.bf16.mxu0 0
        %2159 = vmatpush1.bf16.msra.mxu0 0
        %2160 = vmatprep.subr.bf16.mxu0 0
        %2161 = vmatpush1.bf16.msra.mxu0 0
        %2162 = vmatprep.subr.bf16.mxu0 0
        %2163 = vmatpush1.bf16.msra.mxu0 0
        %2164 = vmatprep.subr.bf16.mxu0 0
        %2165 = vmatpush1.bf16.msra.mxu0 0
        %2166 = vmatprep.subr.bf16.mxu0 0
        %2167 = vmatpush1.bf16.msra.mxu0 0
        %2168 = vmatprep.mubr.bf16.mxu0 0
        %2169 = vmatmul.mubr.bf16.gmra.mrb[0].mxu0 %v2134
        %v2170 = vpop.f32.mrb[0].mxu0
        %v2171 = vadd.f32 %v2108, %v2170
        %v2172 = vpop.f32.mrb[0].mxu0
        %v2173 = vpop.f32.mrb[0].mxu0
        %v2174 = vpop.f32.mrb[0].mxu0
        %2175 = vdwg.mxu0
        %v2176 = vadd.f32 %v2024, %v2171
        %v2177 = vsel %vm658, %v2176, 0.0
        %2178 = vadd.xlane.f32.xlu0 %v2177
        %v2179 = vpop.xlane.xlu0 %2178
        %v2180 = vmul.f32 %v2179, %v1233
        %v2181 = vsub.f32 %v2176, %v2180
        %v2182 = vmul.f32 %v2181, %v2181
        %v2183 = vsel %vm658, %v2182, 0.0
        %2184 = vadd.xlane.f32.xlu0 %v2183
        %v2185 = vpop.xlane.xlu0 %2184
        %v2186 = vmul.f32 %v2185, %v1233
        %v2187 = vadd.f32 %v2186, 1e-05
        %v2188 = vrsqrt.pop %v2187
        %v2189 = vmul.f32 %v2181, %v2188
        %v2190 = vlaneseq
        %v2191 = vshrl.u32 %v2190, 7
        %v2192 = vsub.s32 3, %v2191
        %v2193 = vrot.slane %v2001, %v2192
        %v2194 = vmul.f32 %v2189, %v2193
        %v2195 = vlaneseq
        %v2196 = vshrl.u32 %v2195, 7
        %v2197 = vsub.s32 4, %v2196
        %v2198 = vrot.slane %v2001, %v2197
        %v2199 = vadd.f32 %v2194, %v2198
        %2201 = vset.pattern.permute.xlu0 0
        %2202 = vperm.xlu0 %2201, %v586
        %v2203 = vpop.permute.xlu0 %2202
        %v2205 = vmul.f32 %v2199, %v2203
        %v2206 = vsel %vm658, %v2205, 0.0
        %v2207 = vrot.slane %v2206, 4
        %v2208 = vadd.f32 %v2206, %v2207
        %v2209 = vrot.slane %v2208, 2
        %v2210 = vadd.f32 %v2208, %v2209
        %v2211 = vrot.slane %v2210, 1
        %v2212 = vadd.f32 %v2210, %v2211
        %vm2213 = vcmask 7168
        %v2214 = vsel %vm2213, %v586, 0.0
        %v2215 = vrot.slane %v2214, 4
        %v2216 = vadd.f32 %v2214, %v2215
        %v2217 = vrot.slane %v2216, 2
        %v2218 = vadd.f32 %v2216, %v2217
        %v2219 = vrot.slane %v2218, 1
        %v2220 = vadd.f32 %v2218, %v2219
        %2222 = vset.pattern.permute.xlu0 0
        %2223 = vperm.xlu0 %2222, %v2220
        %v2224 = vpop.permute.xlu0 %2223
        %v2226 = vrcp.pop %v2224
        %v2227 = vmul.f32 %v2212, %v2226
        %v2228 = vpack.c.bf16 %v2227, %v2227
        %v2229 = vld [vmem:[%s12] sm:$0xf]
        %v2230 = vld [vmem:[%s12 + $0x4] sm:$0xf]
        %v2231 = vld [vmem:[%s12 + $0x8] sm:$0xf]
        %v2232 = vld [vmem:[%s12 + $0xc] sm:$0xf]
        %v2233 = vld [vmem:[%s13] sm:$0x1]
        %v2238 = vunpack.c.l.b16 %v2229
        %v2239 = vunpack.c.l.b16 %v2230
        %v2240 = vunpack.c.l.b16 %v2231
        %v2241 = vunpack.c.l.b16 %v2232
        %v2242 = vpack.c.b16 %v2239, %v2238
        %v2243 = vpack.c.b16 %v2241, %v2240
        %v2247 = vsel %vm658, %v2228, 0
        %2249 = vmatprep.subr.bf16.mxu0 0
        %2250 = vmatpush1.bf16.msra.mxu0 %v2242
        %2251 = vmatprep.subr.bf16.mxu0 0
        %2252 = vmatpush1.bf16.msra.mxu0 %v2243
        %2253 = vmatprep.subr.bf16.mxu0 0
        %2254 = vmatpush1.bf16.msra.mxu0 0
        %2255 = vmatprep.subr.bf16.mxu0 0
        %2256 = vmatpush1.bf16.msra.mxu0 0
        %2257 = vmatprep.subr.bf16.mxu0 0
        %2258 = vmatpush1.bf16.msra.mxu0 0
        %2259 = vmatprep.subr.bf16.mxu0 0
        %2260 = vmatpush1.bf16.msra.mxu0 0
        %2261 = vmatprep.subr.bf16.mxu0 0
        %2262 = vmatpush1.bf16.msra.mxu0 0
        %2263 = vmatprep.subr.bf16.mxu0 0
        %2264 = vmatpush1.bf16.msra.mxu0 0
        %2265 = vmatprep.subr.bf16.mxu0 0
        %2266 = vmatpush1.bf16.msra.mxu0 0
        %2267 = vmatprep.subr.bf16.mxu0 0
        %2268 = vmatpush1.bf16.msra.mxu0 0
        %2269 = vmatprep.subr.bf16.mxu0 0
        %2270 = vmatpush1.bf16.msra.mxu0 0
        %2271 = vmatprep.subr.bf16.mxu0 0
        %2272 = vmatpush1.bf16.msra.mxu0 0
        %2273 = vmatprep.subr.bf16.mxu0 0
        %2274 = vmatpush1.bf16.msra.mxu0 0
        %2275 = vmatprep.subr.bf16.mxu0 0
        %2276 = vmatpush1.bf16.msra.mxu0 0
        %2277 = vmatprep.subr.bf16.mxu0 0
        %2278 = vmatpush1.bf16.msra.mxu0 0
        %2279 = vmatprep.subr.bf16.mxu0 0
        %2280 = vmatpush1.bf16.msra.mxu0 0
        %2281 = vmatprep.mubr.bf16.mxu0 0
        %2282 = vmatmul.mubr.bf16.gmra.mrb[0].mxu0 %v2247
        %v2283 = vpop.f32.mrb[0].mxu0
        %v2284 = vadd.f32 %v2233, %v2283
        %v2285 = vpop.f32.mrb[0].mxu0
        %v2286 = vpop.f32.mrb[0].mxu0
        %v2287 = vpop.f32.mrb[0].mxu0
        %2288 = vdwg.mxu0
        %v2289 = vmax.f32 %v2284, 0.0
        %v2290 = vpack.c.bf16 %v2289, %v2289
        %v2291 = vld [vmem:[%s14] sm:$0xf]
        %v2292 = vld [vmem:[%s14 + $0x4] sm:$0xf]
        %v2293 = vld [vmem:[%s14 + $0x8] sm:$0xf]
        %v2294 = vld [vmem:[%s14 + $0xc] sm:$0xf]
        %v2295 = vld [vmem:[%s15] sm:$0x1]
        %v2300 = vunpack.c.l.b16 %v2291
        %v2301 = vunpack.c.l.b16 %v2292
        %v2302 = vunpack.c.l.b16 %v2293
        %v2303 = vunpack.c.l.b16 %v2294
        %v2304 = vpack.c.b16 %v2301, %v2300
        %v2305 = vpack.c.b16 %v2303, %v2302
        %v2309 = vsel %vm658, %v2290, 0
        %2311 = vmatprep.subr.bf16.mxu0 0
        %2312 = vmatpush1.bf16.msra.mxu0 %v2304
        %2313 = vmatprep.subr.bf16.mxu0 0
        %2314 = vmatpush1.bf16.msra.mxu0 %v2305
        %2315 = vmatprep.subr.bf16.mxu0 0
        %2316 = vmatpush1.bf16.msra.mxu0 0
        %2317 = vmatprep.subr.bf16.mxu0 0
        %2318 = vmatpush1.bf16.msra.mxu0 0
        %2319 = vmatprep.subr.bf16.mxu0 0
        %2320 = vmatpush1.bf16.msra.mxu0 0
        %2321 = vmatprep.subr.bf16.mxu0 0
        %2322 = vmatpush1.bf16.msra.mxu0 0
        %2323 = vmatprep.subr.bf16.mxu0 0
        %2324 = vmatpush1.bf16.msra.mxu0 0
        %2325 = vmatprep.subr.bf16.mxu0 0
        %2326 = vmatpush1.bf16.msra.mxu0 0
        %2327 = vmatprep.subr.bf16.mxu0 0
        %2328 = vmatpush1.bf16.msra.mxu0 0
        %2329 = vmatprep.subr.bf16.mxu0 0
        %2330 = vmatpush1.bf16.msra.mxu0 0
        %2331 = vmatprep.subr.bf16.mxu0 0
        %2332 = vmatpush1.bf16.msra.mxu0 0
        %2333 = vmatprep.subr.bf16.mxu0 0
        %2334 = vmatpush1.bf16.msra.mxu0 0
        %2335 = vmatprep.subr.bf16.mxu0 0
        %2336 = vmatpush1.bf16.msra.mxu0 0
        %2337 = vmatprep.subr.bf16.mxu0 0
        %2338 = vmatpush1.bf16.msra.mxu0 0
        %2339 = vmatprep.subr.bf16.mxu0 0
        %2340 = vmatpush1.bf16.msra.mxu0 0
        %2341 = vmatprep.subr.bf16.mxu0 0
        %2342 = vmatpush1.bf16.msra.mxu0 0
        %2343 = vmatprep.mubr.bf16.mxu0 0
        %2344 = vmatmul.mubr.bf16.gmra.mrb[0].mxu0 %v2309
        %v2345 = vpop.f32.mrb[0].mxu0
        %v2346 = vadd.f32 %v2295, %v2345
        %v2347 = vpop.f32.mrb[0].mxu0
        %v2348 = vpop.f32.mrb[0].mxu0
        %v2349 = vpop.f32.mrb[0].mxu0
        %2350 = vdwg.mxu0
        %vm2351 = vcmask 32768
        %2352 = vst.msk [vmem:[%s561] sm:$0x1] %vm2351, %v2346
        %s2353 = sand.u32 %s399, 1
        %s2354 = scalar_lea.sflag [#allocation4], %s2353
        %s2355 = sand.u32 %s399, 1
        %s2356 = scalar_lea.vmem [#allocation3], %s2355
        // Predicated region
        $region85: #{diff_graph_transformer_forward.1} parent=83 // pred_check
          %p2357 = pneg %p409
        $region86: #{diff_graph_transformer_forward.1} parent=83 // pred_check_branch
          %2359 = sbr.rel (%p2357) target = $region88
        $region87: #{diff_graph_transformer_forward.1} parent=83 // pred_region
          %s2361 = ssub.s32 16, 16
          %2362 = vsyncadd %s2354, %s2361
          %s2363 = smul.addr %s30, 16
          %s2364 = scalar_lea.hbm %s16, %s2363
          %s2366 = sshll.u32 %s2356, 4
          %s2367 = int_to_ptr.vmem [resolvable:$true] %s2366
          %2369 = dma.vmem_to_hbm [thread:$0]  %s2367, 16, %s2364, %s2354
        $region88: #{diff_graph_transformer_forward.1} parent=83 // pred_fallthru
          _
      $region84: #{diff_graph_transformer_forward.1} parent=5 // pred_fallthru
        _
      %p2370 = scmp.le.s32.totalorder 2, %s25
      // Predicated region
      $region89: #{diff_graph_transformer_forward.1} parent=5 // pred_check
        %p2371 = pneg %p2370
      $region90: #{diff_graph_transformer_forward.1} parent=5 // pred_check_branch
        %2373 = sbr.rel (%p2371) target = $region92
      $region91: #{diff_graph_transformer_forward.1} parent=5 // pred_region
        %s2374 = ssub.s32 %s25, 2
        // Predicated region
        $region93: #{diff_graph_transformer_forward.1} parent=91 // pred_check
          %p2375 = pneg %p415
        $region94: #{diff_graph_transformer_forward.1} parent=91 // pred_check_branch
          %2377 = sbr.rel (%p2375) target = $region96
        $region95: #{diff_graph_transformer_forward.1} parent=91 // pred_region
          %s2378 = sand.u32 %s400, 1
          %s2379 = scalar_lea.sflag [#allocation4], %s2378
          %s2380 = sand.u32 %s400, 1
          %s2381 = scalar_lea.vmem [#allocation3], %s2380
          %2382 = dma.done %s2379, 16
        $region96: #{diff_graph_transformer_forward.1} parent=91 // pred_fallthru
          _
      $region92: #{diff_graph_transformer_forward.1} parent=5 // pred_fallthru
        _
    $region6: #{diff_graph_transformer_forward.1} parent=1 // loop_footer
      %s29 = sadd.s32 1, %s25
    $region7: #{diff_graph_transformer_forward.1} parent=1 // loop_footer_branch
      %24 = sbr.rel target = $region3
    $region8: #{diff_graph_transformer_forward.1} parent=1 // loop_exit
      _
    %2383 = vsyncpa [#allocation4], 1
    %s2384 = scalar_lea.sflag [#allocation4], 1
    %2385 = vsyncpa %s2384, 1

</llo_original>
